<compile_context>
chip_gen: v7x
topology: tpu7x:2x2x1
jax: 0.10.0
libtpu: 0.0.40
codegen_flags: <defaults>
</compile_context>

<pallas_src>
import math
import functools

import jax
import jax.numpy as jnp
from jax import lax
from jax.experimental import pallas as pl
from jax.experimental.pallas import tpu as pltpu

_LOG3 = math.log(3.0)


def _attention_layer_kernel(q_ref, k_ref, v_ref,
                            wq_ref, bq_ref, wk_ref, bk_ref, wv_ref, bv_ref,
                            ws_ref, bs_ref, wo_ref, bo_ref,
                            out_ref, series_ref, prior_ref, sigma_ref,
                            *, n_heads, d_keys, d_values, block_b):
    f32 = jnp.float32
    bf16 = jnp.bfloat16
    H = n_heads
    Bb = block_b
    L = q_ref.shape[1]
    S = k_ref.shape[1]
    D = out_ref.shape[-1]

    # ---- fat projections: bf16 MXU inputs, f32 accumulation, f32 bias add ----
    x2 = q_ref[...].reshape(Bb * L, D)        # bf16 (cast in wrapper)
    kx2 = k_ref[...].reshape(Bb * S, D)
    vx2 = v_ref[...].reshape(Bb * S, D)

    q_all = jnp.dot(x2, wq_ref[...], preferred_element_type=f32) + bq_ref[...]
    k_all = jnp.dot(kx2, wk_ref[...], preferred_element_type=f32) + bk_ref[...]
    v_all = jnp.dot(vx2, wv_ref[...], preferred_element_type=f32) + bv_ref[...]
    sig_all = jnp.dot(x2, ws_ref[...], preferred_element_type=f32) + bs_ref[...]

    # ---- hoisted loop-invariant work ----
    scale = 1.0 / math.sqrt(d_keys)
    inv_sqrt_2pi = 1.0 / math.sqrt(2.0 * math.pi)
    q_all = q_all * scale                                    # fold softmax scale

    # sigma transform on the whole (Bb*L, H) matrix at once; 3**x == exp(x*ln3)
    sig_all = jax.nn.sigmoid(sig_all * 5.0) + 1e-5
    sig_all = jnp.exp(sig_all * _LOG3) - 1.0

    # |i - j|^2 computed once per grid step
    row = lax.broadcasted_iota(jnp.int32, (L, S), 0)
    col = lax.broadcasted_iota(jnp.int32, (L, S), 1)
    dist2 = ((row - col) * (row - col)).astype(f32)          # (L, S)

    # ---- attention: vectorized over all Bb batch rows, one static pass/head ---
    # (head columns sliced ONCE each; no per-batch-element unrolled loop)
    ctx_pieces = []
    for h in range(H):
        qh = q_all[:, h * d_keys:(h + 1) * d_keys].reshape(Bb, L, d_keys).astype(bf16)
        kh = k_all[:, h * d_keys:(h + 1) * d_keys].reshape(Bb, S, d_keys).astype(bf16)
        vh = v_all[:, h * d_values:(h + 1) * d_values].reshape(Bb, S, d_values).astype(bf16)

        scores = jnp.einsum('bld,bsd->bls', qh, kh,
                            preferred_element_type=f32)       # (Bb, L, S)
        m = jnp.max(scores, axis=-1, keepdims=True)
        p = jnp.exp(scores - m)
        inv_den = pl.reciprocal(jnp.sum(p, axis=-1, keepdims=True), approx=True)
        series = p * inv_den                                  # softmax, f32
        series_ref[:, h, :, :] = series

        ctx_pieces.append(
            jnp.einsum('bls,bsd->bld', series.astype(bf16), vh,
                       preferred_element_type=f32).astype(bf16))  # (Bb, L, dv)

        # prior / sigma maps (sigma transform + dist2 hoisted above)
        sig_h = sig_all[:, h:h + 1].reshape(Bb, L, 1)          # (Bb, L, 1)
        inv_sig = 1.0 / sig_h
        prior = (inv_sqrt_2pi * inv_sig) * jnp.exp(
            -0.5 * dist2[None, :, :] * (inv_sig * inv_sig))    # (Bb, L, S)
        prior_ref[:, h, :, :] = prior
        sigma_ref[:, h, :, :] = jnp.broadcast_to(sig_h, (Bb, L, S))
        # TODO(synk): at real sizes the three (B,H,L,S) f32 map writebacks
        # dominate HBM traffic; fusing the downstream KL (association
        # discrepancy) here, or emitting sigma un-broadcast / maps in bf16,
        # would remove most of it.  Kept as-is to preserve module semantics.

    # ---- ONE fat (Bb*L, H*dv) x (H*dv, D) output projection (bf16 MXU) ----
    ctx = jnp.concatenate(ctx_pieces, axis=-1)                 # (Bb, L, H*dv) bf16
    out2 = jnp.dot(ctx.reshape(Bb * L, H * d_values), wo_ref[...],
                   preferred_element_type=f32) + bo_ref[...]
    out_ref[...] = out2.reshape(Bb, L, D)


def make_params(key, d_model, n_heads, d_keys=None, d_values=None):
    """Deterministic PyTorch-nn.Linear-style init (uniform +-1/sqrt(fan_in))."""
    d_keys = d_keys or d_model // n_heads
    d_values = d_values or d_model // n_heads

    def linear(k, fan_in, fan_out):
        kw, kb = jax.random.split(k)
        bound = 1.0 / math.sqrt(fan_in)
        w = jax.random.uniform(kw, (fan_in, fan_out), jnp.float32, -bound, bound)
        b = jax.random.uniform(kb, (1, fan_out), jnp.float32, -bound, bound)
        return w, b

    ks = jax.random.split(key, 5)
    p = {}
    p['wq'], p['bq'] = linear(ks[0], d_model, d_keys * n_heads)
    p['wk'], p['bk'] = linear(ks[1], d_model, d_keys * n_heads)
    p['wv'], p['bv'] = linear(ks[2], d_model, d_values * n_heads)
    p['ws'], p['bs'] = linear(ks[3], d_model, n_heads)
    p['wo'], p['bo'] = linear(ks[4], d_values * n_heads, d_model)
    return p


def _nbytes(shape, itemsize):
    n = itemsize
    for s in shape:
        n *= int(s)
    return n


def attention_layer_forward(params, queries, keys, values, attn_mask=None,
                            *, n_heads, d_keys, d_values, block_b=None):
    # attn_mask is ignored: inner AnomalyAttention is used with mask_flag=False.
    del attn_mask
    B, L, D = queries.shape
    S = keys.shape[1]
    H = n_heads

    # block_b: fill the MXU M dim (Bb*L rows) but ALWAYS keep grid >= 2 when
    # B >= 2 so the "parallel" batch axis can be sharded across TensorCores
    # (grid=1 would idle one of v7x's two TCs).
    if block_b is None:
        bb_cap = B // 2 if B >= 2 else 1
        block_b = 1
        for d in range(1, bb_cap + 1):
            if B % d == 0 and d * max(L, S) <= 512:
                block_b = d
    Bb = block_b
    assert B % Bb == 0, "block_b must divide the batch size"
    grid = (B // Bb,)

    # bf16 MXU inputs: activations + weight matrices.  Biases stay f32 and are
    # added to the f32 accumulators inside the kernel.
    bf16 = jnp.bfloat16
    q_bf = queries.astype(bf16)
    k_bf = keys.astype(bf16)
    v_bf = values.astype(bf16)
    w_bf = {k: params[k].astype(bf16) for k in ('wq', 'wk', 'wv', 'ws', 'wo')}

    args = (q_bf, k_bf, v_bf,
            w_bf['wq'], params['bq'], w_bf['wk'], params['bk'],
            w_bf['wv'], params['bv'], w_bf['ws'], params['bs'],
            w_bf['wo'], params['bo'])

    kernel = functools.partial(_attention_layer_kernel, n_heads=H,
                               d_keys=d_keys, d_values=d_values, block_b=Bb)

    act_spec = lambda seq: pl.BlockSpec((Bb, seq, D), lambda i: (i, 0, 0))
    map_spec = pl.BlockSpec((Bb, H, L, S), lambda i: (i, 0, 0, 0))
    out_specs = (pl.BlockSpec((Bb, L, D), lambda i: (i, 0, 0)),
                 map_spec, map_spec, map_spec)
    out_shape = (jax.ShapeDtypeStruct((B, L, D), jnp.float32),
                 jax.ShapeDtypeStruct((B, H, L, S), jnp.float32),
                 jax.ShapeDtypeStruct((B, H, L, S), jnp.float32),
                 jax.ShapeDtypeStruct((B, H, L, S), jnp.float32))

    # VMEM budget: resident weights + double-buffered activation/output blocks
    # + in-kernel temporaries; no 3x fudge, capped at 48 MiB so it also leaves
    # headroom on v7x's 64 MiB/TensorCore.
    weight_bytes = sum(_nbytes(a.shape, a.dtype.itemsize) for a in args[3:])
    in_bytes = 2 * (_nbytes((Bb, L, D), 2) + 2 * _nbytes((Bb, S, D), 2))
    out_bytes = 2 * (_nbytes((Bb, L, D), 4) + 3 * _nbytes((Bb, H, L, S), 4))
    tmp_bytes = (6 * _nbytes((Bb, H, L, S), 4)
                 + 4 * _nbytes((Bb * L, H * d_keys), 4))
    est = 2 * weight_bytes + in_bytes + out_bytes + tmp_bytes
    vmem_limit = int(min(max(2 * est, 24 * 1024 * 1024), 48 * 1024 * 1024))

    def build(weight_mode):
        def wspec(arr):
            n = arr.ndim
            if weight_mode is None:
                return pl.BlockSpec(arr.shape, lambda i, _n=n: (0,) * _n)
            return pl.BlockSpec(arr.shape, lambda i, _n=n: (0,) * _n,
                                pipeline_mode=weight_mode)
        in_specs = [act_spec(L), act_spec(S), act_spec(S)] + [wspec(a) for a in args[3:]]
        return pl.pallas_call(
            kernel,
            out_shape=out_shape,
            grid_spec=pltpu.PrefetchScalarGridSpec(
                num_scalar_prefetch=0,
                grid=grid,
                in_specs=in_specs,
                out_specs=out_specs),
            compiler_params=pltpu.CompilerParams(
                dimension_semantics=("parallel",),
                vmem_limit_bytes=vmem_limit),
        )

    # Weights/biases have a constant index_map (never re-fetched): request
    # single-buffering to halve their resident VMEM.  Fall back cleanly if the
    # installed Pallas version rejects pipeline_mode=Buffered(1).
    buffered = getattr(pl, "Buffered", None)
    if buffered is not None:
        try:
            return build(buffered(1))(*args)
        except Exception:
            pass
    return build(None)(*args)


def reference_forward(params, queries, keys, values, n_heads, d_keys, d_values):
    """Pure-JAX f32 reference reproducing the PyTorch forward semantics."""
    B, L, D = queries.shape
    S = keys.shape[1]
    H = n_heads
    q = (queries @ params['wq'] + params['bq']).reshape(B, L, H, d_keys)
    k = (keys @ params['wk'] + params['bk']).reshape(B, S, H, d_keys)
    v = (values @ params['wv'] + params['bv']).reshape(B, S, H, d_values)
    sig = (queries @ params['ws'] + params['bs']).reshape(B, L, H)

    scale = 1.0 / math.sqrt(d_keys)
    attn = scale * jnp.einsum("blhe,bshe->bhls", q, k)
    series = jax.nn.softmax(attn, axis=-1)

    sig = jnp.transpose(sig, (0, 2, 1))                       # B H L
    sig = jax.nn.sigmoid(sig * 5.0) + 1e-5
    sig = jnp.power(3.0, sig) - 1.0
    sig = jnp.broadcast_to(sig[..., None], (B, H, L, S))

    dist = jnp.abs(jnp.arange(L)[:, None] - jnp.arange(S)[None, :]).astype(jnp.float32)
    prior = 1.0 / (math.sqrt(2.0 * math.pi) * sig) * jnp.exp(-dist ** 2 / 2.0 / sig ** 2)

    V = jnp.einsum("bhls,bshd->blhd", series, v).reshape(B, L, H * d_values)
    out = V @ params['wo'] + params['bo']
    return out, series, prior, sig


if __name__ == "__main__":
    B, L, S = 2, 16, 16          # win_size = L = S
    d_model, n_heads = 32, 4
    d_keys = d_values = d_model // n_heads

    key = jax.random.PRNGKey(0)
    kp, kq, kk, kv = jax.random.split(key, 4)
    params = make_params(kp, d_model, n_heads)
    queries = jax.random.normal(kq, (B, L, d_model), jnp.float32)
    keys = jax.random.normal(kk, (B, S, d_model), jnp.float32)
    values = jax.random.normal(kv, (B, S, d_model), jnp.float32)

    out = attention_layer_forward(params, queries, keys, values, None,
                                  n_heads=n_heads, d_keys=d_keys, d_values=d_values)
    out = jax.block_until_ready(out)

    ref = reference_forward(params, queries, keys, values, n_heads, d_keys, d_values)
    # bf16 MXU inputs + approx reciprocal => relaxed parity vs the f32 reference.
    for got, want in zip(out, ref):
        assert got.shape == want.shape and got.dtype == want.dtype
        assert jnp.allclose(got, want, atol=3e-2, rtol=3e-2), "mismatch vs reference"

    print("KERNEL_OK")
</pallas_src>

<mosaic_0001>
module attributes {stable_mosaic.version = 11 : i64} {
  func.func @_attention_layer_kernel(%arg0: i32, %arg1: memref<1x16x32xbf16, #tpu.memory_space<vmem>>, %arg2: memref<1x16x32xbf16, #tpu.memory_space<vmem>>, %arg3: memref<1x16x32xbf16, #tpu.memory_space<vmem>>, %arg4: memref<32x32xbf16, #tpu.memory_space<vmem>>, %arg5: memref<1x32xf32, #tpu.memory_space<vmem>>, %arg6: memref<32x32xbf16, #tpu.memory_space<vmem>>, %arg7: memref<1x32xf32, #tpu.memory_space<vmem>>, %arg8: memref<32x32xbf16, #tpu.memory_space<vmem>>, %arg9: memref<1x32xf32, #tpu.memory_space<vmem>>, %arg10: memref<32x4xbf16, #tpu.memory_space<vmem>>, %arg11: memref<1x4xf32, #tpu.memory_space<vmem>>, %arg12: memref<32x32xbf16, #tpu.memory_space<vmem>>, %arg13: memref<1x32xf32, #tpu.memory_space<vmem>>, %arg14: memref<1x16x32xf32, #tpu.memory_space<vmem>>, %arg15: memref<1x4x16x16xf32, #tpu.memory_space<vmem>>, %arg16: memref<1x4x16x16xf32, #tpu.memory_space<vmem>>, %arg17: memref<1x4x16x16xf32, #tpu.memory_space<vmem>>) attributes {dimension_semantics = [#tpu.dimension_semantics<parallel>], iteration_bounds = array<i64: 2>, scalar_prefetch = 0 : i64, scratch_operands = 0 : i64, tpu.core_type = #tpu.core_type<tc>, window_params = [{transform_indices = @transform_0, window_bounds = array<i64: 1, 16, 32>}, {transform_indices = @transform_1, window_bounds = array<i64: 1, 16, 32>}, {transform_indices = @transform_2, window_bounds = array<i64: 1, 16, 32>}, {pipeline_mode = #tpu.pipeline_mode<synchronous>, transform_indices = @transform_3, window_bounds = array<i64: 32, 32>}, {pipeline_mode = #tpu.pipeline_mode<synchronous>, transform_indices = @transform_4, window_bounds = array<i64: 1, 32>}, {pipeline_mode = #tpu.pipeline_mode<synchronous>, transform_indices = @transform_5, window_bounds = array<i64: 32, 32>}, {pipeline_mode = #tpu.pipeline_mode<synchronous>, transform_indices = @transform_6, window_bounds = array<i64: 1, 32>}, {pipeline_mode = #tpu.pipeline_mode<synchronous>, transform_indices = @transform_7, window_bounds = array<i64: 32, 32>}, {pipeline_mode = #tpu.pipeline_mode<synchronous>, transform_indices = @transform_8, window_bounds = array<i64: 1, 32>}, {pipeline_mode = #tpu.pipeline_mode<synchronous>, transform_indices = @transform_9, window_bounds = array<i64: 32, 4>}, {pipeline_mode = #tpu.pipeline_mode<synchronous>, transform_indices = @transform_10, window_bounds = array<i64: 1, 4>}, {pipeline_mode = #tpu.pipeline_mode<synchronous>, transform_indices = @transform_11, window_bounds = array<i64: 32, 32>}, {pipeline_mode = #tpu.pipeline_mode<synchronous>, transform_indices = @transform_12, window_bounds = array<i64: 1, 32>}, {transform_indices = @transform_13, window_bounds = array<i64: 1, 16, 32>}, {transform_indices = @transform_14, window_bounds = array<i64: 1, 4, 16, 16>}, {transform_indices = @transform_15, window_bounds = array<i64: 1, 4, 16, 16>}, {transform_indices = @transform_16, window_bounds = array<i64: 1, 4, 16, 16>}]} {
    %c0 = arith.constant 0 : index
    %c0_0 = arith.constant 0 : index
    %c0_1 = arith.constant 0 : index
    %0 = vector.load %arg1[%c0, %c0_0, %c0_1] : memref<1x16x32xbf16, #tpu.memory_space<vmem>>, vector<1x16x32xbf16>
    %1 = vector.shape_cast %0 : vector<1x16x32xbf16> to vector<16x32xbf16>
    %c0_2 = arith.constant 0 : index
    %c0_3 = arith.constant 0 : index
    %c0_4 = arith.constant 0 : index
    %2 = vector.load %arg2[%c0_2, %c0_3, %c0_4] : memref<1x16x32xbf16, #tpu.memory_space<vmem>>, vector<1x16x32xbf16>
    %3 = vector.shape_cast %2 : vector<1x16x32xbf16> to vector<16x32xbf16>
    %c0_5 = arith.constant 0 : index
    %c0_6 = arith.constant 0 : index
    %c0_7 = arith.constant 0 : index
    %4 = vector.load %arg3[%c0_5, %c0_6, %c0_7] : memref<1x16x32xbf16, #tpu.memory_space<vmem>>, vector<1x16x32xbf16>
    %5 = vector.shape_cast %4 : vector<1x16x32xbf16> to vector<16x32xbf16>
    %c0_8 = arith.constant 0 : index
    %c0_9 = arith.constant 0 : index
    %6 = vector.load %arg4[%c0_8, %c0_9] : memref<32x32xbf16, #tpu.memory_space<vmem>>, vector<32x32xbf16>
    %cst = arith.constant dense<0.000000e+00> : vector<16x32xf32>
    %7 = tpu.matmul %1, %6, %cst {dimension_numbers = #tpu.dot_dimension_numbers<[1], [0], [0], [1], [0, 0, 1, 1], [], []>} : vector<16x32xbf16>, vector<32x32xbf16>, vector<16x32xf32> -> vector<16x32xf32>
    %c0_10 = arith.constant 0 : index
    %c0_11 = arith.constant 0 : index
    %8 = vector.load %arg5[%c0_10, %c0_11] : memref<1x32xf32, #tpu.memory_space<vmem>>, vector<1x32xf32>
    %9 = vector.broadcast %8 : vector<1x32xf32> to vector<16x32xf32>
    %10 = arith.addf %7, %9 : vector<16x32xf32>
    %c0_12 = arith.constant 0 : index
    %c0_13 = arith.constant 0 : index
    %11 = vector.load %arg6[%c0_12, %c0_13] : memref<32x32xbf16, #tpu.memory_space<vmem>>, vector<32x32xbf16>
    %cst_14 = arith.constant dense<0.000000e+00> : vector<16x32xf32>
    %12 = tpu.matmul %3, %11, %cst_14 {dimension_numbers = #tpu.dot_dimension_numbers<[1], [0], [0], [1], [0, 0, 1, 1], [], []>} : vector<16x32xbf16>, vector<32x32xbf16>, vector<16x32xf32> -> vector<16x32xf32>
    %c0_15 = arith.constant 0 : index
    %c0_16 = arith.constant 0 : index
    %13 = vector.load %arg7[%c0_15, %c0_16] : memref<1x32xf32, #tpu.memory_space<vmem>>, vector<1x32xf32>
    %14 = vector.broadcast %13 : vector<1x32xf32> to vector<16x32xf32>
    %15 = arith.addf %12, %14 : vector<16x32xf32>
    %c0_17 = arith.constant 0 : index
    %c0_18 = arith.constant 0 : index
    %16 = vector.load %arg8[%c0_17, %c0_18] : memref<32x32xbf16, #tpu.memory_space<vmem>>, vector<32x32xbf16>
    %cst_19 = arith.constant dense<0.000000e+00> : vector<16x32xf32>
    %17 = tpu.matmul %5, %16, %cst_19 {dimension_numbers = #tpu.dot_dimension_numbers<[1], [0], [0], [1], [0, 0, 1, 1], [], []>} : vector<16x32xbf16>, vector<32x32xbf16>, vector<16x32xf32> -> vector<16x32xf32>
    %c0_20 = arith.constant 0 : index
    %c0_21 = arith.constant 0 : index
    %18 = vector.load %arg9[%c0_20, %c0_21] : memref<1x32xf32, #tpu.memory_space<vmem>>, vector<1x32xf32>
    %19 = vector.broadcast %18 : vector<1x32xf32> to vector<16x32xf32>
    %20 = arith.addf %17, %19 : vector<16x32xf32>
    %c0_22 = arith.constant 0 : index
    %c0_23 = arith.constant 0 : index
    %21 = vector.load %arg10[%c0_22, %c0_23] : memref<32x4xbf16, #tpu.memory_space<vmem>>, vector<32x4xbf16>
    %cst_24 = arith.constant dense<0.000000e+00> : vector<16x4xf32>
    %22 = tpu.matmul %1, %21, %cst_24 {dimension_numbers = #tpu.dot_dimension_numbers<[1], [0], [0], [1], [0, 0, 1, 1], [], []>} : vector<16x32xbf16>, vector<32x4xbf16>, vector<16x4xf32> -> vector<16x4xf32>
    %c0_25 = arith.constant 0 : index
    %c0_26 = arith.constant 0 : index
    %23 = vector.load %arg11[%c0_25, %c0_26] : memref<1x4xf32, #tpu.memory_space<vmem>>, vector<1x4xf32>
    %24 = vector.broadcast %23 : vector<1x4xf32> to vector<16x4xf32>
    %25 = arith.addf %22, %24 : vector<16x4xf32>
    %cst_27 = arith.constant 0.353553385 : f32
    %26 = vector.broadcast %cst_27 : f32 to vector<16x32xf32>
    %27 = arith.mulf %10, %26 : vector<16x32xf32>
    %cst_28 = arith.constant 5.000000e+00 : f32
    %28 = vector.broadcast %cst_28 : f32 to vector<16x4xf32>
    %29 = arith.mulf %25, %28 : vector<16x4xf32>
    %30 = arith.negf %29 : vector<16x4xf32>
    %31 = math.exp %30 : vector<16x4xf32>
    %cst_29 = arith.constant 1.000000e+00 : f32
    %32 = vector.broadcast %cst_29 : f32 to vector<16x4xf32>
    %33 = arith.addf %32, %31 : vector<16x4xf32>
    %34 = arith.divf %32, %33 : vector<16x4xf32>
    %cst_30 = arith.constant 9.99999974E-6 : f32
    %35 = vector.broadcast %cst_30 : f32 to vector<16x4xf32>
    %36 = arith.addf %34, %35 : vector<16x4xf32>
    %cst_31 = arith.constant 1.09861231 : f32
    %37 = vector.broadcast %cst_31 : f32 to vector<16x4xf32>
    %38 = arith.mulf %36, %37 : vector<16x4xf32>
    %39 = math.exp %38 : vector<16x4xf32>
    %cst_32 = arith.constant 1.000000e+00 : f32
    %40 = vector.broadcast %cst_32 : f32 to vector<16x4xf32>
    %41 = arith.subf %39, %40 : vector<16x4xf32>
    %42 = tpu.iota {dimensions = array<i32: 0>} : vector<16x16xi32>
    %43 = tpu.iota {dimensions = array<i32: 1>} : vector<16x16xi32>
    %44 = arith.subi %42, %43 : vector<16x16xi32>
    %45 = arith.subi %42, %43 : vector<16x16xi32>
    %46 = arith.muli %44, %45 : vector<16x16xi32>
    %47 = arith.sitofp %46 : vector<16x16xi32> to vector<16x16xf32>
    %48 = vector.extract_strided_slice %27 {offsets = [0, 0], sizes = [16, 8], strides = [1, 1]} : vector<16x32xf32> to vector<16x8xf32>
    %49 = vector.shape_cast %48 : vector<16x8xf32> to vector<1x16x8xf32>
    %50 = arith.truncf %49 : vector<1x16x8xf32> to vector<1x16x8xbf16>
    %51 = vector.extract_strided_slice %15 {offsets = [0, 0], sizes = [16, 8], strides = [1, 1]} : vector<16x32xf32> to vector<16x8xf32>
    %52 = vector.shape_cast %51 : vector<16x8xf32> to vector<1x16x8xf32>
    %53 = arith.truncf %52 : vector<1x16x8xf32> to vector<1x16x8xbf16>
    %54 = vector.extract_strided_slice %20 {offsets = [0, 0], sizes = [16, 8], strides = [1, 1]} : vector<16x32xf32> to vector<16x8xf32>
    %55 = vector.shape_cast %54 : vector<16x8xf32> to vector<1x16x8xf32>
    %56 = arith.truncf %55 : vector<1x16x8xf32> to vector<1x16x8xbf16>
    "tpu.trace_start"() <{level = 10 : i32, message = "bld,bsd->bls"}> : () -> ()
    %cst_33 = arith.constant dense<0.000000e+00> : vector<1x16x16xf32>
    %57 = tpu.matmul %50, %53, %cst_33 {dimension_numbers = #tpu.dot_dimension_numbers<[2], [2], [1], [1], [0, 0, 0, 1, 1, 1], [0], [0]>} : vector<1x16x8xbf16>, vector<1x16x8xbf16>, vector<1x16x16xf32> -> vector<1x16x16xf32>
    "tpu.trace_stop"() : () -> ()
    %cst_34 = arith.constant dense<0xFF800000> : vector<1x16xf32>
    %58 = vector.multi_reduction <maximumf>, %57, %cst_34 [2] : vector<1x16x16xf32> to vector<1x16xf32>
    %59 = vector.shape_cast %58 : vector<1x16xf32> to vector<1x16x1xf32>
    %60 = vector.broadcast %59 : vector<1x16x1xf32> to vector<1x16x16xf32>
    %61 = arith.subf %57, %60 : vector<1x16x16xf32>
    %62 = math.exp %61 : vector<1x16x16xf32>
    %cst_35 = arith.constant dense<0.000000e+00> : vector<1x16xf32>
    %63 = vector.multi_reduction <add>, %62, %cst_35 [2] : vector<1x16x16xf32> to vector<1x16xf32>
    %64 = vector.shape_cast %63 : vector<1x16xf32> to vector<1x16x1xf32>
    %65 = tpu.reciprocal %64 {approx = true} : vector<1x16x1xf32> -> vector<1x16x1xf32>
    %66 = vector.broadcast %65 : vector<1x16x1xf32> to vector<1x16x16xf32>
    %67 = arith.mulf %62, %66 : vector<1x16x16xf32>
    %c0_36 = arith.constant 0 : index
    %c0_37 = arith.constant 0 : index
    %c0_38 = arith.constant 0 : index
    %c0_39 = arith.constant 0 : index
    %68 = vector.load %arg15[%c0_36, %c0_37, %c0_38, %c0_39] : memref<1x4x16x16xf32, #tpu.memory_space<vmem>>, vector<1x1x16x16xf32>
    %69 = vector.shape_cast %68 : vector<1x1x16x16xf32> to vector<1x16x16xf32>
    %70 = vector.shape_cast %67 : vector<1x16x16xf32> to vector<1x1x16x16xf32>
    tpu.vector_store %arg15[%c0_36, %c0_37, %c0_38, %c0_39], %70 {strides = array<i32>} : memref<1x4x16x16xf32, #tpu.memory_space<vmem>>, vector<1x1x16x16xf32>,
    %71 = arith.truncf %67 : vector<1x16x16xf32> to vector<1x16x16xbf16>
    "tpu.trace_start"() <{level = 10 : i32, message = "bls,bsd->bld"}> : () -> ()
    %cst_40 = arith.constant dense<0.000000e+00> : vector<1x16x8xf32>
    %72 = tpu.matmul %71, %56, %cst_40 {dimension_numbers = #tpu.dot_dimension_numbers<[2], [1], [1], [2], [0, 0, 0, 1, 1, 2], [0], [0]>} : vector<1x16x16xbf16>, vector<1x16x8xbf16>, vector<1x16x8xf32> -> vector<1x16x8xf32>
    "tpu.trace_stop"() : () -> ()
    %73 = arith.truncf %72 : vector<1x16x8xf32> to vector<1x16x8xbf16>
    %74 = vector.extract_strided_slice %41 {offsets = [0, 0], sizes = [16, 1], strides = [1, 1]} : vector<16x4xf32> to vector<16x1xf32>
    %75 = vector.shape_cast %74 : vector<16x1xf32> to vector<1x16x1xf32>
    %cst_41 = arith.constant 1.000000e+00 : f32
    %76 = vector.broadcast %cst_41 : f32 to vector<1x16x1xf32>
    %77 = arith.divf %76, %75 : vector<1x16x1xf32>
    %cst_42 = arith.constant 0.398942292 : f32
    %78 = vector.broadcast %cst_42 : f32 to vector<1x16x1xf32>
    %79 = arith.mulf %78, %77 : vector<1x16x1xf32>
    %80 = vector.shape_cast %47 : vector<16x16xf32> to vector<1x16x16xf32>
    %cst_43 = arith.constant -5.000000e-01 : f32
    %81 = vector.broadcast %cst_43 : f32 to vector<1x16x16xf32>
    %82 = arith.mulf %81, %80 : vector<1x16x16xf32>
    %83 = arith.mulf %77, %77 : vector<1x16x1xf32>
    %84 = vector.broadcast %83 : vector<1x16x1xf32> to vector<1x16x16xf32>
    %85 = arith.mulf %82, %84 : vector<1x16x16xf32>
    %86 = math.exp %85 : vector<1x16x16xf32>
    %87 = vector.broadcast %79 : vector<1x16x1xf32> to vector<1x16x16xf32>
    %88 = arith.mulf %87, %86 : vector<1x16x16xf32>
    %c0_44 = arith.constant 0 : index
    %c0_45 = arith.constant 0 : index
    %c0_46 = arith.constant 0 : index
    %c0_47 = arith.constant 0 : index
    %89 = vector.load %arg16[%c0_44, %c0_45, %c0_46, %c0_47] : memref<1x4x16x16xf32, #tpu.memory_space<vmem>>, vector<1x1x16x16xf32>
    %90 = vector.shape_cast %89 : vector<1x1x16x16xf32> to vector<1x16x16xf32>
    %91 = vector.shape_cast %88 : vector<1x16x16xf32> to vector<1x1x16x16xf32>
    tpu.vector_store %arg16[%c0_44, %c0_45, %c0_46, %c0_47], %91 {strides = array<i32>} : memref<1x4x16x16xf32, #tpu.memory_space<vmem>>, vector<1x1x16x16xf32>,
    %92 = vector.shape_cast %75 : vector<1x16x1xf32> to vector<1x16x1xf32>
    %93 = vector.broadcast %92 : vector<1x16x1xf32> to vector<1x16x16xf32>
    %c0_48 = arith.constant 0 : index
    %c0_49 = arith.constant 0 : index
    %c0_50 = arith.constant 0 : index
    %c0_51 = arith.constant 0 : index
    %94 = vector.load %arg17[%c0_48, %c0_49, %c0_50, %c0_51] : memref<1x4x16x16xf32, #tpu.memory_space<vmem>>, vector<1x1x16x16xf32>
    %95 = vector.shape_cast %94 : vector<1x1x16x16xf32> to vector<1x16x16xf32>
    %96 = vector.shape_cast %93 : vector<1x16x16xf32> to vector<1x1x16x16xf32>
    tpu.vector_store %arg17[%c0_48, %c0_49, %c0_50, %c0_51], %96 {strides = array<i32>} : memref<1x4x16x16xf32, #tpu.memory_space<vmem>>, vector<1x1x16x16xf32>,
    %97 = vector.extract_strided_slice %27 {offsets = [0, 8], sizes = [16, 8], strides = [1, 1]} : vector<16x32xf32> to vector<16x8xf32>
    %98 = vector.shape_cast %97 : vector<16x8xf32> to vector<1x16x8xf32>
    %99 = arith.truncf %98 : vector<1x16x8xf32> to vector<1x16x8xbf16>
    %100 = vector.extract_strided_slice %15 {offsets = [0, 8], sizes = [16, 8], strides = [1, 1]} : vector<16x32xf32> to vector<16x8xf32>
    %101 = vector.shape_cast %100 : vector<16x8xf32> to vector<1x16x8xf32>
    %102 = arith.truncf %101 : vector<1x16x8xf32> to vector<1x16x8xbf16>
    %103 = vector.extract_strided_slice %20 {offsets = [0, 8], sizes = [16, 8], strides = [1, 1]} : vector<16x32xf32> to vector<16x8xf32>
    %104 = vector.shape_cast %103 : vector<16x8xf32> to vector<1x16x8xf32>
    %105 = arith.truncf %104 : vector<1x16x8xf32> to vector<1x16x8xbf16>
    "tpu.trace_start"() <{level = 10 : i32, message = "bld,bsd->bls"}> : () -> ()
    %cst_52 = arith.constant dense<0.000000e+00> : vector<1x16x16xf32>
    %106 = tpu.matmul %99, %102, %cst_52 {dimension_numbers = #tpu.dot_dimension_numbers<[2], [2], [1], [1], [0, 0, 0, 1, 1, 1], [0], [0]>} : vector<1x16x8xbf16>, vector<1x16x8xbf16>, vector<1x16x16xf32> -> vector<1x16x16xf32>
    "tpu.trace_stop"() : () -> ()
    %cst_53 = arith.constant dense<0xFF800000> : vector<1x16xf32>
    %107 = vector.multi_reduction <maximumf>, %106, %cst_53 [2] : vector<1x16x16xf32> to vector<1x16xf32>
    %108 = vector.shape_cast %107 : vector<1x16xf32> to vector<1x16x1xf32>
    %109 = vector.broadcast %108 : vector<1x16x1xf32> to vector<1x16x16xf32>
    %110 = arith.subf %106, %109 : vector<1x16x16xf32>
    %111 = math.exp %110 : vector<1x16x16xf32>
    %cst_54 = arith.constant dense<0.000000e+00> : vector<1x16xf32>
    %112 = vector.multi_reduction <add>, %111, %cst_54 [2] : vector<1x16x16xf32> to vector<1x16xf32>
    %113 = vector.shape_cast %112 : vector<1x16xf32> to vector<1x16x1xf32>
    %114 = tpu.reciprocal %113 {approx = true} : vector<1x16x1xf32> -> vector<1x16x1xf32>
    %115 = vector.broadcast %114 : vector<1x16x1xf32> to vector<1x16x16xf32>
    %116 = arith.mulf %111, %115 : vector<1x16x16xf32>
    %c0_55 = arith.constant 0 : index
    %c1 = arith.constant 1 : index
    %c0_56 = arith.constant 0 : index
    %c0_57 = arith.constant 0 : index
    %117 = vector.load %arg15[%c0_55, %c1, %c0_56, %c0_57] : memref<1x4x16x16xf32, #tpu.memory_space<vmem>>, vector<1x1x16x16xf32>
    %118 = vector.shape_cast %117 : vector<1x1x16x16xf32> to vector<1x16x16xf32>
    %119 = vector.shape_cast %116 : vector<1x16x16xf32> to vector<1x1x16x16xf32>
    tpu.vector_store %arg15[%c0_55, %c1, %c0_56, %c0_57], %119 {strides = array<i32>} : memref<1x4x16x16xf32, #tpu.memory_space<vmem>>, vector<1x1x16x16xf32>,
    %120 = arith.truncf %116 : vector<1x16x16xf32> to vector<1x16x16xbf16>
    "tpu.trace_start"() <{level = 10 : i32, message = "bls,bsd->bld"}> : () -> ()
    %cst_58 = arith.constant dense<0.000000e+00> : vector<1x16x8xf32>
    %121 = tpu.matmul %120, %105, %cst_58 {dimension_numbers = #tpu.dot_dimension_numbers<[2], [1], [1], [2], [0, 0, 0, 1, 1, 2], [0], [0]>} : vector<1x16x16xbf16>, vector<1x16x8xbf16>, vector<1x16x8xf32> -> vector<1x16x8xf32>
    "tpu.trace_stop"() : () -> ()
    %122 = arith.truncf %121 : vector<1x16x8xf32> to vector<1x16x8xbf16>
    %123 = vector.extract_strided_slice %41 {offsets = [0, 1], sizes = [16, 1], strides = [1, 1]} : vector<16x4xf32> to vector<16x1xf32>
    %124 = vector.shape_cast %123 : vector<16x1xf32> to vector<1x16x1xf32>
    %cst_59 = arith.constant 1.000000e+00 : f32
    %125 = vector.broadcast %cst_59 : f32 to vector<1x16x1xf32>
    %126 = arith.divf %125, %124 : vector<1x16x1xf32>
    %cst_60 = arith.constant 0.398942292 : f32
    %127 = vector.broadcast %cst_60 : f32 to vector<1x16x1xf32>
    %128 = arith.mulf %127, %126 : vector<1x16x1xf32>
    %129 = vector.shape_cast %47 : vector<16x16xf32> to vector<1x16x16xf32>
    %cst_61 = arith.constant -5.000000e-01 : f32
    %130 = vector.broadcast %cst_61 : f32 to vector<1x16x16xf32>
    %131 = arith.mulf %130, %129 : vector<1x16x16xf32>
    %132 = arith.mulf %126, %126 : vector<1x16x1xf32>
    %133 = vector.broadcast %132 : vector<1x16x1xf32> to vector<1x16x16xf32>
    %134 = arith.mulf %131, %133 : vector<1x16x16xf32>
    %135 = math.exp %134 : vector<1x16x16xf32>
    %136 = vector.broadcast %128 : vector<1x16x1xf32> to vector<1x16x16xf32>
    %137 = arith.mulf %136, %135 : vector<1x16x16xf32>
    %c0_62 = arith.constant 0 : index
    %c1_63 = arith.constant 1 : index
    %c0_64 = arith.constant 0 : index
    %c0_65 = arith.constant 0 : index
    %138 = vector.load %arg16[%c0_62, %c1_63, %c0_64, %c0_65] : memref<1x4x16x16xf32, #tpu.memory_space<vmem>>, vector<1x1x16x16xf32>
    %139 = vector.shape_cast %138 : vector<1x1x16x16xf32> to vector<1x16x16xf32>
    %140 = vector.shape_cast %137 : vector<1x16x16xf32> to vector<1x1x16x16xf32>
    tpu.vector_store %arg16[%c0_62, %c1_63, %c0_64, %c0_65], %140 {strides = array<i32>} : memref<1x4x16x16xf32, #tpu.memory_space<vmem>>, vector<1x1x16x16xf32>,
    %141 = vector.shape_cast %124 : vector<1x16x1xf32> to vector<1x16x1xf32>
    %142 = vector.broadcast %141 : vector<1x16x1xf32> to vector<1x16x16xf32>
    %c0_66 = arith.constant 0 : index
    %c1_67 = arith.constant 1 : index
    %c0_68 = arith.constant 0 : index
    %c0_69 = arith.constant 0 : index
    %143 = vector.load %arg17[%c0_66, %c1_67, %c0_68, %c0_69] : memref<1x4x16x16xf32, #tpu.memory_space<vmem>>, vector<1x1x16x16xf32>
    %144 = vector.shape_cast %143 : vector<1x1x16x16xf32> to vector<1x16x16xf32>
    %145 = vector.shape_cast %142 : vector<1x16x16xf32> to vector<1x1x16x16xf32>
    tpu.vector_store %arg17[%c0_66, %c1_67, %c0_68, %c0_69], %145 {strides = array<i32>} : memref<1x4x16x16xf32, #tpu.memory_space<vmem>>, vector<1x1x16x16xf32>,
    %146 = vector.extract_strided_slice %27 {offsets = [0, 16], sizes = [16, 8], strides = [1, 1]} : vector<16x32xf32> to vector<16x8xf32>
    %147 = vector.shape_cast %146 : vector<16x8xf32> to vector<1x16x8xf32>
    %148 = arith.truncf %147 : vector<1x16x8xf32> to vector<1x16x8xbf16>
    %149 = vector.extract_strided_slice %15 {offsets = [0, 16], sizes = [16, 8], strides = [1, 1]} : vector<16x32xf32> to vector<16x8xf32>
    %150 = vector.shape_cast %149 : vector<16x8xf32> to vector<1x16x8xf32>
    %151 = arith.truncf %150 : vector<1x16x8xf32> to vector<1x16x8xbf16>
    %152 = vector.extract_strided_slice %20 {offsets = [0, 16], sizes = [16, 8], strides = [1, 1]} : vector<16x32xf32> to vector<16x8xf32>
    %153 = vector.shape_cast %152 : vector<16x8xf32> to vector<1x16x8xf32>
    %154 = arith.truncf %153 : vector<1x16x8xf32> to vector<1x16x8xbf16>
    "tpu.trace_start"() <{level = 10 : i32, message = "bld,bsd->bls"}> : () -> ()
    %cst_70 = arith.constant dense<0.000000e+00> : vector<1x16x16xf32>
    %155 = tpu.matmul %148, %151, %cst_70 {dimension_numbers = #tpu.dot_dimension_numbers<[2], [2], [1], [1], [0, 0, 0, 1, 1, 1], [0], [0]>} : vector<1x16x8xbf16>, vector<1x16x8xbf16>, vector<1x16x16xf32> -> vector<1x16x16xf32>
    "tpu.trace_stop"() : () -> ()
    %cst_71 = arith.constant dense<0xFF800000> : vector<1x16xf32>
    %156 = vector.multi_reduction <maximumf>, %155, %cst_71 [2] : vector<1x16x16xf32> to vector<1x16xf32>
    %157 = vector.shape_cast %156 : vector<1x16xf32> to vector<1x16x1xf32>
    %158 = vector.broadcast %157 : vector<1x16x1xf32> to vector<1x16x16xf32>
    %159 = arith.subf %155, %158 : vector<1x16x16xf32>
    %160 = math.exp %159 : vector<1x16x16xf32>
    %cst_72 = arith.constant dense<0.000000e+00> : vector<1x16xf32>
    %161 = vector.multi_reduction <add>, %160, %cst_72 [2] : vector<1x16x16xf32> to vector<1x16xf32>
    %162 = vector.shape_cast %161 : vector<1x16xf32> to vector<1x16x1xf32>
    %163 = tpu.reciprocal %162 {approx = true} : vector<1x16x1xf32> -> vector<1x16x1xf32>
    %164 = vector.broadcast %163 : vector<1x16x1xf32> to vector<1x16x16xf32>
    %165 = arith.mulf %160, %164 : vector<1x16x16xf32>
    %c0_73 = arith.constant 0 : index
    %c2 = arith.constant 2 : index
    %c0_74 = arith.constant 0 : index
    %c0_75 = arith.constant 0 : index
    %166 = vector.load %arg15[%c0_73, %c2, %c0_74, %c0_75] : memref<1x4x16x16xf32, #tpu.memory_space<vmem>>, vector<1x1x16x16xf32>
    %167 = vector.shape_cast %166 : vector<1x1x16x16xf32> to vector<1x16x16xf32>
    %168 = vector.shape_cast %165 : vector<1x16x16xf32> to vector<1x1x16x16xf32>
    tpu.vector_store %arg15[%c0_73, %c2, %c0_74, %c0_75], %168 {strides = array<i32>} : memref<1x4x16x16xf32, #tpu.memory_space<vmem>>, vector<1x1x16x16xf32>,
    %169 = arith.truncf %165 : vector<1x16x16xf32> to vector<1x16x16xbf16>
    "tpu.trace_start"() <{level = 10 : i32, message = "bls,bsd->bld"}> : () -> ()
    %cst_76 = arith.constant dense<0.000000e+00> : vector<1x16x8xf32>
    %170 = tpu.matmul %169, %154, %cst_76 {dimension_numbers = #tpu.dot_dimension_numbers<[2], [1], [1], [2], [0, 0, 0, 1, 1, 2], [0], [0]>} : vector<1x16x16xbf16>, vector<1x16x8xbf16>, vector<1x16x8xf32> -> vector<1x16x8xf32>
    "tpu.trace_stop"() : () -> ()
    %171 = arith.truncf %170 : vector<1x16x8xf32> to vector<1x16x8xbf16>
    %172 = vector.extract_strided_slice %41 {offsets = [0, 2], sizes = [16, 1], strides = [1, 1]} : vector<16x4xf32> to vector<16x1xf32>
    %173 = vector.shape_cast %172 : vector<16x1xf32> to vector<1x16x1xf32>
    %cst_77 = arith.constant 1.000000e+00 : f32
    %174 = vector.broadcast %cst_77 : f32 to vector<1x16x1xf32>
    %175 = arith.divf %174, %173 : vector<1x16x1xf32>
    %cst_78 = arith.constant 0.398942292 : f32
    %176 = vector.broadcast %cst_78 : f32 to vector<1x16x1xf32>
    %177 = arith.mulf %176, %175 : vector<1x16x1xf32>
    %178 = vector.shape_cast %47 : vector<16x16xf32> to vector<1x16x16xf32>
    %cst_79 = arith.constant -5.000000e-01 : f32
    %179 = vector.broadcast %cst_79 : f32 to vector<1x16x16xf32>
    %180 = arith.mulf %179, %178 : vector<1x16x16xf32>
    %181 = arith.mulf %175, %175 : vector<1x16x1xf32>
    %182 = vector.broadcast %181 : vector<1x16x1xf32> to vector<1x16x16xf32>
    %183 = arith.mulf %180, %182 : vector<1x16x16xf32>
    %184 = math.exp %183 : vector<1x16x16xf32>
    %185 = vector.broadcast %177 : vector<1x16x1xf32> to vector<1x16x16xf32>
    %186 = arith.mulf %185, %184 : vector<1x16x16xf32>
    %c0_80 = arith.constant 0 : index
    %c2_81 = arith.constant 2 : index
    %c0_82 = arith.constant 0 : index
    %c0_83 = arith.constant 0 : index
    %187 = vector.load %arg16[%c0_80, %c2_81, %c0_82, %c0_83] : memref<1x4x16x16xf32, #tpu.memory_space<vmem>>, vector<1x1x16x16xf32>
    %188 = vector.shape_cast %187 : vector<1x1x16x16xf32> to vector<1x16x16xf32>
    %189 = vector.shape_cast %186 : vector<1x16x16xf32> to vector<1x1x16x16xf32>
    tpu.vector_store %arg16[%c0_80, %c2_81, %c0_82, %c0_83], %189 {strides = array<i32>} : memref<1x4x16x16xf32, #tpu.memory_space<vmem>>, vector<1x1x16x16xf32>,
    %190 = vector.shape_cast %173 : vector<1x16x1xf32> to vector<1x16x1xf32>
    %191 = vector.broadcast %190 : vector<1x16x1xf32> to vector<1x16x16xf32>
    %c0_84 = arith.constant 0 : index
    %c2_85 = arith.constant 2 : index
    %c0_86 = arith.constant 0 : index
    %c0_87 = arith.constant 0 : index
    %192 = vector.load %arg17[%c0_84, %c2_85, %c0_86, %c0_87] : memref<1x4x16x16xf32, #tpu.memory_space<vmem>>, vector<1x1x16x16xf32>
    %193 = vector.shape_cast %192 : vector<1x1x16x16xf32> to vector<1x16x16xf32>
    %194 = vector.shape_cast %191 : vector<1x16x16xf32> to vector<1x1x16x16xf32>
    tpu.vector_store %arg17[%c0_84, %c2_85, %c0_86, %c0_87], %194 {strides = array<i32>} : memref<1x4x16x16xf32, #tpu.memory_space<vmem>>, vector<1x1x16x16xf32>,
    %195 = vector.extract_strided_slice %27 {offsets = [0, 24], sizes = [16, 8], strides = [1, 1]} : vector<16x32xf32> to vector<16x8xf32>
    %196 = vector.shape_cast %195 : vector<16x8xf32> to vector<1x16x8xf32>
    %197 = arith.truncf %196 : vector<1x16x8xf32> to vector<1x16x8xbf16>
    %198 = vector.extract_strided_slice %15 {offsets = [0, 24], sizes = [16, 8], strides = [1, 1]} : vector<16x32xf32> to vector<16x8xf32>
    %199 = vector.shape_cast %198 : vector<16x8xf32> to vector<1x16x8xf32>
    %200 = arith.truncf %199 : vector<1x16x8xf32> to vector<1x16x8xbf16>
    %201 = vector.extract_strided_slice %20 {offsets = [0, 24], sizes = [16, 8], strides = [1, 1]} : vector<16x32xf32> to vector<16x8xf32>
    %202 = vector.shape_cast %201 : vector<16x8xf32> to vector<1x16x8xf32>
    %203 = arith.truncf %202 : vector<1x16x8xf32> to vector<1x16x8xbf16>
    "tpu.trace_start"() <{level = 10 : i32, message = "bld,bsd->bls"}> : () -> ()
    %cst_88 = arith.constant dense<0.000000e+00> : vector<1x16x16xf32>
    %204 = tpu.matmul %197, %200, %cst_88 {dimension_numbers = #tpu.dot_dimension_numbers<[2], [2], [1], [1], [0, 0, 0, 1, 1, 1], [0], [0]>} : vector<1x16x8xbf16>, vector<1x16x8xbf16>, vector<1x16x16xf32> -> vector<1x16x16xf32>
    "tpu.trace_stop"() : () -> ()
    %cst_89 = arith.constant dense<0xFF800000> : vector<1x16xf32>
    %205 = vector.multi_reduction <maximumf>, %204, %cst_89 [2] : vector<1x16x16xf32> to vector<1x16xf32>
    %206 = vector.shape_cast %205 : vector<1x16xf32> to vector<1x16x1xf32>
    %207 = vector.broadcast %206 : vector<1x16x1xf32> to vector<1x16x16xf32>
    %208 = arith.subf %204, %207 : vector<1x16x16xf32>
    %209 = math.exp %208 : vector<1x16x16xf32>
    %cst_90 = arith.constant dense<0.000000e+00> : vector<1x16xf32>
    %210 = vector.multi_reduction <add>, %209, %cst_90 [2] : vector<1x16x16xf32> to vector<1x16xf32>
    %211 = vector.shape_cast %210 : vector<1x16xf32> to vector<1x16x1xf32>
    %212 = tpu.reciprocal %211 {approx = true} : vector<1x16x1xf32> -> vector<1x16x1xf32>
    %213 = vector.broadcast %212 : vector<1x16x1xf32> to vector<1x16x16xf32>
    %214 = arith.mulf %209, %213 : vector<1x16x16xf32>
    %c0_91 = arith.constant 0 : index
    %c3 = arith.constant 3 : index
    %c0_92 = arith.constant 0 : index
    %c0_93 = arith.constant 0 : index
    %215 = vector.load %arg15[%c0_91, %c3, %c0_92, %c0_93] : memref<1x4x16x16xf32, #tpu.memory_space<vmem>>, vector<1x1x16x16xf32>
    %216 = vector.shape_cast %215 : vector<1x1x16x16xf32> to vector<1x16x16xf32>
    %217 = vector.shape_cast %214 : vector<1x16x16xf32> to vector<1x1x16x16xf32>
    tpu.vector_store %arg15[%c0_91, %c3, %c0_92, %c0_93], %217 {strides = array<i32>} : memref<1x4x16x16xf32, #tpu.memory_space<vmem>>, vector<1x1x16x16xf32>,
    %218 = arith.truncf %214 : vector<1x16x16xf32> to vector<1x16x16xbf16>
    "tpu.trace_start"() <{level = 10 : i32, message = "bls,bsd->bld"}> : () -> ()
    %cst_94 = arith.constant dense<0.000000e+00> : vector<1x16x8xf32>
    %219 = tpu.matmul %218, %203, %cst_94 {dimension_numbers = #tpu.dot_dimension_numbers<[2], [1], [1], [2], [0, 0, 0, 1, 1, 2], [0], [0]>} : vector<1x16x16xbf16>, vector<1x16x8xbf16>, vector<1x16x8xf32> -> vector<1x16x8xf32>
    "tpu.trace_stop"() : () -> ()
    %220 = arith.truncf %219 : vector<1x16x8xf32> to vector<1x16x8xbf16>
    %221 = vector.extract_strided_slice %41 {offsets = [0, 3], sizes = [16, 1], strides = [1, 1]} : vector<16x4xf32> to vector<16x1xf32>
    %222 = vector.shape_cast %221 : vector<16x1xf32> to vector<1x16x1xf32>
    %cst_95 = arith.constant 1.000000e+00 : f32
    %223 = vector.broadcast %cst_95 : f32 to vector<1x16x1xf32>
    %224 = arith.divf %223, %222 : vector<1x16x1xf32>
    %cst_96 = arith.constant 0.398942292 : f32
    %225 = vector.broadcast %cst_96 : f32 to vector<1x16x1xf32>
    %226 = arith.mulf %225, %224 : vector<1x16x1xf32>
    %227 = vector.shape_cast %47 : vector<16x16xf32> to vector<1x16x16xf32>
    %cst_97 = arith.constant -5.000000e-01 : f32
    %228 = vector.broadcast %cst_97 : f32 to vector<1x16x16xf32>
    %229 = arith.mulf %228, %227 : vector<1x16x16xf32>
    %230 = arith.mulf %224, %224 : vector<1x16x1xf32>
    %231 = vector.broadcast %230 : vector<1x16x1xf32> to vector<1x16x16xf32>
    %232 = arith.mulf %229, %231 : vector<1x16x16xf32>
    %233 = math.exp %232 : vector<1x16x16xf32>
    %234 = vector.broadcast %226 : vector<1x16x1xf32> to vector<1x16x16xf32>
    %235 = arith.mulf %234, %233 : vector<1x16x16xf32>
    %c0_98 = arith.constant 0 : index
    %c3_99 = arith.constant 3 : index
    %c0_100 = arith.constant 0 : index
    %c0_101 = arith.constant 0 : index
    %236 = vector.load %arg16[%c0_98, %c3_99, %c0_100, %c0_101] : memref<1x4x16x16xf32, #tpu.memory_space<vmem>>, vector<1x1x16x16xf32>
    %237 = vector.shape_cast %236 : vector<1x1x16x16xf32> to vector<1x16x16xf32>
    %238 = vector.shape_cast %235 : vector<1x16x16xf32> to vector<1x1x16x16xf32>
    tpu.vector_store %arg16[%c0_98, %c3_99, %c0_100, %c0_101], %238 {strides = array<i32>} : memref<1x4x16x16xf32, #tpu.memory_space<vmem>>, vector<1x1x16x16xf32>,
    %239 = vector.shape_cast %222 : vector<1x16x1xf32> to vector<1x16x1xf32>
    %240 = vector.broadcast %239 : vector<1x16x1xf32> to vector<1x16x16xf32>
    %c0_102 = arith.constant 0 : index
    %c3_103 = arith.constant 3 : index
    %c0_104 = arith.constant 0 : index
    %c0_105 = arith.constant 0 : index
    %241 = vector.load %arg17[%c0_102, %c3_103, %c0_104, %c0_105] : memref<1x4x16x16xf32, #tpu.memory_space<vmem>>, vector<1x1x16x16xf32>
    %242 = vector.shape_cast %241 : vector<1x1x16x16xf32> to vector<1x16x16xf32>
    %243 = vector.shape_cast %240 : vector<1x16x16xf32> to vector<1x1x16x16xf32>
    tpu.vector_store %arg17[%c0_102, %c3_103, %c0_104, %c0_105], %243 {strides = array<i32>} : memref<1x4x16x16xf32, #tpu.memory_space<vmem>>, vector<1x1x16x16xf32>,
    %244 = tpu.concatenate %73, %122, %171, %220 in 2 : vector<1x16x8xbf16>, vector<1x16x8xbf16>, vector<1x16x8xbf16>, vector<1x16x8xbf16> -> vector<1x16x32xbf16>
    %245 = vector.shape_cast %244 : vector<1x16x32xbf16> to vector<16x32xbf16>
    %c0_106 = arith.constant 0 : index
    %c0_107 = arith.constant 0 : index
    %246 = vector.load %arg12[%c0_106, %c0_107] : memref<32x32xbf16, #tpu.memory_space<vmem>>, vector<32x32xbf16>
    %cst_108 = arith.constant dense<0.000000e+00> : vector<16x32xf32>
    %247 = tpu.matmul %245, %246, %cst_108 {dimension_numbers = #tpu.dot_dimension_numbers<[1], [0], [0], [1], [0, 0, 1, 1], [], []>} : vector<16x32xbf16>, vector<32x32xbf16>, vector<16x32xf32> -> vector<16x32xf32>
    %c0_109 = arith.constant 0 : index
    %c0_110 = arith.constant 0 : index
    %248 = vector.load %arg13[%c0_109, %c0_110] : memref<1x32xf32, #tpu.memory_space<vmem>>, vector<1x32xf32>
    %249 = vector.broadcast %248 : vector<1x32xf32> to vector<16x32xf32>
    %250 = arith.addf %247, %249 : vector<16x32xf32>
    %251 = vector.shape_cast %250 : vector<16x32xf32> to vector<1x16x32xf32>
    %c0_111 = arith.constant 0 : index
    %c0_112 = arith.constant 0 : index
    %c0_113 = arith.constant 0 : index
    %252 = vector.load %arg14[%c0_111, %c0_112, %c0_113] : memref<1x16x32xf32, #tpu.memory_space<vmem>>, vector<1x16x32xf32>
    tpu.vector_store %arg14[%c0_111, %c0_112, %c0_113], %251 {strides = array<i32>} : memref<1x16x32xf32, #tpu.memory_space<vmem>>, vector<1x16x32xf32>,
    return
  }
  func.func @transform_0(%arg0: i32) -> (i32, i32, i32) {
    %c0_i32 = arith.constant 0 : i32
    %c0_i32_0 = arith.constant 0 : i32
    %c0_i32_1 = arith.constant 0 : i32
    return %arg0, %c0_i32, %c0_i32_0 : i32, i32, i32
  }
  func.func @transform_1(%arg0: i32) -> (i32, i32, i32) {
    %c0_i32 = arith.constant 0 : i32
    %c0_i32_0 = arith.constant 0 : i32
    %c0_i32_1 = arith.constant 0 : i32
    return %arg0, %c0_i32, %c0_i32_0 : i32, i32, i32
  }
  func.func @transform_2(%arg0: i32) -> (i32, i32, i32) {
    %c0_i32 = arith.constant 0 : i32
    %c0_i32_0 = arith.constant 0 : i32
    %c0_i32_1 = arith.constant 0 : i32
    return %arg0, %c0_i32, %c0_i32_0 : i32, i32, i32
  }
  func.func @transform_3(%arg0: i32) -> (i32, i32) {
    %c0_i32 = arith.constant 0 : i32
    %c0_i32_0 = arith.constant 0 : i32
    %c0_i32_1 = arith.constant 0 : i32
    return %c0_i32, %c0_i32_0 : i32, i32
  }
  func.func @transform_4(%arg0: i32) -> (i32, i32) {
    %c0_i32 = arith.constant 0 : i32
    %c0_i32_0 = arith.constant 0 : i32
    %c0_i32_1 = arith.constant 0 : i32
    return %c0_i32, %c0_i32_0 : i32, i32
  }
  func.func @transform_5(%arg0: i32) -> (i32, i32) {
    %c0_i32 = arith.constant 0 : i32
    %c0_i32_0 = arith.constant 0 : i32
    %c0_i32_1 = arith.constant 0 : i32
    return %c0_i32, %c0_i32_0 : i32, i32
  }
  func.func @transform_6(%arg0: i32) -> (i32, i32) {
    %c0_i32 = arith.constant 0 : i32
    %c0_i32_0 = arith.constant 0 : i32
    %c0_i32_1 = arith.constant 0 : i32
    return %c0_i32, %c0_i32_0 : i32, i32
  }
  func.func @transform_7(%arg0: i32) -> (i32, i32) {
    %c0_i32 = arith.constant 0 : i32
    %c0_i32_0 = arith.constant 0 : i32
    %c0_i32_1 = arith.constant 0 : i32
    return %c0_i32, %c0_i32_0 : i32, i32
  }
  func.func @transform_8(%arg0: i32) -> (i32, i32) {
    %c0_i32 = arith.constant 0 : i32
    %c0_i32_0 = arith.constant 0 : i32
    %c0_i32_1 = arith.constant 0 : i32
    return %c0_i32, %c0_i32_0 : i32, i32
  }
  func.func @transform_9(%arg0: i32) -> (i32, i32) {
    %c0_i32 = arith.constant 0 : i32
    %c0_i32_0 = arith.constant 0 : i32
    %c0_i32_1 = arith.constant 0 : i32
    return %c0_i32, %c0_i32_0 : i32, i32
  }
  func.func @transform_10(%arg0: i32) -> (i32, i32) {
    %c0_i32 = arith.constant 0 : i32
    %c0_i32_0 = arith.constant 0 : i32
    %c0_i32_1 = arith.constant 0 : i32
    return %c0_i32, %c0_i32_0 : i32, i32
  }
  func.func @transform_11(%arg0: i32) -> (i32, i32) {
    %c0_i32 = arith.constant 0 : i32
    %c0_i32_0 = arith.constant 0 : i32
    %c0_i32_1 = arith.constant 0 : i32
    return %c0_i32, %c0_i32_0 : i32, i32
  }
  func.func @transform_12(%arg0: i32) -> (i32, i32) {
    %c0_i32 = arith.constant 0 : i32
    %c0_i32_0 = arith.constant 0 : i32
    %c0_i32_1 = arith.constant 0 : i32
    return %c0_i32, %c0_i32_0 : i32, i32
  }
  func.func @transform_13(%arg0: i32) -> (i32, i32, i32) {
    %c0_i32 = arith.constant 0 : i32
    %c0_i32_0 = arith.constant 0 : i32
    %c0_i32_1 = arith.constant 0 : i32
    return %arg0, %c0_i32, %c0_i32_0 : i32, i32, i32
  }
  func.func @transform_14(%arg0: i32) -> (i32, i32, i32, i32) {
    %c0_i32 = arith.constant 0 : i32
    %c0_i32_0 = arith.constant 0 : i32
    %c0_i32_1 = arith.constant 0 : i32
    %c0_i32_2 = arith.constant 0 : i32
    return %arg0, %c0_i32, %c0_i32_0, %c0_i32_1 : i32, i32, i32, i32
  }
  func.func @transform_15(%arg0: i32) -> (i32, i32, i32, i32) {
    %c0_i32 = arith.constant 0 : i32
    %c0_i32_0 = arith.constant 0 : i32
    %c0_i32_1 = arith.constant 0 : i32
    %c0_i32_2 = arith.constant 0 : i32
    return %arg0, %c0_i32, %c0_i32_0, %c0_i32_1 : i32, i32, i32, i32
  }
  func.func @transform_16(%arg0: i32) -> (i32, i32, i32, i32) {
    %c0_i32 = arith.constant 0 : i32
    %c0_i32_0 = arith.constant 0 : i32
    %c0_i32_1 = arith.constant 0 : i32
    %c0_i32_2 = arith.constant 0 : i32
    return %arg0, %c0_i32, %c0_i32_0, %c0_i32_1 : i32, i32, i32, i32
  }
}

module attributes {stable_mosaic.version = 11 : i64} {
  func.func @_attention_layer_kernel(%arg0: i32, %arg1: memref<1x16x32xbf16, #tpu.memory_space<vmem>>, %arg2: memref<1x16x32xbf16, #tpu.memory_space<vmem>>, %arg3: memref<1x16x32xbf16, #tpu.memory_space<vmem>>, %arg4: memref<32x32xbf16, #tpu.memory_space<vmem>>, %arg5: memref<1x32xf32, #tpu.memory_space<vmem>>, %arg6: memref<32x32xbf16, #tpu.memory_space<vmem>>, %arg7: memref<1x32xf32, #tpu.memory_space<vmem>>, %arg8: memref<32x32xbf16, #tpu.memory_space<vmem>>, %arg9: memref<1x32xf32, #tpu.memory_space<vmem>>, %arg10: memref<32x4xbf16, #tpu.memory_space<vmem>>, %arg11: memref<1x4xf32, #tpu.memory_space<vmem>>, %arg12: memref<32x32xbf16, #tpu.memory_space<vmem>>, %arg13: memref<1x32xf32, #tpu.memory_space<vmem>>, %arg14: memref<1x16x32xf32, #tpu.memory_space<vmem>>, %arg15: memref<1x4x16x16xf32, #tpu.memory_space<vmem>>, %arg16: memref<1x4x16x16xf32, #tpu.memory_space<vmem>>, %arg17: memref<1x4x16x16xf32, #tpu.memory_space<vmem>>) attributes {dimension_semantics = [#tpu.dimension_semantics<parallel>], iteration_bounds = array<i64: 2>, scalar_prefetch = 0 : i64, scratch_operands = 0 : i64, tpu.core_type = #tpu.core_type<tc>, window_params = [{transform_indices = @transform_0, window_bounds = array<i64: 1, 16, 32>}, {transform_indices = @transform_1, window_bounds = array<i64: 1, 16, 32>}, {transform_indices = @transform_2, window_bounds = array<i64: 1, 16, 32>}, {pipeline_mode = #tpu.pipeline_mode<synchronous>, transform_indices = @transform_3, window_bounds = array<i64: 32, 32>}, {pipeline_mode = #tpu.pipeline_mode<synchronous>, transform_indices = @transform_4, window_bounds = array<i64: 1, 32>}, {pipeline_mode = #tpu.pipeline_mode<synchronous>, transform_indices = @transform_5, window_bounds = array<i64: 32, 32>}, {pipeline_mode = #tpu.pipeline_mode<synchronous>, transform_indices = @transform_6, window_bounds = array<i64: 1, 32>}, {pipeline_mode = #tpu.pipeline_mode<synchronous>, transform_indices = @transform_7, window_bounds = array<i64: 32, 32>}, {pipeline_mode = #tpu.pipeline_mode<synchronous>, transform_indices = @transform_8, window_bounds = array<i64: 1, 32>}, {pipeline_mode = #tpu.pipeline_mode<synchronous>, transform_indices = @transform_9, window_bounds = array<i64: 32, 4>}, {pipeline_mode = #tpu.pipeline_mode<synchronous>, transform_indices = @transform_10, window_bounds = array<i64: 1, 4>}, {pipeline_mode = #tpu.pipeline_mode<synchronous>, transform_indices = @transform_11, window_bounds = array<i64: 32, 32>}, {pipeline_mode = #tpu.pipeline_mode<synchronous>, transform_indices = @transform_12, window_bounds = array<i64: 1, 32>}, {transform_indices = @transform_13, window_bounds = array<i64: 1, 16, 32>}, {transform_indices = @transform_14, window_bounds = array<i64: 1, 4, 16, 16>}, {transform_indices = @transform_15, window_bounds = array<i64: 1, 4, 16, 16>}, {transform_indices = @transform_16, window_bounds = array<i64: 1, 4, 16, 16>}]} {
    %c0 = arith.constant 0 : index
    %c0_0 = arith.constant 0 : index
    %c0_1 = arith.constant 0 : index
    %0 = vector.load %arg1[%c0, %c0_0, %c0_1] : memref<1x16x32xbf16, #tpu.memory_space<vmem>>, vector<1x16x32xbf16>
    %1 = vector.shape_cast %0 : vector<1x16x32xbf16> to vector<16x32xbf16>
    %c0_2 = arith.constant 0 : index
    %c0_3 = arith.constant 0 : index
    %c0_4 = arith.constant 0 : index
    %2 = vector.load %arg2[%c0_2, %c0_3, %c0_4] : memref<1x16x32xbf16, #tpu.memory_space<vmem>>, vector<1x16x32xbf16>
    %3 = vector.shape_cast %2 : vector<1x16x32xbf16> to vector<16x32xbf16>
    %c0_5 = arith.constant 0 : index
    %c0_6 = arith.constant 0 : index
    %c0_7 = arith.constant 0 : index
    %4 = vector.load %arg3[%c0_5, %c0_6, %c0_7] : memref<1x16x32xbf16, #tpu.memory_space<vmem>>, vector<1x16x32xbf16>
    %5 = vector.shape_cast %4 : vector<1x16x32xbf16> to vector<16x32xbf16>
    %c0_8 = arith.constant 0 : index
    %c0_9 = arith.constant 0 : index
    %6 = vector.load %arg4[%c0_8, %c0_9] : memref<32x32xbf16, #tpu.memory_space<vmem>>, vector<32x32xbf16>
    %cst = arith.constant dense<0.000000e+00> : vector<16x32xf32>
    %7 = tpu.matmul %1, %6, %cst {dimension_numbers = #tpu.dot_dimension_numbers<[1], [0], [0], [1], [0, 0, 1, 1], [], []>} : vector<16x32xbf16>, vector<32x32xbf16>, vector<16x32xf32> -> vector<16x32xf32>
    %c0_10 = arith.constant 0 : index
    %c0_11 = arith.constant 0 : index
    %8 = vector.load %arg5[%c0_10, %c0_11] : memref<1x32xf32, #tpu.memory_space<vmem>>, vector<1x32xf32>
    %9 = vector.broadcast %8 : vector<1x32xf32> to vector<16x32xf32>
    %10 = arith.addf %7, %9 : vector<16x32xf32>
    %c0_12 = arith.constant 0 : index
    %c0_13 = arith.constant 0 : index
    %11 = vector.load %arg6[%c0_12, %c0_13] : memref<32x32xbf16, #tpu.memory_space<vmem>>, vector<32x32xbf16>
    %cst_14 = arith.constant dense<0.000000e+00> : vector<16x32xf32>
    %12 = tpu.matmul %3, %11, %cst_14 {dimension_numbers = #tpu.dot_dimension_numbers<[1], [0], [0], [1], [0, 0, 1, 1], [], []>} : vector<16x32xbf16>, vector<32x32xbf16>, vector<16x32xf32> -> vector<16x32xf32>
    %c0_15 = arith.constant 0 : index
    %c0_16 = arith.constant 0 : index
    %13 = vector.load %arg7[%c0_15, %c0_16] : memref<1x32xf32, #tpu.memory_space<vmem>>, vector<1x32xf32>
    %14 = vector.broadcast %13 : vector<1x32xf32> to vector<16x32xf32>
    %15 = arith.addf %12, %14 : vector<16x32xf32>
    %c0_17 = arith.constant 0 : index
    %c0_18 = arith.constant 0 : index
    %16 = vector.load %arg8[%c0_17, %c0_18] : memref<32x32xbf16, #tpu.memory_space<vmem>>, vector<32x32xbf16>
    %cst_19 = arith.constant dense<0.000000e+00> : vector<16x32xf32>
    %17 = tpu.matmul %5, %16, %cst_19 {dimension_numbers = #tpu.dot_dimension_numbers<[1], [0], [0], [1], [0, 0, 1, 1], [], []>} : vector<16x32xbf16>, vector<32x32xbf16>, vector<16x32xf32> -> vector<16x32xf32>
    %c0_20 = arith.constant 0 : index
    %c0_21 = arith.constant 0 : index
    %18 = vector.load %arg9[%c0_20, %c0_21] : memref<1x32xf32, #tpu.memory_space<vmem>>, vector<1x32xf32>
    %19 = vector.broadcast %18 : vector<1x32xf32> to vector<16x32xf32>
    %20 = arith.addf %17, %19 : vector<16x32xf32>
    %c0_22 = arith.constant 0 : index
    %c0_23 = arith.constant 0 : index
    %21 = vector.load %arg10[%c0_22, %c0_23] : memref<32x4xbf16, #tpu.memory_space<vmem>>, vector<32x4xbf16>
    %cst_24 = arith.constant dense<0.000000e+00> : vector<16x4xf32>
    %22 = tpu.matmul %1, %21, %cst_24 {dimension_numbers = #tpu.dot_dimension_numbers<[1], [0], [0], [1], [0, 0, 1, 1], [], []>} : vector<16x32xbf16>, vector<32x4xbf16>, vector<16x4xf32> -> vector<16x4xf32>
    %c0_25 = arith.constant 0 : index
    %c0_26 = arith.constant 0 : index
    %23 = vector.load %arg11[%c0_25, %c0_26] : memref<1x4xf32, #tpu.memory_space<vmem>>, vector<1x4xf32>
    %24 = vector.broadcast %23 : vector<1x4xf32> to vector<16x4xf32>
    %25 = arith.addf %22, %24 : vector<16x4xf32>
    %cst_27 = arith.constant 0.353553385 : f32
    %26 = vector.broadcast %cst_27 : f32 to vector<16x32xf32>
    %27 = arith.mulf %10, %26 : vector<16x32xf32>
    %cst_28 = arith.constant 5.000000e+00 : f32
    %28 = vector.broadcast %cst_28 : f32 to vector<16x4xf32>
    %29 = arith.mulf %25, %28 : vector<16x4xf32>
    %30 = arith.negf %29 : vector<16x4xf32>
    %31 = math.exp %30 : vector<16x4xf32>
    %cst_29 = arith.constant 1.000000e+00 : f32
    %32 = vector.broadcast %cst_29 : f32 to vector<16x4xf32>
    %33 = arith.addf %32, %31 : vector<16x4xf32>
    %34 = arith.divf %32, %33 : vector<16x4xf32>
    %cst_30 = arith.constant 9.99999974E-6 : f32
    %35 = vector.broadcast %cst_30 : f32 to vector<16x4xf32>
    %36 = arith.addf %34, %35 : vector<16x4xf32>
    %cst_31 = arith.constant 1.09861231 : f32
    %37 = vector.broadcast %cst_31 : f32 to vector<16x4xf32>
    %38 = arith.mulf %36, %37 : vector<16x4xf32>
    %39 = math.exp %38 : vector<16x4xf32>
    %cst_32 = arith.constant 1.000000e+00 : f32
    %40 = vector.broadcast %cst_32 : f32 to vector<16x4xf32>
    %41 = arith.subf %39, %40 : vector<16x4xf32>
    %42 = tpu.iota {dimensions = array<i32: 0>} : vector<16x16xi32>
    %43 = tpu.iota {dimensions = array<i32: 1>} : vector<16x16xi32>
    %44 = arith.subi %42, %43 : vector<16x16xi32>
    %45 = arith.subi %42, %43 : vector<16x16xi32>
    %46 = arith.muli %44, %45 : vector<16x16xi32>
    %47 = arith.sitofp %46 : vector<16x16xi32> to vector<16x16xf32>
    %48 = vector.extract_strided_slice %27 {offsets = [0, 0], sizes = [16, 8], strides = [1, 1]} : vector<16x32xf32> to vector<16x8xf32>
    %49 = vector.shape_cast %48 : vector<16x8xf32> to vector<1x16x8xf32>
    %50 = arith.truncf %49 : vector<1x16x8xf32> to vector<1x16x8xbf16>
    %51 = vector.extract_strided_slice %15 {offsets = [0, 0], sizes = [16, 8], strides = [1, 1]} : vector<16x32xf32> to vector<16x8xf32>
    %52 = vector.shape_cast %51 : vector<16x8xf32> to vector<1x16x8xf32>
    %53 = arith.truncf %52 : vector<1x16x8xf32> to vector<1x16x8xbf16>
    %54 = vector.extract_strided_slice %20 {offsets = [0, 0], sizes = [16, 8], strides = [1, 1]} : vector<16x32xf32> to vector<16x8xf32>
    %55 = vector.shape_cast %54 : vector<16x8xf32> to vector<1x16x8xf32>
    %56 = arith.truncf %55 : vector<1x16x8xf32> to vector<1x16x8xbf16>
    "tpu.trace_start"() <{level = 10 : i32, message = "bld,bsd->bls"}> : () -> ()
    %cst_33 = arith.constant dense<0.000000e+00> : vector<1x16x16xf32>
    %57 = tpu.matmul %50, %53, %cst_33 {dimension_numbers = #tpu.dot_dimension_numbers<[2], [2], [1], [1], [0, 0, 0, 1, 1, 1], [0], [0]>} : vector<1x16x8xbf16>, vector<1x16x8xbf16>, vector<1x16x16xf32> -> vector<1x16x16xf32>
    "tpu.trace_stop"() : () -> ()
    %cst_34 = arith.constant dense<0xFF800000> : vector<1x16xf32>
    %58 = vector.multi_reduction <maximumf>, %57, %cst_34 [2] : vector<1x16x16xf32> to vector<1x16xf32>
    %59 = vector.shape_cast %58 : vector<1x16xf32> to vector<1x16x1xf32>
    %60 = vector.broadcast %59 : vector<1x16x1xf32> to vector<1x16x16xf32>
    %61 = arith.subf %57, %60 : vector<1x16x16xf32>
    %62 = math.exp %61 : vector<1x16x16xf32>
    %cst_35 = arith.constant dense<0.000000e+00> : vector<1x16xf32>
    %63 = vector.multi_reduction <add>, %62, %cst_35 [2] : vector<1x16x16xf32> to vector<1x16xf32>
    %64 = vector.shape_cast %63 : vector<1x16xf32> to vector<1x16x1xf32>
    %65 = tpu.reciprocal %64 {approx = true} : vector<1x16x1xf32> -> vector<1x16x1xf32>
    %66 = vector.broadcast %65 : vector<1x16x1xf32> to vector<1x16x16xf32>
    %67 = arith.mulf %62, %66 : vector<1x16x16xf32>
    %c0_36 = arith.constant 0 : index
    %c0_37 = arith.constant 0 : index
    %c0_38 = arith.constant 0 : index
    %c0_39 = arith.constant 0 : index
    %68 = vector.load %arg15[%c0_36, %c0_37, %c0_38, %c0_39] : memref<1x4x16x16xf32, #tpu.memory_space<vmem>>, vector<1x1x16x16xf32>
    %69 = vector.shape_cast %68 : vector<1x1x16x16xf32> to vector<1x16x16xf32>
    %70 = vector.shape_cast %67 : vector<1x16x16xf32> to vector<1x1x16x16xf32>
    tpu.vector_store %arg15[%c0_36, %c0_37, %c0_38, %c0_39], %70 {strides = array<i32>} : memref<1x4x16x16xf32, #tpu.memory_space<vmem>>, vector<1x1x16x16xf32>,
    %71 = arith.truncf %67 : vector<1x16x16xf32> to vector<1x16x16xbf16>
    "tpu.trace_start"() <{level = 10 : i32, message = "bls,bsd->bld"}> : () -> ()
    %cst_40 = arith.constant dense<0.000000e+00> : vector<1x16x8xf32>
    %72 = tpu.matmul %71, %56, %cst_40 {dimension_numbers = #tpu.dot_dimension_numbers<[2], [1], [1], [2], [0, 0, 0, 1, 1, 2], [0], [0]>} : vector<1x16x16xbf16>, vector<1x16x8xbf16>, vector<1x16x8xf32> -> vector<1x16x8xf32>
    "tpu.trace_stop"() : () -> ()
    %73 = arith.truncf %72 : vector<1x16x8xf32> to vector<1x16x8xbf16>
    %74 = vector.extract_strided_slice %41 {offsets = [0, 0], sizes = [16, 1], strides = [1, 1]} : vector<16x4xf32> to vector<16x1xf32>
    %75 = vector.shape_cast %74 : vector<16x1xf32> to vector<1x16x1xf32>
    %cst_41 = arith.constant 1.000000e+00 : f32
    %76 = vector.broadcast %cst_41 : f32 to vector<1x16x1xf32>
    %77 = arith.divf %76, %75 : vector<1x16x1xf32>
    %cst_42 = arith.constant 0.398942292 : f32
    %78 = vector.broadcast %cst_42 : f32 to vector<1x16x1xf32>
    %79 = arith.mulf %78, %77 : vector<1x16x1xf32>
    %80 = vector.shape_cast %47 : vector<16x16xf32> to vector<1x16x16xf32>
    %cst_43 = arith.constant -5.000000e-01 : f32
    %81 = vector.broadcast %cst_43 : f32 to vector<1x16x16xf32>
    %82 = arith.mulf %81, %80 : vector<1x16x16xf32>
    %83 = arith.mulf %77, %77 : vector<1x16x1xf32>
    %84 = vector.broadcast %83 : vector<1x16x1xf32> to vector<1x16x16xf32>
    %85 = arith.mulf %82, %84 : vector<1x16x16xf32>
    %86 = math.exp %85 : vector<1x16x16xf32>
    %87 = vector.broadcast %79 : vector<1x16x1xf32> to vector<1x16x16xf32>
    %88 = arith.mulf %87, %86 : vector<1x16x16xf32>
    %c0_44 = arith.constant 0 : index
    %c0_45 = arith.constant 0 : index
    %c0_46 = arith.constant 0 : index
    %c0_47 = arith.constant 0 : index
    %89 = vector.load %arg16[%c0_44, %c0_45, %c0_46, %c0_47] : memref<1x4x16x16xf32, #tpu.memory_space<vmem>>, vector<1x1x16x16xf32>
    %90 = vector.shape_cast %89 : vector<1x1x16x16xf32> to vector<1x16x16xf32>
    %91 = vector.shape_cast %88 : vector<1x16x16xf32> to vector<1x1x16x16xf32>
    tpu.vector_store %arg16[%c0_44, %c0_45, %c0_46, %c0_47], %91 {strides = array<i32>} : memref<1x4x16x16xf32, #tpu.memory_space<vmem>>, vector<1x1x16x16xf32>,
    %92 = vector.shape_cast %75 : vector<1x16x1xf32> to vector<1x16x1xf32>
    %93 = vector.broadcast %92 : vector<1x16x1xf32> to vector<1x16x16xf32>
    %c0_48 = arith.constant 0 : index
    %c0_49 = arith.constant 0 : index
    %c0_50 = arith.constant 0 : index
    %c0_51 = arith.constant 0 : index
    %94 = vector.load %arg17[%c0_48, %c0_49, %c0_50, %c0_51] : memref<1x4x16x16xf32, #tpu.memory_space<vmem>>, vector<1x1x16x16xf32>
    %95 = vector.shape_cast %94 : vector<1x1x16x16xf32> to vector<1x16x16xf32>
    %96 = vector.shape_cast %93 : vector<1x16x16xf32> to vector<1x1x16x16xf32>
    tpu.vector_store %arg17[%c0_48, %c0_49, %c0_50, %c0_51], %96 {strides = array<i32>} : memref<1x4x16x16xf32, #tpu.memory_space<vmem>>, vector<1x1x16x16xf32>,
    %97 = vector.extract_strided_slice %27 {offsets = [0, 8], sizes = [16, 8], strides = [1, 1]} : vector<16x32xf32> to vector<16x8xf32>
    %98 = vector.shape_cast %97 : vector<16x8xf32> to vector<1x16x8xf32>
    %99 = arith.truncf %98 : vector<1x16x8xf32> to vector<1x16x8xbf16>
    %100 = vector.extract_strided_slice %15 {offsets = [0, 8], sizes = [16, 8], strides = [1, 1]} : vector<16x32xf32> to vector<16x8xf32>
    %101 = vector.shape_cast %100 : vector<16x8xf32> to vector<1x16x8xf32>
    %102 = arith.truncf %101 : vector<1x16x8xf32> to vector<1x16x8xbf16>
    %103 = vector.extract_strided_slice %20 {offsets = [0, 8], sizes = [16, 8], strides = [1, 1]} : vector<16x32xf32> to vector<16x8xf32>
    %104 = vector.shape_cast %103 : vector<16x8xf32> to vector<1x16x8xf32>
    %105 = arith.truncf %104 : vector<1x16x8xf32> to vector<1x16x8xbf16>
    "tpu.trace_start"() <{level = 10 : i32, message = "bld,bsd->bls"}> : () -> ()
    %cst_52 = arith.constant dense<0.000000e+00> : vector<1x16x16xf32>
    %106 = tpu.matmul %99, %102, %cst_52 {dimension_numbers = #tpu.dot_dimension_numbers<[2], [2], [1], [1], [0, 0, 0, 1, 1, 1], [0], [0]>} : vector<1x16x8xbf16>, vector<1x16x8xbf16>, vector<1x16x16xf32> -> vector<1x16x16xf32>
    "tpu.trace_stop"() : () -> ()
    %cst_53 = arith.constant dense<0xFF800000> : vector<1x16xf32>
    %107 = vector.multi_reduction <maximumf>, %106, %cst_53 [2] : vector<1x16x16xf32> to vector<1x16xf32>
    %108 = vector.shape_cast %107 : vector<1x16xf32> to vector<1x16x1xf32>
    %109 = vector.broadcast %108 : vector<1x16x1xf32> to vector<1x16x16xf32>
    %110 = arith.subf %106, %109 : vector<1x16x16xf32>
    %111 = math.exp %110 : vector<1x16x16xf32>
    %cst_54 = arith.constant dense<0.000000e+00> : vector<1x16xf32>
    %112 = vector.multi_reduction <add>, %111, %cst_54 [2] : vector<1x16x16xf32> to vector<1x16xf32>
    %113 = vector.shape_cast %112 : vector<1x16xf32> to vector<1x16x1xf32>
    %114 = tpu.reciprocal %113 {approx = true} : vector<1x16x1xf32> -> vector<1x16x1xf32>
    %115 = vector.broadcast %114 : vector<1x16x1xf32> to vector<1x16x16xf32>
    %116 = arith.mulf %111, %115 : vector<1x16x16xf32>
    %c0_55 = arith.constant 0 : index
    %c1 = arith.constant 1 : index
    %c0_56 = arith.constant 0 : index
    %c0_57 = arith.constant 0 : index
    %117 = vector.load %arg15[%c0_55, %c1, %c0_56, %c0_57] : memref<1x4x16x16xf32, #tpu.memory_space<vmem>>, vector<1x1x16x16xf32>
    %118 = vector.shape_cast %117 : vector<1x1x16x16xf32> to vector<1x16x16xf32>
    %119 = vector.shape_cast %116 : vector<1x16x16xf32> to vector<1x1x16x16xf32>
    tpu.vector_store %arg15[%c0_55, %c1, %c0_56, %c0_57], %119 {strides = array<i32>} : memref<1x4x16x16xf32, #tpu.memory_space<vmem>>, vector<1x1x16x16xf32>,
    %120 = arith.truncf %116 : vector<1x16x16xf32> to vector<1x16x16xbf16>
    "tpu.trace_start"() <{level = 10 : i32, message = "bls,bsd->bld"}> : () -> ()
    %cst_58 = arith.constant dense<0.000000e+00> : vector<1x16x8xf32>
    %121 = tpu.matmul %120, %105, %cst_58 {dimension_numbers = #tpu.dot_dimension_numbers<[2], [1], [1], [2], [0, 0, 0, 1, 1, 2], [0], [0]>} : vector<1x16x16xbf16>, vector<1x16x8xbf16>, vector<1x16x8xf32> -> vector<1x16x8xf32>
    "tpu.trace_stop"() : () -> ()
    %122 = arith.truncf %121 : vector<1x16x8xf32> to vector<1x16x8xbf16>
    %123 = vector.extract_strided_slice %41 {offsets = [0, 1], sizes = [16, 1], strides = [1, 1]} : vector<16x4xf32> to vector<16x1xf32>
    %124 = vector.shape_cast %123 : vector<16x1xf32> to vector<1x16x1xf32>
    %cst_59 = arith.constant 1.000000e+00 : f32
    %125 = vector.broadcast %cst_59 : f32 to vector<1x16x1xf32>
    %126 = arith.divf %125, %124 : vector<1x16x1xf32>
    %cst_60 = arith.constant 0.398942292 : f32
    %127 = vector.broadcast %cst_60 : f32 to vector<1x16x1xf32>
    %128 = arith.mulf %127, %126 : vector<1x16x1xf32>
    %129 = vector.shape_cast %47 : vector<16x16xf32> to vector<1x16x16xf32>
    %cst_61 = arith.constant -5.000000e-01 : f32
    %130 = vector.broadcast %cst_61 : f32 to vector<1x16x16xf32>
    %131 = arith.mulf %130, %129 : vector<1x16x16xf32>
    %132 = arith.mulf %126, %126 : vector<1x16x1xf32>
    %133 = vector.broadcast %132 : vector<1x16x1xf32> to vector<1x16x16xf32>
    %134 = arith.mulf %131, %133 : vector<1x16x16xf32>
    %135 = math.exp %134 : vector<1x16x16xf32>
    %136 = vector.broadcast %128 : vector<1x16x1xf32> to vector<1x16x16xf32>
    %137 = arith.mulf %136, %135 : vector<1x16x16xf32>
    %c0_62 = arith.constant 0 : index
    %c1_63 = arith.constant 1 : index
    %c0_64 = arith.constant 0 : index
    %c0_65 = arith.constant 0 : index
    %138 = vector.load %arg16[%c0_62, %c1_63, %c0_64, %c0_65] : memref<1x4x16x16xf32, #tpu.memory_space<vmem>>, vector<1x1x16x16xf32>
    %139 = vector.shape_cast %138 : vector<1x1x16x16xf32> to vector<1x16x16xf32>
    %140 = vector.shape_cast %137 : vector<1x16x16xf32> to vector<1x1x16x16xf32>
    tpu.vector_store %arg16[%c0_62, %c1_63, %c0_64, %c0_65], %140 {strides = array<i32>} : memref<1x4x16x16xf32, #tpu.memory_space<vmem>>, vector<1x1x16x16xf32>,
    %141 = vector.shape_cast %124 : vector<1x16x1xf32> to vector<1x16x1xf32>
    %142 = vector.broadcast %141 : vector<1x16x1xf32> to vector<1x16x16xf32>
    %c0_66 = arith.constant 0 : index
    %c1_67 = arith.constant 1 : index
    %c0_68 = arith.constant 0 : index
    %c0_69 = arith.constant 0 : index
    %143 = vector.load %arg17[%c0_66, %c1_67, %c0_68, %c0_69] : memref<1x4x16x16xf32, #tpu.memory_space<vmem>>, vector<1x1x16x16xf32>
    %144 = vector.shape_cast %143 : vector<1x1x16x16xf32> to vector<1x16x16xf32>
    %145 = vector.shape_cast %142 : vector<1x16x16xf32> to vector<1x1x16x16xf32>
    tpu.vector_store %arg17[%c0_66, %c1_67, %c0_68, %c0_69], %145 {strides = array<i32>} : memref<1x4x16x16xf32, #tpu.memory_space<vmem>>, vector<1x1x16x16xf32>,
    %146 = vector.extract_strided_slice %27 {offsets = [0, 16], sizes = [16, 8], strides = [1, 1]} : vector<16x32xf32> to vector<16x8xf32>
    %147 = vector.shape_cast %146 : vector<16x8xf32> to vector<1x16x8xf32>
    %148 = arith.truncf %147 : vector<1x16x8xf32> to vector<1x16x8xbf16>
    %149 = vector.extract_strided_slice %15 {offsets = [0, 16], sizes = [16, 8], strides = [1, 1]} : vector<16x32xf32> to vector<16x8xf32>
    %150 = vector.shape_cast %149 : vector<16x8xf32> to vector<1x16x8xf32>
    %151 = arith.truncf %150 : vector<1x16x8xf32> to vector<1x16x8xbf16>
    %152 = vector.extract_strided_slice %20 {offsets = [0, 16], sizes = [16, 8], strides = [1, 1]} : vector<16x32xf32> to vector<16x8xf32>
    %153 = vector.shape_cast %152 : vector<16x8xf32> to vector<1x16x8xf32>
    %154 = arith.truncf %153 : vector<1x16x8xf32> to vector<1x16x8xbf16>
    "tpu.trace_start"() <{level = 10 : i32, message = "bld,bsd->bls"}> : () -> ()
    %cst_70 = arith.constant dense<0.000000e+00> : vector<1x16x16xf32>
    %155 = tpu.matmul %148, %151, %cst_70 {dimension_numbers = #tpu.dot_dimension_numbers<[2], [2], [1], [1], [0, 0, 0, 1, 1, 1], [0], [0]>} : vector<1x16x8xbf16>, vector<1x16x8xbf16>, vector<1x16x16xf32> -> vector<1x16x16xf32>
    "tpu.trace_stop"() : () -> ()
    %cst_71 = arith.constant dense<0xFF800000> : vector<1x16xf32>
    %156 = vector.multi_reduction <maximumf>, %155, %cst_71 [2] : vector<1x16x16xf32> to vector<1x16xf32>
    %157 = vector.shape_cast %156 : vector<1x16xf32> to vector<1x16x1xf32>
    %158 = vector.broadcast %157 : vector<1x16x1xf32> to vector<1x16x16xf32>
    %159 = arith.subf %155, %158 : vector<1x16x16xf32>
    %160 = math.exp %159 : vector<1x16x16xf32>
    %cst_72 = arith.constant dense<0.000000e+00> : vector<1x16xf32>
    %161 = vector.multi_reduction <add>, %160, %cst_72 [2] : vector<1x16x16xf32> to vector<1x16xf32>
    %162 = vector.shape_cast %161 : vector<1x16xf32> to vector<1x16x1xf32>
    %163 = tpu.reciprocal %162 {approx = true} : vector<1x16x1xf32> -> vector<1x16x1xf32>
    %164 = vector.broadcast %163 : vector<1x16x1xf32> to vector<1x16x16xf32>
    %165 = arith.mulf %160, %164 : vector<1x16x16xf32>
    %c0_73 = arith.constant 0 : index
    %c2 = arith.constant 2 : index
    %c0_74 = arith.constant 0 : index
    %c0_75 = arith.constant 0 : index
    %166 = vector.load %arg15[%c0_73, %c2, %c0_74, %c0_75] : memref<1x4x16x16xf32, #tpu.memory_space<vmem>>, vector<1x1x16x16xf32>
    %167 = vector.shape_cast %166 : vector<1x1x16x16xf32> to vector<1x16x16xf32>
    %168 = vector.shape_cast %165 : vector<1x16x16xf32> to vector<1x1x16x16xf32>
    tpu.vector_store %arg15[%c0_73, %c2, %c0_74, %c0_75], %168 {strides = array<i32>} : memref<1x4x16x16xf32, #tpu.memory_space<vmem>>, vector<1x1x16x16xf32>,
    %169 = arith.truncf %165 : vector<1x16x16xf32> to vector<1x16x16xbf16>
    "tpu.trace_start"() <{level = 10 : i32, message = "bls,bsd->bld"}> : () -> ()
    %cst_76 = arith.constant dense<0.000000e+00> : vector<1x16x8xf32>
    %170 = tpu.matmul %169, %154, %cst_76 {dimension_numbers = #tpu.dot_dimension_numbers<[2], [1], [1], [2], [0, 0, 0, 1, 1, 2], [0], [0]>} : vector<1x16x16xbf16>, vector<1x16x8xbf16>, vector<1x16x8xf32> -> vector<1x16x8xf32>
    "tpu.trace_stop"() : () -> ()
    %171 = arith.truncf %170 : vector<1x16x8xf32> to vector<1x16x8xbf16>
    %172 = vector.extract_strided_slice %41 {offsets = [0, 2], sizes = [16, 1], strides = [1, 1]} : vector<16x4xf32> to vector<16x1xf32>
    %173 = vector.shape_cast %172 : vector<16x1xf32> to vector<1x16x1xf32>
    %cst_77 = arith.constant 1.000000e+00 : f32
    %174 = vector.broadcast %cst_77 : f32 to vector<1x16x1xf32>
    %175 = arith.divf %174, %173 : vector<1x16x1xf32>
    %cst_78 = arith.constant 0.398942292 : f32
    %176 = vector.broadcast %cst_78 : f32 to vector<1x16x1xf32>
    %177 = arith.mulf %176, %175 : vector<1x16x1xf32>
    %178 = vector.shape_cast %47 : vector<16x16xf32> to vector<1x16x16xf32>
    %cst_79 = arith.constant -5.000000e-01 : f32
    %179 = vector.broadcast %cst_79 : f32 to vector<1x16x16xf32>
    %180 = arith.mulf %179, %178 : vector<1x16x16xf32>
    %181 = arith.mulf %175, %175 : vector<1x16x1xf32>
    %182 = vector.broadcast %181 : vector<1x16x1xf32> to vector<1x16x16xf32>
    %183 = arith.mulf %180, %182 : vector<1x16x16xf32>
    %184 = math.exp %183 : vector<1x16x16xf32>
    %185 = vector.broadcast %177 : vector<1x16x1xf32> to vector<1x16x16xf32>
    %186 = arith.mulf %185, %184 : vector<1x16x16xf32>
    %c0_80 = arith.constant 0 : index
    %c2_81 = arith.constant 2 : index
    %c0_82 = arith.constant 0 : index
    %c0_83 = arith.constant 0 : index
    %187 = vector.load %arg16[%c0_80, %c2_81, %c0_82, %c0_83] : memref<1x4x16x16xf32, #tpu.memory_space<vmem>>, vector<1x1x16x16xf32>
    %188 = vector.shape_cast %187 : vector<1x1x16x16xf32> to vector<1x16x16xf32>
    %189 = vector.shape_cast %186 : vector<1x16x16xf32> to vector<1x1x16x16xf32>
    tpu.vector_store %arg16[%c0_80, %c2_81, %c0_82, %c0_83], %189 {strides = array<i32>} : memref<1x4x16x16xf32, #tpu.memory_space<vmem>>, vector<1x1x16x16xf32>,
    %190 = vector.shape_cast %173 : vector<1x16x1xf32> to vector<1x16x1xf32>
    %191 = vector.broadcast %190 : vector<1x16x1xf32> to vector<1x16x16xf32>
    %c0_84 = arith.constant 0 : index
    %c2_85 = arith.constant 2 : index
    %c0_86 = arith.constant 0 : index
    %c0_87 = arith.constant 0 : index
    %192 = vector.load %arg17[%c0_84, %c2_85, %c0_86, %c0_87] : memref<1x4x16x16xf32, #tpu.memory_space<vmem>>, vector<1x1x16x16xf32>
    %193 = vector.shape_cast %192 : vector<1x1x16x16xf32> to vector<1x16x16xf32>
    %194 = vector.shape_cast %191 : vector<1x16x16xf32> to vector<1x1x16x16xf32>
    tpu.vector_store %arg17[%c0_84, %c2_85, %c0_86, %c0_87], %194 {strides = array<i32>} : memref<1x4x16x16xf32, #tpu.memory_space<vmem>>, vector<1x1x16x16xf32>,
    %195 = vector.extract_strided_slice %27 {offsets = [0, 24], sizes = [16, 8], strides = [1, 1]} : vector<16x32xf32> to vector<16x8xf32>
    %196 = vector.shape_cast %195 : vector<16x8xf32> to vector<1x16x8xf32>
    %197 = arith.truncf %196 : vector<1x16x8xf32> to vector<1x16x8xbf16>
    %198 = vector.extract_strided_slice %15 {offsets = [0, 24], sizes = [16, 8], strides = [1, 1]} : vector<16x32xf32> to vector<16x8xf32>
    %199 = vector.shape_cast %198 : vector<16x8xf32> to vector<1x16x8xf32>
    %200 = arith.truncf %199 : vector<1x16x8xf32> to vector<1x16x8xbf16>
    %201 = vector.extract_strided_slice %20 {offsets = [0, 24], sizes = [16, 8], strides = [1, 1]} : vector<16x32xf32> to vector<16x8xf32>
    %202 = vector.shape_cast %201 : vector<16x8xf32> to vector<1x16x8xf32>
    %203 = arith.truncf %202 : vector<1x16x8xf32> to vector<1x16x8xbf16>
    "tpu.trace_start"() <{level = 10 : i32, message = "bld,bsd->bls"}> : () -> ()
    %cst_88 = arith.constant dense<0.000000e+00> : vector<1x16x16xf32>
    %204 = tpu.matmul %197, %200, %cst_88 {dimension_numbers = #tpu.dot_dimension_numbers<[2], [2], [1], [1], [0, 0, 0, 1, 1, 1], [0], [0]>} : vector<1x16x8xbf16>, vector<1x16x8xbf16>, vector<1x16x16xf32> -> vector<1x16x16xf32>
    "tpu.trace_stop"() : () -> ()
    %cst_89 = arith.constant dense<0xFF800000> : vector<1x16xf32>
    %205 = vector.multi_reduction <maximumf>, %204, %cst_89 [2] : vector<1x16x16xf32> to vector<1x16xf32>
    %206 = vector.shape_cast %205 : vector<1x16xf32> to vector<1x16x1xf32>
    %207 = vector.broadcast %206 : vector<1x16x1xf32> to vector<1x16x16xf32>
    %208 = arith.subf %204, %207 : vector<1x16x16xf32>
    %209 = math.exp %208 : vector<1x16x16xf32>
    %cst_90 = arith.constant dense<0.000000e+00> : vector<1x16xf32>
    %210 = vector.multi_reduction <add>, %209, %cst_90 [2] : vector<1x16x16xf32> to vector<1x16xf32>
    %211 = vector.shape_cast %210 : vector<1x16xf32> to vector<1x16x1xf32>
    %212 = tpu.reciprocal %211 {approx = true} : vector<1x16x1xf32> -> vector<1x16x1xf32>
    %213 = vector.broadcast %212 : vector<1x16x1xf32> to vector<1x16x16xf32>
    %214 = arith.mulf %209, %213 : vector<1x16x16xf32>
    %c0_91 = arith.constant 0 : index
    %c3 = arith.constant 3 : index
    %c0_92 = arith.constant 0 : index
    %c0_93 = arith.constant 0 : index
    %215 = vector.load %arg15[%c0_91, %c3, %c0_92, %c0_93] : memref<1x4x16x16xf32, #tpu.memory_space<vmem>>, vector<1x1x16x16xf32>
    %216 = vector.shape_cast %215 : vector<1x1x16x16xf32> to vector<1x16x16xf32>
    %217 = vector.shape_cast %214 : vector<1x16x16xf32> to vector<1x1x16x16xf32>
    tpu.vector_store %arg15[%c0_91, %c3, %c0_92, %c0_93], %217 {strides = array<i32>} : memref<1x4x16x16xf32, #tpu.memory_space<vmem>>, vector<1x1x16x16xf32>,
    %218 = arith.truncf %214 : vector<1x16x16xf32> to vector<1x16x16xbf16>
    "tpu.trace_start"() <{level = 10 : i32, message = "bls,bsd->bld"}> : () -> ()
    %cst_94 = arith.constant dense<0.000000e+00> : vector<1x16x8xf32>
    %219 = tpu.matmul %218, %203, %cst_94 {dimension_numbers = #tpu.dot_dimension_numbers<[2], [1], [1], [2], [0, 0, 0, 1, 1, 2], [0], [0]>} : vector<1x16x16xbf16>, vector<1x16x8xbf16>, vector<1x16x8xf32> -> vector<1x16x8xf32>
    "tpu.trace_stop"() : () -> ()
    %220 = arith.truncf %219 : vector<1x16x8xf32> to vector<1x16x8xbf16>
    %221 = vector.extract_strided_slice %41 {offsets = [0, 3], sizes = [16, 1], strides = [1, 1]} : vector<16x4xf32> to vector<16x1xf32>
    %222 = vector.shape_cast %221 : vector<16x1xf32> to vector<1x16x1xf32>
    %cst_95 = arith.constant 1.000000e+00 : f32
    %223 = vector.broadcast %cst_95 : f32 to vector<1x16x1xf32>
    %224 = arith.divf %223, %222 : vector<1x16x1xf32>
    %cst_96 = arith.constant 0.398942292 : f32
    %225 = vector.broadcast %cst_96 : f32 to vector<1x16x1xf32>
    %226 = arith.mulf %225, %224 : vector<1x16x1xf32>
    %227 = vector.shape_cast %47 : vector<16x16xf32> to vector<1x16x16xf32>
    %cst_97 = arith.constant -5.000000e-01 : f32
    %228 = vector.broadcast %cst_97 : f32 to vector<1x16x16xf32>
    %229 = arith.mulf %228, %227 : vector<1x16x16xf32>
    %230 = arith.mulf %224, %224 : vector<1x16x1xf32>
    %231 = vector.broadcast %230 : vector<1x16x1xf32> to vector<1x16x16xf32>
    %232 = arith.mulf %229, %231 : vector<1x16x16xf32>
    %233 = math.exp %232 : vector<1x16x16xf32>
    %234 = vector.broadcast %226 : vector<1x16x1xf32> to vector<1x16x16xf32>
    %235 = arith.mulf %234, %233 : vector<1x16x16xf32>
    %c0_98 = arith.constant 0 : index
    %c3_99 = arith.constant 3 : index
    %c0_100 = arith.constant 0 : index
    %c0_101 = arith.constant 0 : index
    %236 = vector.load %arg16[%c0_98, %c3_99, %c0_100, %c0_101] : memref<1x4x16x16xf32, #tpu.memory_space<vmem>>, vector<1x1x16x16xf32>
    %237 = vector.shape_cast %236 : vector<1x1x16x16xf32> to vector<1x16x16xf32>
    %238 = vector.shape_cast %235 : vector<1x16x16xf32> to vector<1x1x16x16xf32>
    tpu.vector_store %arg16[%c0_98, %c3_99, %c0_100, %c0_101], %238 {strides = array<i32>} : memref<1x4x16x16xf32, #tpu.memory_space<vmem>>, vector<1x1x16x16xf32>,
    %239 = vector.shape_cast %222 : vector<1x16x1xf32> to vector<1x16x1xf32>
    %240 = vector.broadcast %239 : vector<1x16x1xf32> to vector<1x16x16xf32>
    %c0_102 = arith.constant 0 : index
    %c3_103 = arith.constant 3 : index
    %c0_104 = arith.constant 0 : index
    %c0_105 = arith.constant 0 : index
    %241 = vector.load %arg17[%c0_102, %c3_103, %c0_104, %c0_105] : memref<1x4x16x16xf32, #tpu.memory_space<vmem>>, vector<1x1x16x16xf32>
    %242 = vector.shape_cast %241 : vector<1x1x16x16xf32> to vector<1x16x16xf32>
    %243 = vector.shape_cast %240 : vector<1x16x16xf32> to vector<1x1x16x16xf32>
    tpu.vector_store %arg17[%c0_102, %c3_103, %c0_104, %c0_105], %243 {strides = array<i32>} : memref<1x4x16x16xf32, #tpu.memory_space<vmem>>, vector<1x1x16x16xf32>,
    %244 = tpu.concatenate %73, %122, %171, %220 in 2 : vector<1x16x8xbf16>, vector<1x16x8xbf16>, vector<1x16x8xbf16>, vector<1x16x8xbf16> -> vector<1x16x32xbf16>
    %245 = vector.shape_cast %244 : vector<1x16x32xbf16> to vector<16x32xbf16>
    %c0_106 = arith.constant 0 : index
    %c0_107 = arith.constant 0 : index
    %246 = vector.load %arg12[%c0_106, %c0_107] : memref<32x32xbf16, #tpu.memory_space<vmem>>, vector<32x32xbf16>
    %cst_108 = arith.constant dense<0.000000e+00> : vector<16x32xf32>
    %247 = tpu.matmul %245, %246, %cst_108 {dimension_numbers = #tpu.dot_dimension_numbers<[1], [0], [0], [1], [0, 0, 1, 1], [], []>} : vector<16x32xbf16>, vector<32x32xbf16>, vector<16x32xf32> -> vector<16x32xf32>
    %c0_109 = arith.constant 0 : index
    %c0_110 = arith.constant 0 : index
    %248 = vector.load %arg13[%c0_109, %c0_110] : memref<1x32xf32, #tpu.memory_space<vmem>>, vector<1x32xf32>
    %249 = vector.broadcast %248 : vector<1x32xf32> to vector<16x32xf32>
    %250 = arith.addf %247, %249 : vector<16x32xf32>
    %251 = vector.shape_cast %250 : vector<16x32xf32> to vector<1x16x32xf32>
    %c0_111 = arith.constant 0 : index
    %c0_112 = arith.constant 0 : index
    %c0_113 = arith.constant 0 : index
    %252 = vector.load %arg14[%c0_111, %c0_112, %c0_113] : memref<1x16x32xf32, #tpu.memory_space<vmem>>, vector<1x16x32xf32>
    tpu.vector_store %arg14[%c0_111, %c0_112, %c0_113], %251 {strides = array<i32>} : memref<1x16x32xf32, #tpu.memory_space<vmem>>, vector<1x16x32xf32>,
    return
  }
  func.func @transform_0(%arg0: i32) -> (i32, i32, i32) {
    %c0_i32 = arith.constant 0 : i32
    %c0_i32_0 = arith.constant 0 : i32
    %c0_i32_1 = arith.constant 0 : i32
    return %arg0, %c0_i32, %c0_i32_0 : i32, i32, i32
  }
  func.func @transform_1(%arg0: i32) -> (i32, i32, i32) {
    %c0_i32 = arith.constant 0 : i32
    %c0_i32_0 = arith.constant 0 : i32
    %c0_i32_1 = arith.constant 0 : i32
    return %arg0, %c0_i32, %c0_i32_0 : i32, i32, i32
  }
  func.func @transform_2(%arg0: i32) -> (i32, i32, i32) {
    %c0_i32 = arith.constant 0 : i32
    %c0_i32_0 = arith.constant 0 : i32
    %c0_i32_1 = arith.constant 0 : i32
    return %arg0, %c0_i32, %c0_i32_0 : i32, i32, i32
  }
  func.func @transform_3(%arg0: i32) -> (i32, i32) {
    %c0_i32 = arith.constant 0 : i32
    %c0_i32_0 = arith.constant 0 : i32
    %c0_i32_1 = arith.constant 0 : i32
    return %c0_i32, %c0_i32_0 : i32, i32
  }
  func.func @transform_4(%arg0: i32) -> (i32, i32) {
    %c0_i32 = arith.constant 0 : i32
    %c0_i32_0 = arith.constant 0 : i32
    %c0_i32_1 = arith.constant 0 : i32
    return %c0_i32, %c0_i32_0 : i32, i32
  }
  func.func @transform_5(%arg0: i32) -> (i32, i32) {
    %c0_i32 = arith.constant 0 : i32
    %c0_i32_0 = arith.constant 0 : i32
    %c0_i32_1 = arith.constant 0 : i32
    return %c0_i32, %c0_i32_0 : i32, i32
  }
  func.func @transform_6(%arg0: i32) -> (i32, i32) {
    %c0_i32 = arith.constant 0 : i32
    %c0_i32_0 = arith.constant 0 : i32
    %c0_i32_1 = arith.constant 0 : i32
    return %c0_i32, %c0_i32_0 : i32, i32
  }
  func.func @transform_7(%arg0: i32) -> (i32, i32) {
    %c0_i32 = arith.constant 0 : i32
    %c0_i32_0 = arith.constant 0 : i32
    %c0_i32_1 = arith.constant 0 : i32
    return %c0_i32, %c0_i32_0 : i32, i32
  }
  func.func @transform_8(%arg0: i32) -> (i32, i32) {
    %c0_i32 = arith.constant 0 : i32
    %c0_i32_0 = arith.constant 0 : i32
    %c0_i32_1 = arith.constant 0 : i32
    return %c0_i32, %c0_i32_0 : i32, i32
  }
  func.func @transform_9(%arg0: i32) -> (i32, i32) {
    %c0_i32 = arith.constant 0 : i32
    %c0_i32_0 = arith.constant 0 : i32
    %c0_i32_1 = arith.constant 0 : i32
    return %c0_i32, %c0_i32_0 : i32, i32
  }
  func.func @transform_10(%arg0: i32) -> (i32, i32) {
    %c0_i32 = arith.constant 0 : i32
    %c0_i32_0 = arith.constant 0 : i32
    %c0_i32_1 = arith.constant 0 : i32
    return %c0_i32, %c0_i32_0 : i32, i32
  }
  func.func @transform_11(%arg0: i32) -> (i32, i32) {
    %c0_i32 = arith.constant 0 : i32
    %c0_i32_0 = arith.constant 0 : i32
    %c0_i32_1 = arith.constant 0 : i32
    return %c0_i32, %c0_i32_0 : i32, i32
  }
  func.func @transform_12(%arg0: i32) -> (i32, i32) {
    %c0_i32 = arith.constant 0 : i32
    %c0_i32_0 = arith.constant 0 : i32
    %c0_i32_1 = arith.constant 0 : i32
    return %c0_i32, %c0_i32_0 : i32, i32
  }
  func.func @transform_13(%arg0: i32) -> (i32, i32, i32) {
    %c0_i32 = arith.constant 0 : i32
    %c0_i32_0 = arith.constant 0 : i32
    %c0_i32_1 = arith.constant 0 : i32
    return %arg0, %c0_i32, %c0_i32_0 : i32, i32, i32
  }
  func.func @transform_14(%arg0: i32) -> (i32, i32, i32, i32) {
    %c0_i32 = arith.constant 0 : i32
    %c0_i32_0 = arith.constant 0 : i32
    %c0_i32_1 = arith.constant 0 : i32
    %c0_i32_2 = arith.constant 0 : i32
    return %arg0, %c0_i32, %c0_i32_0, %c0_i32_1 : i32, i32, i32, i32
  }
  func.func @transform_15(%arg0: i32) -> (i32, i32, i32, i32) {
    %c0_i32 = arith.constant 0 : i32
    %c0_i32_0 = arith.constant 0 : i32
    %c0_i32_1 = arith.constant 0 : i32
    %c0_i32_2 = arith.constant 0 : i32
    return %arg0, %c0_i32, %c0_i32_0, %c0_i32_1 : i32, i32, i32, i32
  }
  func.func @transform_16(%arg0: i32) -> (i32, i32, i32, i32) {
    %c0_i32 = arith.constant 0 : i32
    %c0_i32_0 = arith.constant 0 : i32
    %c0_i32_1 = arith.constant 0 : i32
    %c0_i32_2 = arith.constant 0 : i32
    return %arg0, %c0_i32, %c0_i32_0, %c0_i32_1 : i32, i32, i32, i32
  }
}

</mosaic_0001>

<llo_original>
// kernel: tpu_custom_call.1
$region0: #{tpu_custom_call.1}
  #allocation0 [shape = 'u32[]', space=smem, size = 0x4, offset = 0x4, fixed_abs, tag = 'smem constant byte address 0x4 - core index']
  #allocation1 [shape = 'u32[144,128]{1,0:T(1,128)}', space=vmem, size = 0x12000, scoped, tag = 'internal scratch']
  %s0 = inlined_call_operand.vmem [shape: bf16[2,16,32], index: 0, kind: input, shape index: {}]
  %s1 = inlined_call_operand.hbm [shape: bf16[2,16,32], index: 1, kind: input, shape index: {}]
  %s2 = inlined_call_operand.hbm [shape: bf16[2,16,32], index: 2, kind: input, shape index: {}]
  %s3 = inlined_call_operand.hbm [shape: bf16[32,32], index: 3, kind: input, shape index: {}]
  %s4 = inlined_call_operand.hbm [shape: f32[1,32], index: 4, kind: input, shape index: {}]
  %s5 = inlined_call_operand.vmem [shape: bf16[32,32], index: 5, kind: input, shape index: {}]
  %s6 = inlined_call_operand.hbm [shape: f32[1,32], index: 6, kind: input, shape index: {}]
  %s7 = inlined_call_operand.hbm [shape: bf16[32,32], index: 7, kind: input, shape index: {}]
  %s8 = inlined_call_operand.hbm [shape: f32[1,32], index: 8, kind: input, shape index: {}]
  %s9 = inlined_call_operand.vmem [shape: bf16[32,4], index: 9, kind: input, shape index: {}]
  %s10 = inlined_call_operand.vmem [shape: f32[1,4], index: 10, kind: input, shape index: {}]
  %s11 = inlined_call_operand.vmem [shape: bf16[32,32], index: 11, kind: input, shape index: {}]
  %s12 = inlined_call_operand.vmem [shape: f32[1,32], index: 12, kind: input, shape index: {}]
  %s13 = inlined_call_operand.hbm [shape: f32[2,16,32], index: 13, kind: output, shape index: {0}]
  %s14 = inlined_call_operand.hbm [shape: f32[2,4,16,16], index: 14, kind: output, shape index: {1}]
  %s15 = inlined_call_operand.hbm [shape: f32[2,4,16,16], index: 15, kind: output, shape index: {2}]
  %s16 = inlined_call_operand.hbm [shape: f32[2,4,16,16], index: 16, kind: output, shape index: {3}]
  %17 = xla_tuple %s13, %s14, %s15, %s16
  %s18 = sld [smem:[#allocation0]]
  $region137: #{tpu_custom_call.1} parent=0
    _
  %s20 = ssub.s32 1, %s18
  %s21 = scalar_select 0, %s20, %s18
  $region1: #{tpu_custom_call.1} parent=0
    #allocation2 [shape = 'u8[8192]{0}', space=vmem, size = 0x2000, scoped, tag = 'input window, operand 1']
    #allocation3 [shape = 's32[2]{0}', space=sflag, size = 0x8, scoped, tag = 'scoped memory for tpu_custom_call.1']
    #allocation4 [shape = 's32[2]{0}', space=sflag, size = 0x8, scoped, tag = 'scoped memory for tpu_custom_call.1']
    #allocation5 [shape = 'u8[8192]{0}', space=vmem, size = 0x2000, scoped, tag = 'input window, operand 2']
    #allocation6 [shape = 's32[2]{0}', space=sflag, size = 0x8, scoped, tag = 'scoped memory for tpu_custom_call.1']
    #allocation7 [shape = 'u8[8192]{0}', space=vmem, size = 0x2000, scoped, tag = 'input window, operand 3, single buffered']
    #allocation8 [shape = 'u8[512]{0}', space=vmem, size = 0x400, scoped, tag = 'input window, operand 4, single buffered']
    #allocation9 [shape = 's32[1]{0}', space=sflag, size = 0x4, scoped, tag = 'scoped memory for tpu_custom_call.1']
    #allocation10 [shape = 'u8[512]{0}', space=vmem, size = 0x400, scoped, tag = 'input window, operand 6, single buffered']
    #allocation11 [shape = 'u8[8192]{0}', space=vmem, size = 0x2000, scoped, tag = 'input window, operand 7, single buffered']
    #allocation12 [shape = 's32[1]{0}', space=sflag, size = 0x4, scoped, tag = 'scoped memory for tpu_custom_call.1']
    #allocation13 [shape = 'u8[512]{0}', space=vmem, size = 0x400, scoped, tag = 'input window, operand 8, single buffered']
    #allocation14 [shape = 'u8[16384]{0}', space=vmem, size = 0x4000, scoped, tag = 'output window, operand 0']
    #allocation15 [shape = 'u8[65536]{0}', space=vmem, size = 0x10000, scoped, tag = 'output window, operand 1']
    #allocation16 [shape = 's32[2]{0}', space=sflag, size = 0x8, scoped, tag = 'scoped memory for tpu_custom_call.1']
    #allocation17 [shape = 'u8[65536]{0}', space=vmem, size = 0x10000, scoped, tag = 'output window, operand 2']
    #allocation18 [shape = 'u8[65536]{0}', space=vmem, size = 0x10000, scoped, tag = 'output window, operand 3']
    #allocation19 [shape = 's32[2]{0}', space=sflag, size = 0x8, scoped, tag = 'scoped memory for tpu_custom_call.1']
    %22 = vsyncpa [#allocation3], 0
    %s23 = scalar_lea.sflag [#allocation3], 1
    %24 = vsyncpa %s23, 0
    %25 = vsyncpa [#allocation6], 0
    %s26 = scalar_lea.sflag [#allocation6], 1
    %27 = vsyncpa %s26, 0
    %28 = vsyncpa [#allocation9], 0
    %29 = vsyncpa [#allocation12], 0
    %30 = vsyncpa [#allocation4], 0
    %s31 = scalar_lea.sflag [#allocation4], 1
    %32 = vsyncpa %s31, 0
    %33 = vsyncpa [#allocation16], 0
    %s34 = scalar_lea.sflag [#allocation16], 1
    %35 = vsyncpa %s34, 0
    %36 = vsyncpa [#allocation19], 0
    %s37 = scalar_lea.sflag [#allocation19], 1
    %38 = vsyncpa %s37, 0
    loop: start=0, step=1, limit=4
    $region2: #{tpu_custom_call.1} parent=1 // loop_pre_header
      _
    $region3: #{tpu_custom_call.1} parent=1 // loop_header
      %s40 = sphi 0, %s44
      %p41 = scmp.ge.s32.totalorder %s40, 4
      %s50 = sphi 0, %s52
      %s53 = sphi 0, %s50
      %s54 = sphi 0, %s53
      %s70 = sphi 0, %s54
      %s76 = sphi 0, %s78
      %s79 = sphi 0, %s76
      %s80 = sphi 0, %s79
      %s96 = sphi 0, %s80
      %s102 = sphi 0, %s104
      %s105 = sphi 0, %s102
      %s106 = sphi 0, %s105
      %s122 = sphi 0, %s106
      %s126 = sphi 0, %s126
      %s128 = sphi 0, %s126
      %s129 = sphi 0, %s128
      %s143 = sphi 0, %s129
      %s147 = sphi 0, %s147
      %s149 = sphi 0, %s147
      %s150 = sphi 0, %s149
      %s164 = sphi 0, %s150
      %s168 = sphi 0, %s168
      %s170 = sphi 0, %s168
      %s171 = sphi 0, %s170
      %s185 = sphi 0, %s171
      %s189 = sphi 0, %s189
      %s191 = sphi 0, %s189
      %s192 = sphi 0, %s191
      %s206 = sphi 0, %s192
      %s210 = sphi 0, %s210
      %s212 = sphi 0, %s210
      %s213 = sphi 0, %s212
      %s227 = sphi 0, %s213
      %s231 = sphi 0, %s231
      %s233 = sphi 0, %s231
      %s234 = sphi 0, %s233
      %s248 = sphi 0, %s234
      %s252 = sphi 0, %s252
      %s254 = sphi 0, %s252
      %s255 = sphi 0, %s254
      %s269 = sphi 0, %s255
      %s273 = sphi 0, %s273
      %s275 = sphi 0, %s273
      %s276 = sphi 0, %s275
      %s290 = sphi 0, %s276
      %s294 = sphi 0, %s294
      %s296 = sphi 0, %s294
      %s297 = sphi 0, %s296
      %s311 = sphi 0, %s297
      %s315 = sphi 0, %s315
      %s317 = sphi 0, %s315
      %s318 = sphi 0, %s317
      %s332 = sphi 0, %s318
      %s338 = sphi 0, %s340
      %s341 = sphi 0, %s338
      %s342 = sphi 0, %s341
      %s358 = sphi 0, %s342
      %s364 = sphi 0, %s366
      %s367 = sphi 0, %s364
      %s368 = sphi 0, %s367
      %s384 = sphi 0, %s368
      %s390 = sphi 0, %s392
      %s393 = sphi 0, %s390
      %s394 = sphi 0, %s393
      %s410 = sphi 0, %s394
      %s416 = sphi 0, %s418
      %s419 = sphi 0, %s416
      %s420 = sphi 0, %s419
      %s436 = sphi 0, %s420
    $region4: #{tpu_custom_call.1} parent=1 // loop_header_branch
      %43 = sbr.rel (%p41) target = $region8
    $region5: #{tpu_custom_call.1} parent=1 // loop_body
      %s45 = ssub.s32 %s40, 1
      %s46 = ssub.s32 %s40, 2
      %s47 = sadd.s32 %s40, 1
      %s48 = ssub.s32 %s40, %s47
      %p49 = scmp.eq.s32.totalorder %s48, 0
      %s51 = sadd.s32 %s50, 1
      %s52 = scalar_select %p49, %s50, %s51
      %p55 = pneg %p49
      %p56 = scmp.eq.s32.totalorder %s40, 1
      %p57 = por %p55, %p56
      %p58 = scmp.ne.s32.totalorder %s50, %s53
      %p59 = scmp.eq.s32.totalorder %s40, 0
      %p60 = por %p58, %p59
      %p61 = scmp.ne.s32.totalorder %s50, %s53
      %p62 = scmp.eq.s32.totalorder %s45, 1
      %p63 = por %p61, %p62
      %p64 = scmp.ne.s32.totalorder %s53, %s54
      %p65 = scmp.eq.s32.totalorder %s45, 0
      %p66 = por %p64, %p65
      %p67 = scmp.ne.s32.totalorder %s53, %s54
      %p68 = scmp.eq.s32.totalorder %s46, 1
      %p69 = por %p67, %p68
      %p71 = scmp.ne.s32.totalorder %s54, %s70
      %p72 = scmp.eq.s32.totalorder %s46, 0
      %p73 = por %p71, %p72
      %s74 = ssub.s32 %s40, %s47
      %p75 = scmp.eq.s32.totalorder %s74, 0
      %s77 = sadd.s32 %s76, 1
      %s78 = scalar_select %p75, %s76, %s77
      %p81 = pneg %p75
      %p82 = scmp.eq.s32.totalorder %s40, 1
      %p83 = por %p81, %p82
      %p84 = scmp.ne.s32.totalorder %s76, %s79
      %p85 = scmp.eq.s32.totalorder %s40, 0
      %p86 = por %p84, %p85
      %p87 = scmp.ne.s32.totalorder %s76, %s79
      %p88 = scmp.eq.s32.totalorder %s45, 1
      %p89 = por %p87, %p88
      %p90 = scmp.ne.s32.totalorder %s79, %s80
      %p91 = scmp.eq.s32.totalorder %s45, 0
      %p92 = por %p90, %p91
      %p93 = scmp.ne.s32.totalorder %s79, %s80
      %p94 = scmp.eq.s32.totalorder %s46, 1
      %p95 = por %p93, %p94
      %p97 = scmp.ne.s32.totalorder %s80, %s96
      %p98 = scmp.eq.s32.totalorder %s46, 0
      %p99 = por %p97, %p98
      %s100 = ssub.s32 %s40, %s47
      %p101 = scmp.eq.s32.totalorder %s100, 0
      %s103 = sadd.s32 %s102, 1
      %s104 = scalar_select %p101, %s102, %s103
      %p107 = pneg %p101
      %p108 = scmp.eq.s32.totalorder %s40, 1
      %p109 = por %p107, %p108
      %p110 = scmp.ne.s32.totalorder %s102, %s105
      %p111 = scmp.eq.s32.totalorder %s40, 0
      %p112 = por %p110, %p111
      %p113 = scmp.ne.s32.totalorder %s102, %s105
      %p114 = scmp.eq.s32.totalorder %s45, 1
      %p115 = por %p113, %p114
      %p116 = scmp.ne.s32.totalorder %s105, %s106
      %p117 = scmp.eq.s32.totalorder %s45, 0
      %p118 = por %p116, %p117
      %p119 = scmp.ne.s32.totalorder %s105, %s106
      %p120 = scmp.eq.s32.totalorder %s46, 1
      %p121 = por %p119, %p120
      %p123 = scmp.ne.s32.totalorder %s106, %s122
      %p124 = scmp.eq.s32.totalorder %s46, 0
      %p125 = por %p123, %p124
      %s127 = sadd.s32 %s126, 1
      %p130 = scmp.eq.s32.totalorder %s40, 1
      %p131 = scmp.ne.s32.totalorder %s126, %s128
      %p132 = scmp.eq.s32.totalorder %s40, 0
      %p133 = por %p131, %p132
      %p134 = scmp.ne.s32.totalorder %s126, %s128
      %p135 = scmp.eq.s32.totalorder %s45, 1
      %p136 = por %p134, %p135
      %p137 = scmp.ne.s32.totalorder %s128, %s129
      %p138 = scmp.eq.s32.totalorder %s45, 0
      %p139 = por %p137, %p138
      %p140 = scmp.ne.s32.totalorder %s128, %s129
      %p141 = scmp.eq.s32.totalorder %s46, 1
      %p142 = por %p140, %p141
      %p144 = scmp.ne.s32.totalorder %s129, %s143
      %p145 = scmp.eq.s32.totalorder %s46, 0
      %p146 = por %p144, %p145
      %s148 = sadd.s32 %s147, 1
      %p151 = scmp.eq.s32.totalorder %s40, 1
      %p152 = scmp.ne.s32.totalorder %s147, %s149
      %p153 = scmp.eq.s32.totalorder %s40, 0
      %p154 = por %p152, %p153
      %p155 = scmp.ne.s32.totalorder %s147, %s149
      %p156 = scmp.eq.s32.totalorder %s45, 1
      %p157 = por %p155, %p156
      %p158 = scmp.ne.s32.totalorder %s149, %s150
      %p159 = scmp.eq.s32.totalorder %s45, 0
      %p160 = por %p158, %p159
      %p161 = scmp.ne.s32.totalorder %s149, %s150
      %p162 = scmp.eq.s32.totalorder %s46, 1
      %p163 = por %p161, %p162
      %p165 = scmp.ne.s32.totalorder %s150, %s164
      %p166 = scmp.eq.s32.totalorder %s46, 0
      %p167 = por %p165, %p166
      %s169 = sadd.s32 %s168, 1
      %p172 = scmp.eq.s32.totalorder %s40, 1
      %p173 = scmp.ne.s32.totalorder %s168, %s170
      %p174 = scmp.eq.s32.totalorder %s40, 0
      %p175 = por %p173, %p174
      %p176 = scmp.ne.s32.totalorder %s168, %s170
      %p177 = scmp.eq.s32.totalorder %s45, 1
      %p178 = por %p176, %p177
      %p179 = scmp.ne.s32.totalorder %s170, %s171
      %p180 = scmp.eq.s32.totalorder %s45, 0
      %p181 = por %p179, %p180
      %p182 = scmp.ne.s32.totalorder %s170, %s171
      %p183 = scmp.eq.s32.totalorder %s46, 1
      %p184 = por %p182, %p183
      %p186 = scmp.ne.s32.totalorder %s171, %s185
      %p187 = scmp.eq.s32.totalorder %s46, 0
      %p188 = por %p186, %p187
      %s190 = sadd.s32 %s189, 1
      %p193 = scmp.eq.s32.totalorder %s40, 1
      %p194 = scmp.ne.s32.totalorder %s189, %s191
      %p195 = scmp.eq.s32.totalorder %s40, 0
      %p196 = por %p194, %p195
      %p197 = scmp.ne.s32.totalorder %s189, %s191
      %p198 = scmp.eq.s32.totalorder %s45, 1
      %p199 = por %p197, %p198
      %p200 = scmp.ne.s32.totalorder %s191, %s192
      %p201 = scmp.eq.s32.totalorder %s45, 0
      %p202 = por %p200, %p201
      %p203 = scmp.ne.s32.totalorder %s191, %s192
      %p204 = scmp.eq.s32.totalorder %s46, 1
      %p205 = por %p203, %p204
      %p207 = scmp.ne.s32.totalorder %s192, %s206
      %p208 = scmp.eq.s32.totalorder %s46, 0
      %p209 = por %p207, %p208
      %s211 = sadd.s32 %s210, 1
      %p214 = scmp.eq.s32.totalorder %s40, 1
      %p215 = scmp.ne.s32.totalorder %s210, %s212
      %p216 = scmp.eq.s32.totalorder %s40, 0
      %p217 = por %p215, %p216
      %p218 = scmp.ne.s32.totalorder %s210, %s212
      %p219 = scmp.eq.s32.totalorder %s45, 1
      %p220 = por %p218, %p219
      %p221 = scmp.ne.s32.totalorder %s212, %s213
      %p222 = scmp.eq.s32.totalorder %s45, 0
      %p223 = por %p221, %p222
      %p224 = scmp.ne.s32.totalorder %s212, %s213
      %p225 = scmp.eq.s32.totalorder %s46, 1
      %p226 = por %p224, %p225
      %p228 = scmp.ne.s32.totalorder %s213, %s227
      %p229 = scmp.eq.s32.totalorder %s46, 0
      %p230 = por %p228, %p229
      %s232 = sadd.s32 %s231, 1
      %p235 = scmp.eq.s32.totalorder %s40, 1
      %p236 = scmp.ne.s32.totalorder %s231, %s233
      %p237 = scmp.eq.s32.totalorder %s40, 0
      %p238 = por %p236, %p237
      %p239 = scmp.ne.s32.totalorder %s231, %s233
      %p240 = scmp.eq.s32.totalorder %s45, 1
      %p241 = por %p239, %p240
      %p242 = scmp.ne.s32.totalorder %s233, %s234
      %p243 = scmp.eq.s32.totalorder %s45, 0
      %p244 = por %p242, %p243
      %p245 = scmp.ne.s32.totalorder %s233, %s234
      %p246 = scmp.eq.s32.totalorder %s46, 1
      %p247 = por %p245, %p246
      %p249 = scmp.ne.s32.totalorder %s234, %s248
      %p250 = scmp.eq.s32.totalorder %s46, 0
      %p251 = por %p249, %p250
      %s253 = sadd.s32 %s252, 1
      %p256 = scmp.eq.s32.totalorder %s40, 1
      %p257 = scmp.ne.s32.totalorder %s252, %s254
      %p258 = scmp.eq.s32.totalorder %s40, 0
      %p259 = por %p257, %p258
      %p260 = scmp.ne.s32.totalorder %s252, %s254
      %p261 = scmp.eq.s32.totalorder %s45, 1
      %p262 = por %p260, %p261
      %p263 = scmp.ne.s32.totalorder %s254, %s255
      %p264 = scmp.eq.s32.totalorder %s45, 0
      %p265 = por %p263, %p264
      %p266 = scmp.ne.s32.totalorder %s254, %s255
      %p267 = scmp.eq.s32.totalorder %s46, 1
      %p268 = por %p266, %p267
      %p270 = scmp.ne.s32.totalorder %s255, %s269
      %p271 = scmp.eq.s32.totalorder %s46, 0
      %p272 = por %p270, %p271
      %s274 = sadd.s32 %s273, 1
      %p277 = scmp.eq.s32.totalorder %s40, 1
      %p278 = scmp.ne.s32.totalorder %s273, %s275
      %p279 = scmp.eq.s32.totalorder %s40, 0
      %p280 = por %p278, %p279
      %p281 = scmp.ne.s32.totalorder %s273, %s275
      %p282 = scmp.eq.s32.totalorder %s45, 1
      %p283 = por %p281, %p282
      %p284 = scmp.ne.s32.totalorder %s275, %s276
      %p285 = scmp.eq.s32.totalorder %s45, 0
      %p286 = por %p284, %p285
      %p287 = scmp.ne.s32.totalorder %s275, %s276
      %p288 = scmp.eq.s32.totalorder %s46, 1
      %p289 = por %p287, %p288
      %p291 = scmp.ne.s32.totalorder %s276, %s290
      %p292 = scmp.eq.s32.totalorder %s46, 0
      %p293 = por %p291, %p292
      %s295 = sadd.s32 %s294, 1
      %p298 = scmp.eq.s32.totalorder %s40, 1
      %p299 = scmp.ne.s32.totalorder %s294, %s296
      %p300 = scmp.eq.s32.totalorder %s40, 0
      %p301 = por %p299, %p300
      %p302 = scmp.ne.s32.totalorder %s294, %s296
      %p303 = scmp.eq.s32.totalorder %s45, 1
      %p304 = por %p302, %p303
      %p305 = scmp.ne.s32.totalorder %s296, %s297
      %p306 = scmp.eq.s32.totalorder %s45, 0
      %p307 = por %p305, %p306
      %p308 = scmp.ne.s32.totalorder %s296, %s297
      %p309 = scmp.eq.s32.totalorder %s46, 1
      %p310 = por %p308, %p309
      %p312 = scmp.ne.s32.totalorder %s297, %s311
      %p313 = scmp.eq.s32.totalorder %s46, 0
      %p314 = por %p312, %p313
      %s316 = sadd.s32 %s315, 1
      %p319 = scmp.eq.s32.totalorder %s40, 1
      %p320 = scmp.ne.s32.totalorder %s315, %s317
      %p321 = scmp.eq.s32.totalorder %s40, 0
      %p322 = por %p320, %p321
      %p323 = scmp.ne.s32.totalorder %s315, %s317
      %p324 = scmp.eq.s32.totalorder %s45, 1
      %p325 = por %p323, %p324
      %p326 = scmp.ne.s32.totalorder %s317, %s318
      %p327 = scmp.eq.s32.totalorder %s45, 0
      %p328 = por %p326, %p327
      %p329 = scmp.ne.s32.totalorder %s317, %s318
      %p330 = scmp.eq.s32.totalorder %s46, 1
      %p331 = por %p329, %p330
      %p333 = scmp.ne.s32.totalorder %s318, %s332
      %p334 = scmp.eq.s32.totalorder %s46, 0
      %p335 = por %p333, %p334
      %s336 = ssub.s32 %s40, %s47
      %p337 = scmp.eq.s32.totalorder %s336, 0
      %s339 = sadd.s32 %s338, 1
      %s340 = scalar_select %p337, %s338, %s339
      %p343 = pneg %p337
      %p344 = scmp.eq.s32.totalorder %s40, 1
      %p345 = por %p343, %p344
      %p346 = scmp.ne.s32.totalorder %s338, %s341
      %p347 = scmp.eq.s32.totalorder %s40, 0
      %p348 = por %p346, %p347
      %p349 = scmp.ne.s32.totalorder %s338, %s341
      %p350 = scmp.eq.s32.totalorder %s45, 1
      %p351 = por %p349, %p350
      %p352 = scmp.ne.s32.totalorder %s341, %s342
      %p353 = scmp.eq.s32.totalorder %s45, 0
      %p354 = por %p352, %p353
      %p355 = scmp.ne.s32.totalorder %s341, %s342
      %p356 = scmp.eq.s32.totalorder %s46, 1
      %p357 = por %p355, %p356
      %p359 = scmp.ne.s32.totalorder %s342, %s358
      %p360 = scmp.eq.s32.totalorder %s46, 0
      %p361 = por %p359, %p360
      %s362 = ssub.s32 %s40, %s47
      %p363 = scmp.eq.s32.totalorder %s362, 0
      %s365 = sadd.s32 %s364, 1
      %s366 = scalar_select %p363, %s364, %s365
      %p369 = pneg %p363
      %p370 = scmp.eq.s32.totalorder %s40, 1
      %p371 = por %p369, %p370
      %p372 = scmp.ne.s32.totalorder %s364, %s367
      %p373 = scmp.eq.s32.totalorder %s40, 0
      %p374 = por %p372, %p373
      %p375 = scmp.ne.s32.totalorder %s364, %s367
      %p376 = scmp.eq.s32.totalorder %s45, 1
      %p377 = por %p375, %p376
      %p378 = scmp.ne.s32.totalorder %s367, %s368
      %p379 = scmp.eq.s32.totalorder %s45, 0
      %p380 = por %p378, %p379
      %p381 = scmp.ne.s32.totalorder %s367, %s368
      %p382 = scmp.eq.s32.totalorder %s46, 1
      %p383 = por %p381, %p382
      %p385 = scmp.ne.s32.totalorder %s368, %s384
      %p386 = scmp.eq.s32.totalorder %s46, 0
      %p387 = por %p385, %p386
      %s388 = ssub.s32 %s40, %s47
      %p389 = scmp.eq.s32.totalorder %s388, 0
      %s391 = sadd.s32 %s390, 1
      %s392 = scalar_select %p389, %s390, %s391
      %p395 = pneg %p389
      %p396 = scmp.eq.s32.totalorder %s40, 1
      %p397 = por %p395, %p396
      %p398 = scmp.ne.s32.totalorder %s390, %s393
      %p399 = scmp.eq.s32.totalorder %s40, 0
      %p400 = por %p398, %p399
      %p401 = scmp.ne.s32.totalorder %s390, %s393
      %p402 = scmp.eq.s32.totalorder %s45, 1
      %p403 = por %p401, %p402
      %p404 = scmp.ne.s32.totalorder %s393, %s394
      %p405 = scmp.eq.s32.totalorder %s45, 0
      %p406 = por %p404, %p405
      %p407 = scmp.ne.s32.totalorder %s393, %s394
      %p408 = scmp.eq.s32.totalorder %s46, 1
      %p409 = por %p407, %p408
      %p411 = scmp.ne.s32.totalorder %s394, %s410
      %p412 = scmp.eq.s32.totalorder %s46, 0
      %p413 = por %p411, %p412
      %s414 = ssub.s32 %s40, %s47
      %p415 = scmp.eq.s32.totalorder %s414, 0
      %s417 = sadd.s32 %s416, 1
      %s418 = scalar_select %p415, %s416, %s417
      %p421 = pneg %p415
      %p422 = scmp.eq.s32.totalorder %s40, 1
      %p423 = por %p421, %p422
      %p424 = scmp.ne.s32.totalorder %s416, %s419
      %p425 = scmp.eq.s32.totalorder %s40, 0
      %p426 = por %p424, %p425
      %p427 = scmp.ne.s32.totalorder %s416, %s419
      %p428 = scmp.eq.s32.totalorder %s45, 1
      %p429 = por %p427, %p428
      %p430 = scmp.ne.s32.totalorder %s419, %s420
      %p431 = scmp.eq.s32.totalorder %s45, 0
      %p432 = por %p430, %p431
      %p433 = scmp.ne.s32.totalorder %s419, %s420
      %p434 = scmp.eq.s32.totalorder %s46, 1
      %p435 = por %p433, %p434
      %p437 = scmp.ne.s32.totalorder %s420, %s436
      %p438 = scmp.eq.s32.totalorder %s46, 0
      %p439 = por %p437, %p438
      %p440 = scmp.le.s32.totalorder 1, %s40
      %p441 = scmp.lt.s32.totalorder %s40, 3
      %p442 = pnand %p440, %p441
      %p443 = pneg %p442
      // Predicated region
      $region9: #{tpu_custom_call.1} parent=5 // pred_check
        _
      $region10: #{tpu_custom_call.1} parent=5 // pred_check_branch
        %445 = sbr.rel (%p442) target = $region12
      $region11: #{tpu_custom_call.1} parent=5 // pred_region
        %s446 = ssub.s32 %s40, 1
        // Predicated region
        $region13: #{tpu_custom_call.1} parent=11 // pred_check
          %p447 = pneg %p139
        $region14: #{tpu_custom_call.1} parent=11 // pred_check_branch
          %449 = sbr.rel (%p447) target = $region16
        $region15: #{tpu_custom_call.1} parent=11 // pred_region
          %s451 = ssub.s32 256, 256
          %452 = vsyncadd [#allocation6], %s451
          %s453 = sshll.u32 [#allocation7], 4
          %s454 = int_to_ptr.vmem [resolvable:$true] %s453
          %459 = dma.hbm_to_vmem [thread:$0]  %s3, 256, %s454, [#allocation6], 64, 64, 4
        $region16: #{tpu_custom_call.1} parent=11 // pred_fallthru
          _
        // Predicated region
        $region17: #{tpu_custom_call.1} parent=11 // pred_check
          %p460 = pneg %p160
        $region18: #{tpu_custom_call.1} parent=11 // pred_check_branch
          %462 = sbr.rel (%p460) target = $region20
        $region19: #{tpu_custom_call.1} parent=11 // pred_region
          %s464 = ssub.s32 16, 16
          %465 = vsyncadd [#allocation9], %s464
          %s467 = sshll.u32 [#allocation8], 4
          %s468 = int_to_ptr.vmem [resolvable:$true] %s467
          %470 = dma.hbm_to_vmem [thread:$0]  %s4, 16, %s468, [#allocation9]
        $region20: #{tpu_custom_call.1} parent=11 // pred_fallthru
          _
        // Predicated region
        $region21: #{tpu_custom_call.1} parent=11 // pred_check
          %p471 = pneg %p181
        $region22: #{tpu_custom_call.1} parent=11 // pred_check_branch
          %473 = sbr.rel (%p471) target = $region24
        $region23: #{tpu_custom_call.1} parent=11 // pred_region
          _
        $region24: #{tpu_custom_call.1} parent=11 // pred_fallthru
          _
        // Predicated region
        $region25: #{tpu_custom_call.1} parent=11 // pred_check
          %p474 = pneg %p202
        $region26: #{tpu_custom_call.1} parent=11 // pred_check_branch
          %476 = sbr.rel (%p474) target = $region28
        $region27: #{tpu_custom_call.1} parent=11 // pred_region
          %s478 = ssub.s32 16, 16
          %479 = vsyncadd [#allocation9], %s478
          %s481 = sshll.u32 [#allocation10], 4
          %s482 = int_to_ptr.vmem [resolvable:$true] %s481
          %484 = dma.hbm_to_vmem [thread:$0]  %s6, 16, %s482, [#allocation9]
        $region28: #{tpu_custom_call.1} parent=11 // pred_fallthru
          _
        // Predicated region
        $region29: #{tpu_custom_call.1} parent=11 // pred_check
          %p485 = pneg %p223
        $region30: #{tpu_custom_call.1} parent=11 // pred_check_branch
          %487 = sbr.rel (%p485) target = $region32
        $region31: #{tpu_custom_call.1} parent=11 // pred_region
          %s489 = ssub.s32 256, 256
          %490 = vsyncadd [#allocation12], %s489
          %s491 = sshll.u32 [#allocation11], 4
          %s492 = int_to_ptr.vmem [resolvable:$true] %s491
          %497 = dma.hbm_to_vmem [thread:$0]  %s7, 256, %s492, [#allocation12], 64, 64, 4
        $region32: #{tpu_custom_call.1} parent=11 // pred_fallthru
          _
        // Predicated region
        $region33: #{tpu_custom_call.1} parent=11 // pred_check
          %p498 = pneg %p244
        $region34: #{tpu_custom_call.1} parent=11 // pred_check_branch
          %500 = sbr.rel (%p498) target = $region36
        $region35: #{tpu_custom_call.1} parent=11 // pred_region
          %s502 = ssub.s32 16, 16
          %503 = vsyncadd [#allocation12], %s502
          %s505 = sshll.u32 [#allocation13], 4
          %s506 = int_to_ptr.vmem [resolvable:$true] %s505
          %508 = dma.hbm_to_vmem [thread:$0]  %s8, 16, %s506, [#allocation12]
        $region36: #{tpu_custom_call.1} parent=11 // pred_fallthru
          _
        // Predicated region
        $region37: #{tpu_custom_call.1} parent=11 // pred_check
          %p509 = pneg %p265
        $region38: #{tpu_custom_call.1} parent=11 // pred_check_branch
          %511 = sbr.rel (%p509) target = $region40
        $region39: #{tpu_custom_call.1} parent=11 // pred_region
          _
        $region40: #{tpu_custom_call.1} parent=11 // pred_fallthru
          _
        // Predicated region
        $region41: #{tpu_custom_call.1} parent=11 // pred_check
          %p512 = pneg %p286
        $region42: #{tpu_custom_call.1} parent=11 // pred_check_branch
          %514 = sbr.rel (%p512) target = $region44
        $region43: #{tpu_custom_call.1} parent=11 // pred_region
          _
        $region44: #{tpu_custom_call.1} parent=11 // pred_fallthru
          _
        // Predicated region
        $region45: #{tpu_custom_call.1} parent=11 // pred_check
          %p515 = pneg %p307
        $region46: #{tpu_custom_call.1} parent=11 // pred_check_branch
          %517 = sbr.rel (%p515) target = $region48
        $region47: #{tpu_custom_call.1} parent=11 // pred_region
          _
        $region48: #{tpu_custom_call.1} parent=11 // pred_fallthru
          _
        // Predicated region
        $region49: #{tpu_custom_call.1} parent=11 // pred_check
          %p518 = pneg %p328
        $region50: #{tpu_custom_call.1} parent=11 // pred_check_branch
          %520 = sbr.rel (%p518) target = $region52
        $region51: #{tpu_custom_call.1} parent=11 // pred_region
          _
        $region52: #{tpu_custom_call.1} parent=11 // pred_fallthru
          _
      $region12: #{tpu_custom_call.1} parent=5 // pred_fallthru
        _
      %p521 = scmp.lt.s32.totalorder %s40, 2
      // Predicated region
      $region53: #{tpu_custom_call.1} parent=5 // pred_check
        %p522 = pneg %p521
      $region54: #{tpu_custom_call.1} parent=5 // pred_check_branch
        %524 = sbr.rel (%p522) target = $region56
      $region55: #{tpu_custom_call.1} parent=5 // pred_region
        // Predicated region
        $region57: #{tpu_custom_call.1} parent=55 // pred_check
          %p525 = pneg %p60
        $region58: #{tpu_custom_call.1} parent=55 // pred_check_branch
          %527 = sbr.rel (%p525) target = $region60
        $region59: #{tpu_custom_call.1} parent=55 // pred_region
          %p528 = scmp.lt.s32.totalorder %s40, 1
          %s529 = scalar_select %p528, %s40, 1
          %s530 = smul.addr %s529, 2
          %s531 = smul.addr %s530, 4
          %s532 = scalar_lea.vmem %s0, %s531
        $region60: #{tpu_custom_call.1} parent=55 // pred_fallthru
          _
        // Predicated region
        $region61: #{tpu_custom_call.1} parent=55 // pred_check
          %p533 = pneg %p86
        $region62: #{tpu_custom_call.1} parent=55 // pred_check_branch
          %535 = sbr.rel (%p533) target = $region64
        $region63: #{tpu_custom_call.1} parent=55 // pred_region
          %s536 = sand.u32 %s76, 1
          %s537 = scalar_lea.sflag [#allocation3], %s536
          %s538 = sand.u32 %s76, 1
          %s539 = smul.addr %s538, 8
          %s540 = scalar_lea.vmem [#allocation2], %s539
          %s542 = ssub.s32 128, 128
          %543 = vsyncadd %s537, %s542
          %s544 = smul.addr %s40, 2
          %s545 = smul.addr %s544, 64
          %s546 = scalar_lea.hbm %s1, %s545
          %s547 = sshll.u32 %s540, 4
          %s548 = int_to_ptr.vmem [resolvable:$true] %s547
          %553 = dma.hbm_to_vmem [thread:$0]  %s546, 128, %s548, %s537, 64, 64, 4
        $region64: #{tpu_custom_call.1} parent=55 // pred_fallthru
          _
        // Predicated region
        $region65: #{tpu_custom_call.1} parent=55 // pred_check
          %p554 = pneg %p112
        $region66: #{tpu_custom_call.1} parent=55 // pred_check_branch
          %556 = sbr.rel (%p554) target = $region68
        $region67: #{tpu_custom_call.1} parent=55 // pred_region
          %s557 = sand.u32 %s40, 1
          %s558 = scalar_lea.sflag [#allocation6], %s557
          %s559 = sand.u32 %s102, 1
          %s560 = smul.addr %s559, 8
          %s561 = scalar_lea.vmem [#allocation5], %s560
          %s563 = ssub.s32 128, 128
          %564 = vsyncadd %s558, %s563
          %s565 = smul.addr %s40, 2
          %s566 = smul.addr %s565, 64
          %s567 = scalar_lea.hbm %s2, %s566
          %s568 = sshll.u32 %s561, 4
          %s569 = int_to_ptr.vmem [resolvable:$true] %s568
          %574 = dma.hbm_to_vmem [thread:$0]  %s567, 128, %s569, %s558, 64, 64, 4
        $region68: #{tpu_custom_call.1} parent=55 // pred_fallthru
          _
      $region56: #{tpu_custom_call.1} parent=5 // pred_fallthru
        _
      %p575 = scmp.le.s32.totalorder 1, %s40
      %p576 = scmp.lt.s32.totalorder %s40, 3
      %p577 = pnand %p575, %p576
      %p578 = pneg %p577
      // Predicated region
      $region69: #{tpu_custom_call.1} parent=5 // pred_check
        _
      $region70: #{tpu_custom_call.1} parent=5 // pred_check_branch
        %580 = sbr.rel (%p577) target = $region72
      $region71: #{tpu_custom_call.1} parent=5 // pred_region
        %s581 = ssub.s32 %s40, 1
        %s582 = sand.u32 %s79, 1
        %s583 = scalar_lea.sflag [#allocation3], %s582
        %s584 = sand.u32 %s79, 1
        %s585 = smul.addr %s584, 8
        %s586 = scalar_lea.vmem [#allocation2], %s585
        // Predicated region
        $region73: #{tpu_custom_call.1} parent=71 // pred_check
          %p587 = pneg %p92
        $region74: #{tpu_custom_call.1} parent=71 // pred_check_branch
          %589 = sbr.rel (%p587) target = $region76
        $region75: #{tpu_custom_call.1} parent=71 // pred_region
          %590 = dma.done %s583, 128
        $region76: #{tpu_custom_call.1} parent=71 // pred_fallthru
          _
        %s591 = sand.u32 %s45, 1
        %s592 = scalar_lea.sflag [#allocation6], %s591
        %s593 = sand.u32 %s105, 1
        %s594 = smul.addr %s593, 8
        %s595 = scalar_lea.vmem [#allocation5], %s594
        // Predicated region
        $region77: #{tpu_custom_call.1} parent=71 // pred_check
          %p596 = pneg %p118
        $region78: #{tpu_custom_call.1} parent=71 // pred_check_branch
          %598 = sbr.rel (%p596) target = $region80
        $region79: #{tpu_custom_call.1} parent=71 // pred_region
          %599 = dma.done %s592, 128
        $region80: #{tpu_custom_call.1} parent=71 // pred_fallthru
          _
        // Predicated region
        $region81: #{tpu_custom_call.1} parent=71 // pred_check
          %p600 = pneg %p139
        $region82: #{tpu_custom_call.1} parent=71 // pred_check_branch
          %602 = sbr.rel (%p600) target = $region84
        $region83: #{tpu_custom_call.1} parent=71 // pred_region
          %603 = dma.done [#allocation6], 256
        $region84: #{tpu_custom_call.1} parent=71 // pred_fallthru
          _
        // Predicated region
        $region85: #{tpu_custom_call.1} parent=71 // pred_check
          %p604 = pneg %p160
        $region86: #{tpu_custom_call.1} parent=71 // pred_check_branch
          %606 = sbr.rel (%p604) target = $region88
        $region87: #{tpu_custom_call.1} parent=71 // pred_region
          %607 = dma.done [#allocation9], 16
        $region88: #{tpu_custom_call.1} parent=71 // pred_fallthru
          _
        // Predicated region
        $region89: #{tpu_custom_call.1} parent=71 // pred_check
          %p608 = pneg %p202
        $region90: #{tpu_custom_call.1} parent=71 // pred_check_branch
          %610 = sbr.rel (%p608) target = $region92
        $region91: #{tpu_custom_call.1} parent=71 // pred_region
          %611 = dma.done [#allocation9], 16
        $region92: #{tpu_custom_call.1} parent=71 // pred_fallthru
          _
        // Predicated region
        $region93: #{tpu_custom_call.1} parent=71 // pred_check
          %p612 = pneg %p223
        $region94: #{tpu_custom_call.1} parent=71 // pred_check_branch
          %614 = sbr.rel (%p612) target = $region96
        $region95: #{tpu_custom_call.1} parent=71 // pred_region
          %615 = dma.done [#allocation12], 256
        $region96: #{tpu_custom_call.1} parent=71 // pred_fallthru
          _
        // Predicated region
        $region97: #{tpu_custom_call.1} parent=71 // pred_check
          %p616 = pneg %p244
        $region98: #{tpu_custom_call.1} parent=71 // pred_check_branch
          %618 = sbr.rel (%p616) target = $region100
        $region99: #{tpu_custom_call.1} parent=71 // pred_region
          %619 = dma.done [#allocation12], 16
        $region100: #{tpu_custom_call.1} parent=71 // pred_fallthru
          _
        %p620 = scmp.lt.s32.totalorder %s45, 1
        %s621 = scalar_select %p620, %s45, 1
        %s622 = smul.addr %s621, 2
        %s623 = smul.addr %s622, 4
        %s624 = scalar_lea.vmem %s0, %s623
        %p625 = pneg %p66
        %p626 = pneg %p63
        %s627 = sand.u32 %s79, 1
        %s628 = scalar_lea.sflag [#allocation3], %s627
        %s629 = sand.u32 %s79, 1
        %s630 = smul.addr %s629, 8
        %s631 = scalar_lea.vmem [#allocation2], %s630
        %p632 = pneg %p92
        %p633 = pneg %p89
        %s634 = sand.u32 %s45, 1
        %s635 = scalar_lea.sflag [#allocation6], %s634
        %s636 = sand.u32 %s105, 1
        %s637 = smul.addr %s636, 8
        %s638 = scalar_lea.vmem [#allocation5], %s637
        %p639 = pneg %p118
        %p640 = pneg %p115
        %p641 = pneg %p139
        %p642 = pneg %p136
        %p643 = pneg %p160
        %p644 = pneg %p157
        %p645 = pneg %p181
        %p646 = pneg %p178
        %p647 = pneg %p202
        %p648 = pneg %p199
        %p649 = pneg %p223
        %p650 = pneg %p220
        %p651 = pneg %p244
        %p652 = pneg %p241
        %p653 = pneg %p265
        %p654 = pneg %p262
        %p655 = pneg %p286
        %p656 = pneg %p283
        %p657 = pneg %p307
        %p658 = pneg %p304
        %p659 = pneg %p328
        %p660 = pneg %p325
        %p661 = pneg %p354
        %p662 = pneg %p351
        %s663 = sand.u32 %s341, 1
        %s664 = scalar_lea.sflag [#allocation4], %s663
        %s665 = sand.u32 %s341, 1
        %s666 = smul.addr %s665, 16
        %s667 = scalar_lea.vmem [#allocation14], %s666
        %p668 = pneg %p380
        %p669 = pneg %p377
        %s670 = sand.u32 %s45, 1
        %s671 = scalar_lea.sflag [#allocation16], %s670
        %s672 = sand.u32 %s367, 1
        %s673 = smul.addr %s672, 64
        %s674 = scalar_lea.vmem [#allocation15], %s673
        %p675 = pneg %p406
        %p676 = pneg %p403
        %s677 = sand.u32 %s45, 1
        %s678 = scalar_lea.sflag [#allocation16], %s677
        %s679 = sand.u32 %s393, 1
        %s680 = smul.addr %s679, 64
        %s681 = scalar_lea.vmem [#allocation17], %s680
        %p682 = pneg %p432
        %p683 = pneg %p429
        %s684 = sand.u32 %s419, 1
        %s685 = scalar_lea.sflag [#allocation19], %s684
        %s686 = sand.u32 %s419, 1
        %s687 = smul.addr %s686, 64
        %s688 = scalar_lea.vmem [#allocation18], %s687
        %p689 = scmp.lt.s32.totalorder %s45, 1
        %s690 = scalar_select %p689, %s45, 1
        %s691 = smul.addr %s690, 2
        %s692 = smul.addr %s691, 4
        %s693 = scalar_lea.vmem %s0, %s692
        %v695 = vld [vmem:[%s693] sm:$0xf]
        %v696 = vld [vmem:[%s693 + $0x4] sm:$0xf]
        %v697 = vld [vmem:[%s586] sm:$0xf]
        %v698 = vld [vmem:[%s586 + $0x4] sm:$0xf]
        %v699 = vld [vmem:[%s595] sm:$0xf]
        %v700 = vld [vmem:[%s595 + $0x4] sm:$0xf]
        %v701 = vld [vmem:[#allocation7] sm:$0xf]
        %v702 = vld [vmem:[#allocation7 + $0x4] sm:$0xf]
        %v703 = vld [vmem:[#allocation7 + $0x8] sm:$0xf]
        %v704 = vld [vmem:[#allocation7 + $0xc] sm:$0xf]
        %v705 = vld [vmem:[#allocation8] sm:$0x1]
        %v707 = vlaneseq
        %v708 = vshrl.u32 %v707, 7
        %v709 = vsub.s32 0, %v708
        %v710 = vrot.slane %v705, %v709
        %v714 = vunpack.c.l.b16 %v695
        %v715 = vunpack.c.l.b16 %v696
        %v716 = vpack.c.b16 %v715, %v714
        %v721 = vunpack.c.l.b16 %v701
        %v722 = vunpack.c.l.b16 %v702
        %v723 = vunpack.c.l.b16 %v703
        %v724 = vunpack.c.l.b16 %v704
        %v725 = vpack.c.b16 %v722, %v721
        %v726 = vpack.c.b16 %v724, %v723
        %vm729 = vcmask 261120
        %v731 = vsel %vm729, %v716, 0
        %733 = vmatprep.subr.bf16.mxu0 0
        %734 = vmatpush1.bf16.msra.mxu0 %v725
        %735 = vmatprep.subr.bf16.mxu0 0
        %736 = vmatpush1.bf16.msra.mxu0 %v726
        %737 = vmatprep.subr.bf16.mxu0 0
        %738 = vmatpush1.bf16.msra.mxu0 0
        %739 = vmatprep.subr.bf16.mxu0 0
        %740 = vmatpush1.bf16.msra.mxu0 0
        %741 = vmatprep.subr.bf16.mxu0 0
        %742 = vmatpush1.bf16.msra.mxu0 0
        %743 = vmatprep.subr.bf16.mxu0 0
        %744 = vmatpush1.bf16.msra.mxu0 0
        %745 = vmatprep.subr.bf16.mxu0 0
        %746 = vmatpush1.bf16.msra.mxu0 0
        %747 = vmatprep.subr.bf16.mxu0 0
        %748 = vmatpush1.bf16.msra.mxu0 0
        %749 = vmatprep.subr.bf16.mxu0 0
        %750 = vmatpush1.bf16.msra.mxu0 0
        %751 = vmatprep.subr.bf16.mxu0 0
        %752 = vmatpush1.bf16.msra.mxu0 0
        %753 = vmatprep.subr.bf16.mxu0 0
        %754 = vmatpush1.bf16.msra.mxu0 0
        %755 = vmatprep.subr.bf16.mxu0 0
        %756 = vmatpush1.bf16.msra.mxu0 0
        %757 = vmatprep.subr.bf16.mxu0 0
        %758 = vmatpush1.bf16.msra.mxu0 0
        %759 = vmatprep.subr.bf16.mxu0 0
        %760 = vmatpush1.bf16.msra.mxu0 0
        %761 = vmatprep.subr.bf16.mxu0 0
        %762 = vmatpush1.bf16.msra.mxu0 0
        %763 = vmatprep.subr.bf16.mxu0 0
        %764 = vmatpush1.bf16.msra.mxu0 0
        %765 = vmatprep.mubr.bf16.mxu0 0
        %766 = vmatmul.mubr.bf16.gmra.mrb[0].mxu0 %v731
        %v767 = vpop.f32.mrb[0].mxu0
        %v768 = vadd.f32 %v710, %v767
        %v769 = vpop.f32.mrb[0].mxu0
        %v770 = vpop.f32.mrb[0].mxu0
        %v771 = vadd.f32 %v710, %v770
        %v772 = vpop.f32.mrb[0].mxu0
        %773 = vdwg.mxu0
        %v774 = vld [vmem:[%s5] sm:$0xf]
        %v775 = vld [vmem:[%s5 + $0x4] sm:$0xf]
        %v776 = vld [vmem:[%s5 + $0x8] sm:$0xf]
        %v777 = vld [vmem:[%s5 + $0xc] sm:$0xf]
        %v778 = vld [vmem:[#allocation10] sm:$0x1]
        %v780 = vlaneseq
        %v781 = vshrl.u32 %v780, 7
        %v782 = vsub.s32 0, %v781
        %v783 = vrot.slane %v778, %v782
        %v787 = vunpack.c.l.b16 %v697
        %v788 = vunpack.c.l.b16 %v698
        %v789 = vpack.c.b16 %v788, %v787
        %v794 = vunpack.c.l.b16 %v774
        %v795 = vunpack.c.l.b16 %v775
        %v796 = vunpack.c.l.b16 %v776
        %v797 = vunpack.c.l.b16 %v777
        %v798 = vpack.c.b16 %v795, %v794
        %v799 = vpack.c.b16 %v797, %v796
        %v803 = vsel %vm729, %v789, 0
        %805 = vmatprep.subr.bf16.mxu0 0
        %806 = vmatpush1.bf16.msra.mxu0 %v798
        %807 = vmatprep.subr.bf16.mxu0 0
        %808 = vmatpush1.bf16.msra.mxu0 %v799
        %809 = vmatprep.subr.bf16.mxu0 0
        %810 = vmatpush1.bf16.msra.mxu0 0
        %811 = vmatprep.subr.bf16.mxu0 0
        %812 = vmatpush1.bf16.msra.mxu0 0
        %813 = vmatprep.subr.bf16.mxu0 0
        %814 = vmatpush1.bf16.msra.mxu0 0
        %815 = vmatprep.subr.bf16.mxu0 0
        %816 = vmatpush1.bf16.msra.mxu0 0
        %817 = vmatprep.subr.bf16.mxu0 0
        %818 = vmatpush1.bf16.msra.mxu0 0
        %819 = vmatprep.subr.bf16.mxu0 0
        %820 = vmatpush1.bf16.msra.mxu0 0
        %821 = vmatprep.subr.bf16.mxu0 0
        %822 = vmatpush1.bf16.msra.mxu0 0
        %823 = vmatprep.subr.bf16.mxu0 0
        %824 = vmatpush1.bf16.msra.mxu0 0
        %825 = vmatprep.subr.bf16.mxu0 0
        %826 = vmatpush1.bf16.msra.mxu0 0
        %827 = vmatprep.subr.bf16.mxu0 0
        %828 = vmatpush1.bf16.msra.mxu0 0
        %829 = vmatprep.subr.bf16.mxu0 0
        %830 = vmatpush1.bf16.msra.mxu0 0
        %831 = vmatprep.subr.bf16.mxu0 0
        %832 = vmatpush1.bf16.msra.mxu0 0
        %833 = vmatprep.subr.bf16.mxu0 0
        %834 = vmatpush1.bf16.msra.mxu0 0
        %835 = vmatprep.subr.bf16.mxu0 0
        %836 = vmatpush1.bf16.msra.mxu0 0
        %837 = vmatprep.mubr.bf16.mxu0 0
        %838 = vmatmul.mubr.bf16.gmra.mrb[0].mxu0 %v803
        %v839 = vpop.f32.mrb[0].mxu0
        %v840 = vadd.f32 %v783, %v839
        %v841 = vpop.f32.mrb[0].mxu0
        %v842 = vpop.f32.mrb[0].mxu0
        %v843 = vadd.f32 %v783, %v842
        %v844 = vpop.f32.mrb[0].mxu0
        %845 = vdwg.mxu0
        %v846 = vld [vmem:[#allocation11] sm:$0xf]
        %v847 = vld [vmem:[#allocation11 + $0x4] sm:$0xf]
        %v848 = vld [vmem:[#allocation11 + $0x8] sm:$0xf]
        %v849 = vld [vmem:[#allocation11 + $0xc] sm:$0xf]
        %v850 = vld [vmem:[#allocation13] sm:$0x1]
        %v852 = vlaneseq
        %v853 = vshrl.u32 %v852, 7
        %v854 = vsub.s32 0, %v853
        %v855 = vrot.slane %v850, %v854
        %v859 = vunpack.c.l.b16 %v699
        %v860 = vunpack.c.l.b16 %v700
        %v861 = vpack.c.b16 %v860, %v859
        %v866 = vunpack.c.l.b16 %v846
        %v867 = vunpack.c.l.b16 %v847
        %v868 = vunpack.c.l.b16 %v848
        %v869 = vunpack.c.l.b16 %v849
        %v870 = vpack.c.b16 %v867, %v866
        %v871 = vpack.c.b16 %v869, %v868
        %v875 = vsel %vm729, %v861, 0
        %877 = vmatprep.subr.bf16.mxu0 0
        %878 = vmatpush1.bf16.msra.mxu0 %v870
        %879 = vmatprep.subr.bf16.mxu0 0
        %880 = vmatpush1.bf16.msra.mxu0 %v871
        %881 = vmatprep.subr.bf16.mxu0 0
        %882 = vmatpush1.bf16.msra.mxu0 0
        %883 = vmatprep.subr.bf16.mxu0 0
        %884 = vmatpush1.bf16.msra.mxu0 0
        %885 = vmatprep.subr.bf16.mxu0 0
        %886 = vmatpush1.bf16.msra.mxu0 0
        %887 = vmatprep.subr.bf16.mxu0 0
        %888 = vmatpush1.bf16.msra.mxu0 0
        %889 = vmatprep.subr.bf16.mxu0 0
        %890 = vmatpush1.bf16.msra.mxu0 0
        %891 = vmatprep.subr.bf16.mxu0 0
        %892 = vmatpush1.bf16.msra.mxu0 0
        %893 = vmatprep.subr.bf16.mxu0 0
        %894 = vmatpush1.bf16.msra.mxu0 0
        %895 = vmatprep.subr.bf16.mxu0 0
        %896 = vmatpush1.bf16.msra.mxu0 0
        %897 = vmatprep.subr.bf16.mxu0 0
        %898 = vmatpush1.bf16.msra.mxu0 0
        %899 = vmatprep.subr.bf16.mxu0 0
        %900 = vmatpush1.bf16.msra.mxu0 0
        %901 = vmatprep.subr.bf16.mxu0 0
        %902 = vmatpush1.bf16.msra.mxu0 0
        %903 = vmatprep.subr.bf16.mxu0 0
        %904 = vmatpush1.bf16.msra.mxu0 0
        %905 = vmatprep.subr.bf16.mxu0 0
        %906 = vmatpush1.bf16.msra.mxu0 0
        %907 = vmatprep.subr.bf16.mxu0 0
        %908 = vmatpush1.bf16.msra.mxu0 0
        %909 = vmatprep.mubr.bf16.mxu0 0
        %910 = vmatmul.mubr.bf16.gmra.mrb[0].mxu0 %v875
        %v911 = vpop.f32.mrb[0].mxu0
        %v912 = vadd.f32 %v855, %v911
        %v913 = vpop.f32.mrb[0].mxu0
        %v914 = vpop.f32.mrb[0].mxu0
        %v915 = vadd.f32 %v855, %v914
        %v916 = vpop.f32.mrb[0].mxu0
        %917 = vdwg.mxu0
        %v918 = vld [vmem:[%s9] sm:$0xf]
        %v919 = vld [vmem:[%s9 + $0x4] sm:$0xf]
        %v920 = vld [vmem:[%s9 + $0x8] sm:$0xf]
        %v921 = vld [vmem:[%s9 + $0xc] sm:$0xf]
        %v922 = vld [vmem:[%s10] sm:$0x1]
        %v924 = vlaneseq
        %v925 = vshrl.u32 %v924, 7
        %v926 = vsub.s32 0, %v925
        %v927 = vrot.slane %v922, %v926
        %v933 = vunpack.c.l.b16 %v918
        %v934 = vunpack.c.l.b16 %v919
        %v935 = vunpack.c.l.b16 %v920
        %v936 = vunpack.c.l.b16 %v921
        %v937 = vpack.c.b16 %v934, %v933
        %v938 = vpack.c.b16 %v936, %v935
        %941 = vmatprep.subr.bf16.mxu0 0
        %942 = vmatpush1.bf16.msra.mxu0 %v937
        %943 = vmatprep.subr.bf16.mxu0 0
        %944 = vmatpush1.bf16.msra.mxu0 %v938
        %945 = vmatprep.subr.bf16.mxu0 0
        %946 = vmatpush1.bf16.msra.mxu0 0
        %947 = vmatprep.subr.bf16.mxu0 0
        %948 = vmatpush1.bf16.msra.mxu0 0
        %949 = vmatprep.subr.bf16.mxu0 0
        %950 = vmatpush1.bf16.msra.mxu0 0
        %951 = vmatprep.subr.bf16.mxu0 0
        %952 = vmatpush1.bf16.msra.mxu0 0
        %953 = vmatprep.subr.bf16.mxu0 0
        %954 = vmatpush1.bf16.msra.mxu0 0
        %955 = vmatprep.subr.bf16.mxu0 0
        %956 = vmatpush1.bf16.msra.mxu0 0
        %957 = vmatprep.subr.bf16.mxu0 0
        %958 = vmatpush1.bf16.msra.mxu0 0
        %959 = vmatprep.subr.bf16.mxu0 0
        %960 = vmatpush1.bf16.msra.mxu0 0
        %961 = vmatprep.subr.bf16.mxu0 0
        %962 = vmatpush1.bf16.msra.mxu0 0
        %963 = vmatprep.subr.bf16.mxu0 0
        %964 = vmatpush1.bf16.msra.mxu0 0
        %965 = vmatprep.subr.bf16.mxu0 0
        %966 = vmatpush1.bf16.msra.mxu0 0
        %967 = vmatprep.subr.bf16.mxu0 0
        %968 = vmatpush1.bf16.msra.mxu0 0
        %969 = vmatprep.subr.bf16.mxu0 0
        %970 = vmatpush1.bf16.msra.mxu0 0
        %971 = vmatprep.subr.bf16.mxu0 0
        %972 = vmatpush1.bf16.msra.mxu0 0
        %973 = vmatprep.mubr.bf16.mxu0 0
        %974 = vmatmul.mubr.bf16.gmra.mrb[0].mxu0 %v731
        %v975 = vpop.f32.mrb[0].mxu0
        %v976 = vadd.f32 %v927, %v975
        %v977 = vpop.f32.mrb[0].mxu0
        %v978 = vpop.f32.mrb[0].mxu0
        %v979 = vadd.f32 %v927, %v978
        %v980 = vpop.f32.mrb[0].mxu0
        %981 = vdwg.mxu0
        %v982 = vmul.f32 %v768, 0.35355338
        %v983 = vmul.f32 %v771, 0.35355338
        %v984 = vmul.f32 %v976, 5.0
        %v985 = vmul.f32 %v979, 5.0
        %v986 = vxor.u32 %v984, 2147483648
        %v987 = vxor.u32 %v985, 2147483648
        %v988 = vmul.f32 %v986, 1.442695
        %v989 = vpow.pop %v988
        %v990 = vmul.f32 %v987, 1.442695
        %v991 = vpow.pop %v990
        %v992 = vadd.f32 %v989, 1.0
        %v993 = vadd.f32 %v991, 1.0
        %v994 = vrcp.pop %v992
        %v995 = vmul.f32 1.0, %v994
        %v996 = vrcp.pop %v993
        %v997 = vmul.f32 1.0, %v996
        %v998 = vadd.f32 %v995, 1e-05
        %v999 = vadd.f32 %v997, 1e-05
        %v1000 = vmul.f32 %v998, 1.0986123
        %v1001 = vmul.f32 %v999, 1.0986123
        %v1002 = vmul.f32 %v1000, 1.442695
        %v1003 = vpow.pop %v1002
        %v1004 = vmul.f32 %v1001, 1.442695
        %v1005 = vpow.pop %v1004
        %v1006 = vsub.f32 %v1003, 1.0
        %v1007 = vsub.f32 %v1005, 1.0
        %v1008 = vlaneseq
        %v1009 = vshrl.u32 %v1008, 7
        %v1010 = vadd.s32 %v1009, 8
        %v1011 = vlaneseq
        %v1012 = vand.u32 %v1011, 127
        %v1013 = vsub.s32 %v1009, %v1012
        %v1014 = vsub.s32 %v1010, %v1012
        %v1015 = vmul.u32 %v1013, %v1013
        %v1016 = vmul.u32 %v1014, %v1014
        %v1017 = vcvt.s32.f32 %v1015
        %v1018 = vcvt.s32.f32 %v1016
        %v1019 = vpack.c.bf16 %v983, %v982
        %v1020 = vpack.c.bf16 %v843, %v840
        %v1021 = vpack.c.bf16 %v915, %v912
        %vm1022 = vcmask 64512
        %v1024 = vsel %vm1022, %v1019, 0
        %v1027 = vsel %vm1022, %v1020, 0
        %1029 = vmatprep.subr.bf16.mxu0 0
        %1030 = vmatpush1.bf16.xpose.msra.mxu0 %v1027
        %1031 = vmatprep.subr.bf16.mxu0 0
        %1032 = vmatpush1.bf16.xpose.msra.mxu0 0
        %1033 = vmatprep.subr.bf16.mxu0 0
        %1034 = vmatpush1.bf16.xpose.msra.mxu0 0
        %1035 = vmatprep.subr.bf16.mxu0 0
        %1036 = vmatpush1.bf16.xpose.msra.mxu0 0
        %1037 = vmatprep.subr.bf16.mxu0 0
        %1038 = vmatpush1.bf16.xpose.msra.mxu0 0
        %1039 = vmatprep.subr.bf16.mxu0 0
        %1040 = vmatpush1.bf16.xpose.msra.mxu0 0
        %1041 = vmatprep.subr.bf16.mxu0 0
        %1042 = vmatpush1.bf16.xpose.msra.mxu0 0
        %1043 = vmatprep.subr.bf16.mxu0 0
        %1044 = vmatpush1.bf16.xpose.msra.mxu0 0
        %1045 = vmatprep.subr.bf16.mxu0 0
        %1046 = vmatpush1.bf16.xpose.msra.mxu0 0
        %1047 = vmatprep.subr.bf16.mxu0 0
        %1048 = vmatpush1.bf16.xpose.msra.mxu0 0
        %1049 = vmatprep.subr.bf16.mxu0 0
        %1050 = vmatpush1.bf16.xpose.msra.mxu0 0
        %1051 = vmatprep.subr.bf16.mxu0 0
        %1052 = vmatpush1.bf16.xpose.msra.mxu0 0
        %1053 = vmatprep.subr.bf16.mxu0 0
        %1054 = vmatpush1.bf16.xpose.msra.mxu0 0
        %1055 = vmatprep.subr.bf16.mxu0 0
        %1056 = vmatpush1.bf16.xpose.msra.mxu0 0
        %1057 = vmatprep.subr.bf16.mxu0 0
        %1058 = vmatpush1.bf16.xpose.msra.mxu0 0
        %1059 = vmatprep.subr.bf16.mxu0 0
        %1060 = vmatpush1.bf16.xpose.msra.mxu0 0
        %1061 = vmatprep.mubr.bf16.mxu0 0
        %1062 = vmatmul.mubr.bf16.gmra.mrb[0].mxu0 %v1024
        %v1063 = vpop.f32.mrb[0].mxu0
        %v1064 = vadd.f32 0.0, %v1063
        %v1065 = vpop.f32.mrb[0].mxu0
        %v1066 = vpop.f32.mrb[0].mxu0
        %v1067 = vadd.f32 0.0, %v1066
        %v1068 = vpop.f32.mrb[0].mxu0
        %1069 = vdwg.mxu0
        %vm1070 = vcmask 130048
        %v1071 = vsel %vm1070, %v1064, -inf
        %1072 = vmax.xlane.f32.xlu0 %v1071
        %v1073 = vpop.xlane.xlu0 %1072
        %v1074 = vsel %vm1070, %v1067, -inf
        %1075 = vmax.xlane.f32.xlu0 %v1074
        %v1076 = vpop.xlane.xlu0 %1075
        %v1077 = vsub.f32 %v1064, %v1073
        %v1078 = vsub.f32 %v1067, %v1076
        %v1079 = vmul.f32 %v1077, 1.442695
        %v1080 = vpow.pop %v1079
        %v1081 = vmul.f32 %v1078, 1.442695
        %v1082 = vpow.pop %v1081
        %v1083 = vsel %vm1070, %v1080, 0.0
        %1084 = vadd.xlane.f32.xlu0 %v1083
        %v1085 = vpop.xlane.xlu0 %1084
        %v1086 = vsel %vm1070, %v1082, 0.0
        %1087 = vadd.xlane.f32.xlu0 %v1086
        %v1088 = vpop.xlane.xlu0 %1087
        %v1089 = vrcp.pop %v1085
        %v1090 = vrcp.pop %v1088
        %v1091 = vmul.f32 %v1080, %v1089
        %v1092 = vmul.f32 %v1082, %v1090
        %1093 = vst.msk [vmem:[%s674] sm:$0xff] %vm1070, %v1091
        %1094 = vst.msk [vmem:[%s674 + $0x8] sm:$0xff] %vm1070, %v1092
        %v1095 = vpack.c.bf16 %v1092, %v1091
        %v1097 = vsel %vm1070, %v1095, 0
        %1099 = vmatprep.subr.bf16.mxu0 0
        %1100 = vmatpush1.bf16.msra.mxu0 %v1021
        %1101 = vmatprep.subr.bf16.mxu0 0
        %1102 = vmatpush1.bf16.msra.mxu0 0
        %1103 = vmatprep.subr.bf16.mxu0 0
        %1104 = vmatpush1.bf16.msra.mxu0 0
        %1105 = vmatprep.subr.bf16.mxu0 0
        %1106 = vmatpush1.bf16.msra.mxu0 0
        %1107 = vmatprep.subr.bf16.mxu0 0
        %1108 = vmatpush1.bf16.msra.mxu0 0
        %1109 = vmatprep.subr.bf16.mxu0 0
        %1110 = vmatpush1.bf16.msra.mxu0 0
        %1111 = vmatprep.subr.bf16.mxu0 0
        %1112 = vmatpush1.bf16.msra.mxu0 0
        %1113 = vmatprep.subr.bf16.mxu0 0
        %1114 = vmatpush1.bf16.msra.mxu0 0
        %1115 = vmatprep.subr.bf16.mxu0 0
        %1116 = vmatpush1.bf16.msra.mxu0 0
        %1117 = vmatprep.subr.bf16.mxu0 0
        %1118 = vmatpush1.bf16.msra.mxu0 0
        %1119 = vmatprep.subr.bf16.mxu0 0
        %1120 = vmatpush1.bf16.msra.mxu0 0
        %1121 = vmatprep.subr.bf16.mxu0 0
        %1122 = vmatpush1.bf16.msra.mxu0 0
        %1123 = vmatprep.subr.bf16.mxu0 0
        %1124 = vmatpush1.bf16.msra.mxu0 0
        %1125 = vmatprep.subr.bf16.mxu0 0
        %1126 = vmatpush1.bf16.msra.mxu0 0
        %1127 = vmatprep.subr.bf16.mxu0 0
        %1128 = vmatpush1.bf16.msra.mxu0 0
        %1129 = vmatprep.subr.bf16.mxu0 0
        %1130 = vmatpush1.bf16.msra.mxu0 0
        %1131 = vmatprep.mubr.bf16.mxu0 0
        %1132 = vmatmul.mubr.bf16.gmra.mrb[0].mxu0 %v1097
        %v1133 = vpop.f32.mrb[0].mxu0
        %v1134 = vadd.f32 0.0, %v1133
        %v1135 = vpop.f32.mrb[0].mxu0
        %v1136 = vpop.f32.mrb[0].mxu0
        %v1137 = vadd.f32 0.0, %v1136
        %v1138 = vpop.f32.mrb[0].mxu0
        %1139 = vdwg.mxu0
        %v1140 = vpack.c.bf16 %v1137, %v1134
        %v1141 = vrcp.pop %v1006
        %v1142 = vmul.f32 1.0, %v1141
        %v1143 = vrcp.pop %v1007
        %v1144 = vmul.f32 1.0, %v1143
        %v1145 = vmul.f32 %v1142, 0.3989423
        %v1146 = vmul.f32 %v1144, 0.3989423
        %v1147 = vmul.f32 %v1017, -0.5
        %v1148 = vmul.f32 %v1018, -0.5
        %v1149 = vmul.f32 %v1142, %v1142
        %v1150 = vmul.f32 %v1144, %v1144
        %1152 = vset.pattern.permute.xlu0 0
        %1153 = vperm.xlu0 %1152, %v1149
        %v1154 = vpop.permute.xlu0 %1153
        %1157 = vset.pattern.permute.xlu0 0
        %1158 = vperm.xlu0 %1157, %v1150
        %v1159 = vpop.permute.xlu0 %1158
        %v1161 = vmul.f32 %v1147, %v1154
        %v1162 = vmul.f32 %v1148, %v1159
        %v1163 = vmul.f32 %v1161, 1.442695
        %v1164 = vpow.pop %v1163
        %v1165 = vmul.f32 %v1162, 1.442695
        %v1166 = vpow.pop %v1165
        %1168 = vset.pattern.permute.xlu0 0
        %1169 = vperm.xlu0 %1168, %v1145
        %v1170 = vpop.permute.xlu0 %1169
        %1173 = vset.pattern.permute.xlu0 0
        %1174 = vperm.xlu0 %1173, %v1146
        %v1175 = vpop.permute.xlu0 %1174
        %v1177 = vmul.f32 %v1170, %v1164
        %v1178 = vmul.f32 %v1175, %v1166
        %1179 = vst.msk [vmem:[%s681] sm:$0xff] %vm1070, %v1177
        %1180 = vst.msk [vmem:[%s681 + $0x8] sm:$0xff] %vm1070, %v1178
        %1182 = vset.pattern.permute.xlu0 0
        %1183 = vperm.xlu0 %1182, %v1006
        %v1184 = vpop.permute.xlu0 %1183
        %1187 = vset.pattern.permute.xlu0 0
        %1188 = vperm.xlu0 %1187, %v1007
        %v1189 = vpop.permute.xlu0 %1188
        %1191 = vst.msk [vmem:[%s688] sm:$0xff] %vm1070, %v1184
        %1192 = vst.msk [vmem:[%s688 + $0x8] sm:$0xff] %vm1070, %v1189
        %1194 = vrot.lane.b32.xlu0 %v1019, 120
        %v1195 = vpop.permute.xlu0 %1194
        %1197 = vrot.lane.b32.xlu0 %v1020, 120
        %v1198 = vpop.permute.xlu0 %1197
        %v1200 = vsel %vm1022, %v1195, 0
        %v1203 = vsel %vm1022, %v1198, 0
        %1205 = vmatprep.subr.bf16.mxu0 0
        %1206 = vmatpush1.bf16.xpose.msra.mxu0 %v1203
        %1207 = vmatprep.subr.bf16.mxu0 0
        %1208 = vmatpush1.bf16.xpose.msra.mxu0 0
        %1209 = vmatprep.subr.bf16.mxu0 0
        %1210 = vmatpush1.bf16.xpose.msra.mxu0 0
        %1211 = vmatprep.subr.bf16.mxu0 0
        %1212 = vmatpush1.bf16.xpose.msra.mxu0 0
        %1213 = vmatprep.subr.bf16.mxu0 0
        %1214 = vmatpush1.bf16.xpose.msra.mxu0 0
        %1215 = vmatprep.subr.bf16.mxu0 0
        %1216 = vmatpush1.bf16.xpose.msra.mxu0 0
        %1217 = vmatprep.subr.bf16.mxu0 0
        %1218 = vmatpush1.bf16.xpose.msra.mxu0 0
        %1219 = vmatprep.subr.bf16.mxu0 0
        %1220 = vmatpush1.bf16.xpose.msra.mxu0 0
        %1221 = vmatprep.subr.bf16.mxu0 0
        %1222 = vmatpush1.bf16.xpose.msra.mxu0 0
        %1223 = vmatprep.subr.bf16.mxu0 0
        %1224 = vmatpush1.bf16.xpose.msra.mxu0 0
        %1225 = vmatprep.subr.bf16.mxu0 0
        %1226 = vmatpush1.bf16.xpose.msra.mxu0 0
        %1227 = vmatprep.subr.bf16.mxu0 0
        %1228 = vmatpush1.bf16.xpose.msra.mxu0 0
        %1229 = vmatprep.subr.bf16.mxu0 0
        %1230 = vmatpush1.bf16.xpose.msra.mxu0 0
        %1231 = vmatprep.subr.bf16.mxu0 0
        %1232 = vmatpush1.bf16.xpose.msra.mxu0 0
        %1233 = vmatprep.subr.bf16.mxu0 0
        %1234 = vmatpush1.bf16.xpose.msra.mxu0 0
        %1235 = vmatprep.subr.bf16.mxu0 0
        %1236 = vmatpush1.bf16.xpose.msra.mxu0 0
        %1237 = vmatprep.mubr.bf16.mxu0 0
        %1238 = vmatmul.mubr.bf16.gmra.mrb[0].mxu0 %v1200
        %v1239 = vpop.f32.mrb[0].mxu0
        %v1240 = vadd.f32 0.0, %v1239
        %v1241 = vpop.f32.mrb[0].mxu0
        %v1242 = vpop.f32.mrb[0].mxu0
        %v1243 = vadd.f32 0.0, %v1242
        %v1244 = vpop.f32.mrb[0].mxu0
        %1245 = vdwg.mxu0
        %v1246 = vsel %vm1070, %v1240, -inf
        %1247 = vmax.xlane.f32.xlu0 %v1246
        %v1248 = vpop.xlane.xlu0 %1247
        %v1249 = vsel %vm1070, %v1243, -inf
        %1250 = vmax.xlane.f32.xlu0 %v1249
        %v1251 = vpop.xlane.xlu0 %1250
        %v1252 = vsub.f32 %v1240, %v1248
        %v1253 = vsub.f32 %v1243, %v1251
        %v1254 = vmul.f32 %v1252, 1.442695
        %v1255 = vpow.pop %v1254
        %v1256 = vmul.f32 %v1253, 1.442695
        %v1257 = vpow.pop %v1256
        %v1258 = vsel %vm1070, %v1255, 0.0
        %1259 = vadd.xlane.f32.xlu0 %v1258
        %v1260 = vpop.xlane.xlu0 %1259
        %v1261 = vsel %vm1070, %v1257, 0.0
        %1262 = vadd.xlane.f32.xlu0 %v1261
        %v1263 = vpop.xlane.xlu0 %1262
        %v1264 = vrcp.pop %v1260
        %v1265 = vrcp.pop %v1263
        %v1266 = vmul.f32 %v1255, %v1264
        %v1267 = vmul.f32 %v1257, %v1265
        %s1268 = scalar_lea.vmem %s674, 16 [#allocation15]
        %1269 = vst.msk [vmem:[%s1268] sm:$0xff] %vm1070, %v1266
        %1270 = vst.msk [vmem:[%s1268 + $0x8] sm:$0xff] %vm1070, %v1267
        %v1271 = vpack.c.bf16 %v1267, %v1266
        %1273 = vrot.lane.b32.xlu0 %v1021, 120
        %v1274 = vpop.permute.xlu0 %1273
        %v1277 = vsel %vm1070, %v1271, 0
        %1279 = vmatprep.subr.bf16.mxu0 0
        %1280 = vmatpush1.bf16.msra.mxu0 %v1274
        %1281 = vmatprep.subr.bf16.mxu0 0
        %1282 = vmatpush1.bf16.msra.mxu0 0
        %1283 = vmatprep.subr.bf16.mxu0 0
        %1284 = vmatpush1.bf16.msra.mxu0 0
        %1285 = vmatprep.subr.bf16.mxu0 0
        %1286 = vmatpush1.bf16.msra.mxu0 0
        %1287 = vmatprep.subr.bf16.mxu0 0
        %1288 = vmatpush1.bf16.msra.mxu0 0
        %1289 = vmatprep.subr.bf16.mxu0 0
        %1290 = vmatpush1.bf16.msra.mxu0 0
        %1291 = vmatprep.subr.bf16.mxu0 0
        %1292 = vmatpush1.bf16.msra.mxu0 0
        %1293 = vmatprep.subr.bf16.mxu0 0
        %1294 = vmatpush1.bf16.msra.mxu0 0
        %1295 = vmatprep.subr.bf16.mxu0 0
        %1296 = vmatpush1.bf16.msra.mxu0 0
        %1297 = vmatprep.subr.bf16.mxu0 0
        %1298 = vmatpush1.bf16.msra.mxu0 0
        %1299 = vmatprep.subr.bf16.mxu0 0
        %1300 = vmatpush1.bf16.msra.mxu0 0
        %1301 = vmatprep.subr.bf16.mxu0 0
        %1302 = vmatpush1.bf16.msra.mxu0 0
        %1303 = vmatprep.subr.bf16.mxu0 0
        %1304 = vmatpush1.bf16.msra.mxu0 0
        %1305 = vmatprep.subr.bf16.mxu0 0
        %1306 = vmatpush1.bf16.msra.mxu0 0
        %1307 = vmatprep.subr.bf16.mxu0 0
        %1308 = vmatpush1.bf16.msra.mxu0 0
        %1309 = vmatprep.subr.bf16.mxu0 0
        %1310 = vmatpush1.bf16.msra.mxu0 0
        %1311 = vmatprep.mubr.bf16.mxu0 0
        %1312 = vmatmul.mubr.bf16.gmra.mrb[0].mxu0 %v1277
        %v1313 = vpop.f32.mrb[0].mxu0
        %v1314 = vadd.f32 0.0, %v1313
        %v1315 = vpop.f32.mrb[0].mxu0
        %v1316 = vpop.f32.mrb[0].mxu0
        %v1317 = vadd.f32 0.0, %v1316
        %v1318 = vpop.f32.mrb[0].mxu0
        %1319 = vdwg.mxu0
        %v1320 = vpack.c.bf16 %v1317, %v1314
        %1321 = vset.pattern.permute.xlu0 1
        %1322 = vperm.xlu0 %1321, %v1149
        %v1323 = vpop.permute.xlu0 %1322
        %1325 = vset.pattern.permute.xlu0 1
        %1326 = vperm.xlu0 %1325, %v1150
        %v1327 = vpop.permute.xlu0 %1326
        %v1329 = vmul.f32 %v1147, %v1323
        %v1330 = vmul.f32 %v1148, %v1327
        %v1331 = vmul.f32 %v1329, 1.442695
        %v1332 = vpow.pop %v1331
        %v1333 = vmul.f32 %v1330, 1.442695
        %v1334 = vpow.pop %v1333
        %1335 = vset.pattern.permute.xlu0 1
        %1336 = vperm.xlu0 %1335, %v1145
        %v1337 = vpop.permute.xlu0 %1336
        %1339 = vset.pattern.permute.xlu0 1
        %1340 = vperm.xlu0 %1339, %v1146
        %v1341 = vpop.permute.xlu0 %1340
        %v1343 = vmul.f32 %v1337, %v1332
        %v1344 = vmul.f32 %v1341, %v1334
        %s1345 = scalar_lea.vmem %s681, 16 [#allocation17]
        %1346 = vst.msk [vmem:[%s1345] sm:$0xff] %vm1070, %v1343
        %1347 = vst.msk [vmem:[%s1345 + $0x8] sm:$0xff] %vm1070, %v1344
        %1348 = vset.pattern.permute.xlu0 1
        %1349 = vperm.xlu0 %1348, %v1006
        %v1350 = vpop.permute.xlu0 %1349
        %1352 = vset.pattern.permute.xlu0 1
        %1353 = vperm.xlu0 %1352, %v1007
        %v1354 = vpop.permute.xlu0 %1353
        %s1356 = scalar_lea.vmem %s688, 16 [#allocation18]
        %1357 = vst.msk [vmem:[%s1356] sm:$0xff] %vm1070, %v1350
        %1358 = vst.msk [vmem:[%s1356 + $0x8] sm:$0xff] %vm1070, %v1354
        %1359 = vrot.lane.b32.xlu0 %v1019, 112
        %v1360 = vpop.permute.xlu0 %1359
        %1361 = vrot.lane.b32.xlu0 %v1020, 112
        %v1362 = vpop.permute.xlu0 %1361
        %v1364 = vsel %vm1022, %v1360, 0
        %v1367 = vsel %vm1022, %v1362, 0
        %1369 = vmatprep.subr.bf16.mxu0 0
        %1370 = vmatpush1.bf16.xpose.msra.mxu0 %v1367
        %1371 = vmatprep.subr.bf16.mxu0 0
        %1372 = vmatpush1.bf16.xpose.msra.mxu0 0
        %1373 = vmatprep.subr.bf16.mxu0 0
        %1374 = vmatpush1.bf16.xpose.msra.mxu0 0
        %1375 = vmatprep.subr.bf16.mxu0 0
        %1376 = vmatpush1.bf16.xpose.msra.mxu0 0
        %1377 = vmatprep.subr.bf16.mxu0 0
        %1378 = vmatpush1.bf16.xpose.msra.mxu0 0
        %1379 = vmatprep.subr.bf16.mxu0 0
        %1380 = vmatpush1.bf16.xpose.msra.mxu0 0
        %1381 = vmatprep.subr.bf16.mxu0 0
        %1382 = vmatpush1.bf16.xpose.msra.mxu0 0
        %1383 = vmatprep.subr.bf16.mxu0 0
        %1384 = vmatpush1.bf16.xpose.msra.mxu0 0
        %1385 = vmatprep.subr.bf16.mxu0 0
        %1386 = vmatpush1.bf16.xpose.msra.mxu0 0
        %1387 = vmatprep.subr.bf16.mxu0 0
        %1388 = vmatpush1.bf16.xpose.msra.mxu0 0
        %1389 = vmatprep.subr.bf16.mxu0 0
        %1390 = vmatpush1.bf16.xpose.msra.mxu0 0
        %1391 = vmatprep.subr.bf16.mxu0 0
        %1392 = vmatpush1.bf16.xpose.msra.mxu0 0
        %1393 = vmatprep.subr.bf16.mxu0 0
        %1394 = vmatpush1.bf16.xpose.msra.mxu0 0
        %1395 = vmatprep.subr.bf16.mxu0 0
        %1396 = vmatpush1.bf16.xpose.msra.mxu0 0
        %1397 = vmatprep.subr.bf16.mxu0 0
        %1398 = vmatpush1.bf16.xpose.msra.mxu0 0
        %1399 = vmatprep.subr.bf16.mxu0 0
        %1400 = vmatpush1.bf16.xpose.msra.mxu0 0
        %1401 = vmatprep.mubr.bf16.mxu0 0
        %1402 = vmatmul.mubr.bf16.gmra.mrb[0].mxu0 %v1364
        %v1403 = vpop.f32.mrb[0].mxu0
        %v1404 = vadd.f32 0.0, %v1403
        %v1405 = vpop.f32.mrb[0].mxu0
        %v1406 = vpop.f32.mrb[0].mxu0
        %v1407 = vadd.f32 0.0, %v1406
        %v1408 = vpop.f32.mrb[0].mxu0
        %1409 = vdwg.mxu0
        %v1410 = vsel %vm1070, %v1404, -inf
        %1411 = vmax.xlane.f32.xlu0 %v1410
        %v1412 = vpop.xlane.xlu0 %1411
        %v1413 = vsel %vm1070, %v1407, -inf
        %1414 = vmax.xlane.f32.xlu0 %v1413
        %v1415 = vpop.xlane.xlu0 %1414
        %v1416 = vsub.f32 %v1404, %v1412
        %v1417 = vsub.f32 %v1407, %v1415
        %v1418 = vmul.f32 %v1416, 1.442695
        %v1419 = vpow.pop %v1418
        %v1420 = vmul.f32 %v1417, 1.442695
        %v1421 = vpow.pop %v1420
        %v1422 = vsel %vm1070, %v1419, 0.0
        %1423 = vadd.xlane.f32.xlu0 %v1422
        %v1424 = vpop.xlane.xlu0 %1423
        %v1425 = vsel %vm1070, %v1421, 0.0
        %1426 = vadd.xlane.f32.xlu0 %v1425
        %v1427 = vpop.xlane.xlu0 %1426
        %v1428 = vrcp.pop %v1424
        %v1429 = vrcp.pop %v1427
        %v1430 = vmul.f32 %v1419, %v1428
        %v1431 = vmul.f32 %v1421, %v1429
        %s1432 = scalar_lea.vmem %s674, 32 [#allocation15]
        %1433 = vst.msk [vmem:[%s1432] sm:$0xff] %vm1070, %v1430
        %1434 = vst.msk [vmem:[%s1432 + $0x8] sm:$0xff] %vm1070, %v1431
        %v1435 = vpack.c.bf16 %v1431, %v1430
        %1436 = vrot.lane.b32.xlu0 %v1021, 112
        %v1437 = vpop.permute.xlu0 %1436
        %v1440 = vsel %vm1070, %v1435, 0
        %1442 = vmatprep.subr.bf16.mxu0 0
        %1443 = vmatpush1.bf16.msra.mxu0 %v1437
        %1444 = vmatprep.subr.bf16.mxu0 0
        %1445 = vmatpush1.bf16.msra.mxu0 0
        %1446 = vmatprep.subr.bf16.mxu0 0
        %1447 = vmatpush1.bf16.msra.mxu0 0
        %1448 = vmatprep.subr.bf16.mxu0 0
        %1449 = vmatpush1.bf16.msra.mxu0 0
        %1450 = vmatprep.subr.bf16.mxu0 0
        %1451 = vmatpush1.bf16.msra.mxu0 0
        %1452 = vmatprep.subr.bf16.mxu0 0
        %1453 = vmatpush1.bf16.msra.mxu0 0
        %1454 = vmatprep.subr.bf16.mxu0 0
        %1455 = vmatpush1.bf16.msra.mxu0 0
        %1456 = vmatprep.subr.bf16.mxu0 0
        %1457 = vmatpush1.bf16.msra.mxu0 0
        %1458 = vmatprep.subr.bf16.mxu0 0
        %1459 = vmatpush1.bf16.msra.mxu0 0
        %1460 = vmatprep.subr.bf16.mxu0 0
        %1461 = vmatpush1.bf16.msra.mxu0 0
        %1462 = vmatprep.subr.bf16.mxu0 0
        %1463 = vmatpush1.bf16.msra.mxu0 0
        %1464 = vmatprep.subr.bf16.mxu0 0
        %1465 = vmatpush1.bf16.msra.mxu0 0
        %1466 = vmatprep.subr.bf16.mxu0 0
        %1467 = vmatpush1.bf16.msra.mxu0 0
        %1468 = vmatprep.subr.bf16.mxu0 0
        %1469 = vmatpush1.bf16.msra.mxu0 0
        %1470 = vmatprep.subr.bf16.mxu0 0
        %1471 = vmatpush1.bf16.msra.mxu0 0
        %1472 = vmatprep.subr.bf16.mxu0 0
        %1473 = vmatpush1.bf16.msra.mxu0 0
        %1474 = vmatprep.mubr.bf16.mxu0 0
        %1475 = vmatmul.mubr.bf16.gmra.mrb[0].mxu0 %v1440
        %v1476 = vpop.f32.mrb[0].mxu0
        %v1477 = vadd.f32 0.0, %v1476
        %v1478 = vpop.f32.mrb[0].mxu0
        %v1479 = vpop.f32.mrb[0].mxu0
        %v1480 = vadd.f32 0.0, %v1479
        %v1481 = vpop.f32.mrb[0].mxu0
        %1482 = vdwg.mxu0
        %v1483 = vpack.c.bf16 %v1480, %v1477
        %1484 = vset.pattern.permute.xlu0 2
        %1485 = vperm.xlu0 %1484, %v1149
        %v1486 = vpop.permute.xlu0 %1485
        %1488 = vset.pattern.permute.xlu0 2
        %1489 = vperm.xlu0 %1488, %v1150
        %v1490 = vpop.permute.xlu0 %1489
        %v1492 = vmul.f32 %v1147, %v1486
        %v1493 = vmul.f32 %v1148, %v1490
        %v1494 = vmul.f32 %v1492, 1.442695
        %v1495 = vpow.pop %v1494
        %v1496 = vmul.f32 %v1493, 1.442695
        %v1497 = vpow.pop %v1496
        %1498 = vset.pattern.permute.xlu0 2
        %1499 = vperm.xlu0 %1498, %v1145
        %v1500 = vpop.permute.xlu0 %1499
        %1502 = vset.pattern.permute.xlu0 2
        %1503 = vperm.xlu0 %1502, %v1146
        %v1504 = vpop.permute.xlu0 %1503
        %v1506 = vmul.f32 %v1500, %v1495
        %v1507 = vmul.f32 %v1504, %v1497
        %s1508 = scalar_lea.vmem %s681, 32 [#allocation17]
        %1509 = vst.msk [vmem:[%s1508] sm:$0xff] %vm1070, %v1506
        %1510 = vst.msk [vmem:[%s1508 + $0x8] sm:$0xff] %vm1070, %v1507
        %1511 = vset.pattern.permute.xlu0 2
        %1512 = vperm.xlu0 %1511, %v1006
        %v1513 = vpop.permute.xlu0 %1512
        %1515 = vset.pattern.permute.xlu0 2
        %1516 = vperm.xlu0 %1515, %v1007
        %v1517 = vpop.permute.xlu0 %1516
        %s1519 = scalar_lea.vmem %s688, 32 [#allocation18]
        %1520 = vst.msk [vmem:[%s1519] sm:$0xff] %vm1070, %v1513
        %1521 = vst.msk [vmem:[%s1519 + $0x8] sm:$0xff] %vm1070, %v1517
        %1522 = vrot.lane.b32.xlu0 %v1019, 104
        %v1523 = vpop.permute.xlu0 %1522
        %1524 = vrot.lane.b32.xlu0 %v1020, 104
        %v1525 = vpop.permute.xlu0 %1524
        %v1527 = vsel %vm1022, %v1523, 0
        %v1530 = vsel %vm1022, %v1525, 0
        %1532 = vmatprep.subr.bf16.mxu0 0
        %1533 = vmatpush1.bf16.xpose.msra.mxu0 %v1530
        %1534 = vmatprep.subr.bf16.mxu0 0
        %1535 = vmatpush1.bf16.xpose.msra.mxu0 0
        %1536 = vmatprep.subr.bf16.mxu0 0
        %1537 = vmatpush1.bf16.xpose.msra.mxu0 0
        %1538 = vmatprep.subr.bf16.mxu0 0
        %1539 = vmatpush1.bf16.xpose.msra.mxu0 0
        %1540 = vmatprep.subr.bf16.mxu0 0
        %1541 = vmatpush1.bf16.xpose.msra.mxu0 0
        %1542 = vmatprep.subr.bf16.mxu0 0
        %1543 = vmatpush1.bf16.xpose.msra.mxu0 0
        %1544 = vmatprep.subr.bf16.mxu0 0
        %1545 = vmatpush1.bf16.xpose.msra.mxu0 0
        %1546 = vmatprep.subr.bf16.mxu0 0
        %1547 = vmatpush1.bf16.xpose.msra.mxu0 0
        %1548 = vmatprep.subr.bf16.mxu0 0
        %1549 = vmatpush1.bf16.xpose.msra.mxu0 0
        %1550 = vmatprep.subr.bf16.mxu0 0
        %1551 = vmatpush1.bf16.xpose.msra.mxu0 0
        %1552 = vmatprep.subr.bf16.mxu0 0
        %1553 = vmatpush1.bf16.xpose.msra.mxu0 0
        %1554 = vmatprep.subr.bf16.mxu0 0
        %1555 = vmatpush1.bf16.xpose.msra.mxu0 0
        %1556 = vmatprep.subr.bf16.mxu0 0
        %1557 = vmatpush1.bf16.xpose.msra.mxu0 0
        %1558 = vmatprep.subr.bf16.mxu0 0
        %1559 = vmatpush1.bf16.xpose.msra.mxu0 0
        %1560 = vmatprep.subr.bf16.mxu0 0
        %1561 = vmatpush1.bf16.xpose.msra.mxu0 0
        %1562 = vmatprep.subr.bf16.mxu0 0
        %1563 = vmatpush1.bf16.xpose.msra.mxu0 0
        %1564 = vmatprep.mubr.bf16.mxu0 0
        %1565 = vmatmul.mubr.bf16.gmra.mrb[0].mxu0 %v1527
        %v1566 = vpop.f32.mrb[0].mxu0
        %v1567 = vadd.f32 0.0, %v1566
        %v1568 = vpop.f32.mrb[0].mxu0
        %v1569 = vpop.f32.mrb[0].mxu0
        %v1570 = vadd.f32 0.0, %v1569
        %v1571 = vpop.f32.mrb[0].mxu0
        %1572 = vdwg.mxu0
        %v1573 = vsel %vm1070, %v1567, -inf
        %1574 = vmax.xlane.f32.xlu0 %v1573
        %v1575 = vpop.xlane.xlu0 %1574
        %v1576 = vsel %vm1070, %v1570, -inf
        %1577 = vmax.xlane.f32.xlu0 %v1576
        %v1578 = vpop.xlane.xlu0 %1577
        %v1579 = vsub.f32 %v1567, %v1575
        %v1580 = vsub.f32 %v1570, %v1578
        %v1581 = vmul.f32 %v1579, 1.442695
        %v1582 = vpow.pop %v1581
        %v1583 = vmul.f32 %v1580, 1.442695
        %v1584 = vpow.pop %v1583
        %v1585 = vsel %vm1070, %v1582, 0.0
        %1586 = vadd.xlane.f32.xlu0 %v1585
        %v1587 = vpop.xlane.xlu0 %1586
        %v1588 = vsel %vm1070, %v1584, 0.0
        %1589 = vadd.xlane.f32.xlu0 %v1588
        %v1590 = vpop.xlane.xlu0 %1589
        %v1591 = vrcp.pop %v1587
        %v1592 = vrcp.pop %v1590
        %v1593 = vmul.f32 %v1582, %v1591
        %v1594 = vmul.f32 %v1584, %v1592
        %s1595 = scalar_lea.vmem %s674, 48 [#allocation15]
        %1596 = vst.msk [vmem:[%s1595] sm:$0xff] %vm1070, %v1593
        %1597 = vst.msk [vmem:[%s1595 + $0x8] sm:$0xff] %vm1070, %v1594
        %v1598 = vpack.c.bf16 %v1594, %v1593
        %1599 = vrot.lane.b32.xlu0 %v1021, 104
        %v1600 = vpop.permute.xlu0 %1599
        %v1603 = vsel %vm1070, %v1598, 0
        %1605 = vmatprep.subr.bf16.mxu0 0
        %1606 = vmatpush1.bf16.msra.mxu0 %v1600
        %1607 = vmatprep.subr.bf16.mxu0 0
        %1608 = vmatpush1.bf16.msra.mxu0 0
        %1609 = vmatprep.subr.bf16.mxu0 0
        %1610 = vmatpush1.bf16.msra.mxu0 0
        %1611 = vmatprep.subr.bf16.mxu0 0
        %1612 = vmatpush1.bf16.msra.mxu0 0
        %1613 = vmatprep.subr.bf16.mxu0 0
        %1614 = vmatpush1.bf16.msra.mxu0 0
        %1615 = vmatprep.subr.bf16.mxu0 0
        %1616 = vmatpush1.bf16.msra.mxu0 0
        %1617 = vmatprep.subr.bf16.mxu0 0
        %1618 = vmatpush1.bf16.msra.mxu0 0
        %1619 = vmatprep.subr.bf16.mxu0 0
        %1620 = vmatpush1.bf16.msra.mxu0 0
        %1621 = vmatprep.subr.bf16.mxu0 0
        %1622 = vmatpush1.bf16.msra.mxu0 0
        %1623 = vmatprep.subr.bf16.mxu0 0
        %1624 = vmatpush1.bf16.msra.mxu0 0
        %1625 = vmatprep.subr.bf16.mxu0 0
        %1626 = vmatpush1.bf16.msra.mxu0 0
        %1627 = vmatprep.subr.bf16.mxu0 0
        %1628 = vmatpush1.bf16.msra.mxu0 0
        %1629 = vmatprep.subr.bf16.mxu0 0
        %1630 = vmatpush1.bf16.msra.mxu0 0
        %1631 = vmatprep.subr.bf16.mxu0 0
        %1632 = vmatpush1.bf16.msra.mxu0 0
        %1633 = vmatprep.subr.bf16.mxu0 0
        %1634 = vmatpush1.bf16.msra.mxu0 0
        %1635 = vmatprep.subr.bf16.mxu0 0
        %1636 = vmatpush1.bf16.msra.mxu0 0
        %1637 = vmatprep.mubr.bf16.mxu0 0
        %1638 = vmatmul.mubr.bf16.gmra.mrb[0].mxu0 %v1603
        %v1639 = vpop.f32.mrb[0].mxu0
        %v1640 = vadd.f32 0.0, %v1639
        %v1641 = vpop.f32.mrb[0].mxu0
        %v1642 = vpop.f32.mrb[0].mxu0
        %v1643 = vadd.f32 0.0, %v1642
        %v1644 = vpop.f32.mrb[0].mxu0
        %1645 = vdwg.mxu0
        %v1646 = vpack.c.bf16 %v1643, %v1640
        %1647 = vset.pattern.permute.xlu0 3
        %1648 = vperm.xlu0 %1647, %v1149
        %v1649 = vpop.permute.xlu0 %1648
        %1651 = vset.pattern.permute.xlu0 3
        %1652 = vperm.xlu0 %1651, %v1150
        %v1653 = vpop.permute.xlu0 %1652
        %v1655 = vmul.f32 %v1147, %v1649
        %v1656 = vmul.f32 %v1148, %v1653
        %v1657 = vmul.f32 %v1655, 1.442695
        %v1658 = vpow.pop %v1657
        %v1659 = vmul.f32 %v1656, 1.442695
        %v1660 = vpow.pop %v1659
        %1661 = vset.pattern.permute.xlu0 3
        %1662 = vperm.xlu0 %1661, %v1145
        %v1663 = vpop.permute.xlu0 %1662
        %1665 = vset.pattern.permute.xlu0 3
        %1666 = vperm.xlu0 %1665, %v1146
        %v1667 = vpop.permute.xlu0 %1666
        %v1669 = vmul.f32 %v1663, %v1658
        %v1670 = vmul.f32 %v1667, %v1660
        %s1671 = scalar_lea.vmem %s681, 48 [#allocation17]
        %1672 = vst.msk [vmem:[%s1671] sm:$0xff] %vm1070, %v1669
        %1673 = vst.msk [vmem:[%s1671 + $0x8] sm:$0xff] %vm1070, %v1670
        %1674 = vset.pattern.permute.xlu0 3
        %1675 = vperm.xlu0 %1674, %v1006
        %v1676 = vpop.permute.xlu0 %1675
        %1678 = vset.pattern.permute.xlu0 3
        %1679 = vperm.xlu0 %1678, %v1007
        %v1680 = vpop.permute.xlu0 %1679
        %s1682 = scalar_lea.vmem %s688, 48 [#allocation18]
        %1683 = vst.msk [vmem:[%s1682] sm:$0xff] %vm1070, %v1676
        %1684 = vst.msk [vmem:[%s1682 + $0x8] sm:$0xff] %vm1070, %v1680
        %1686 = vrot.lane.b32.xlu0 %v1320, 8
        %v1687 = vpop.permute.xlu0 %1686
        %1689 = vrot.lane.b32.xlu0 %v1483, 16
        %v1690 = vpop.permute.xlu0 %1689
        %1692 = vrot.lane.b32.xlu0 %v1646, 24
        %v1693 = vpop.permute.xlu0 %1692
        %v1696 = vsel %vm1022, %v1140, %v1687
        %v1698 = vsel %vm1070, %v1696, %v1690
        %vm1699 = vcmask 195584
        %v1701 = vsel %vm1699, %v1698, %v1693
        %v1702 = vld [vmem:[%s11] sm:$0xf]
        %v1703 = vld [vmem:[%s11 + $0x4] sm:$0xf]
        %v1704 = vld [vmem:[%s11 + $0x8] sm:$0xf]
        %v1705 = vld [vmem:[%s11 + $0xc] sm:$0xf]
        %v1706 = vld [vmem:[%s12] sm:$0x1]
        %v1708 = vlaneseq
        %v1709 = vshrl.u32 %v1708, 7
        %v1710 = vsub.s32 0, %v1709
        %v1711 = vrot.slane %v1706, %v1710
        %v1717 = vunpack.c.l.b16 %v1702
        %v1718 = vunpack.c.l.b16 %v1703
        %v1719 = vunpack.c.l.b16 %v1704
        %v1720 = vunpack.c.l.b16 %v1705
        %v1721 = vpack.c.b16 %v1718, %v1717
        %v1722 = vpack.c.b16 %v1720, %v1719
        %v1725 = vsel %vm729, %v1701, 0
        %1727 = vmatprep.subr.bf16.mxu0 0
        %1728 = vmatpush1.bf16.msra.mxu0 %v1721
        %1729 = vmatprep.subr.bf16.mxu0 0
        %1730 = vmatpush1.bf16.msra.mxu0 %v1722
        %1731 = vmatprep.subr.bf16.mxu0 0
        %1732 = vmatpush1.bf16.msra.mxu0 0
        %1733 = vmatprep.subr.bf16.mxu0 0
        %1734 = vmatpush1.bf16.msra.mxu0 0
        %1735 = vmatprep.subr.bf16.mxu0 0
        %1736 = vmatpush1.bf16.msra.mxu0 0
        %1737 = vmatprep.subr.bf16.mxu0 0
        %1738 = vmatpush1.bf16.msra.mxu0 0
        %1739 = vmatprep.subr.bf16.mxu0 0
        %1740 = vmatpush1.bf16.msra.mxu0 0
        %1741 = vmatprep.subr.bf16.mxu0 0
        %1742 = vmatpush1.bf16.msra.mxu0 0
        %1743 = vmatprep.subr.bf16.mxu0 0
        %1744 = vmatpush1.bf16.msra.mxu0 0
        %1745 = vmatprep.subr.bf16.mxu0 0
        %1746 = vmatpush1.bf16.msra.mxu0 0
        %1747 = vmatprep.subr.bf16.mxu0 0
        %1748 = vmatpush1.bf16.msra.mxu0 0
        %1749 = vmatprep.subr.bf16.mxu0 0
        %1750 = vmatpush1.bf16.msra.mxu0 0
        %1751 = vmatprep.subr.bf16.mxu0 0
        %1752 = vmatpush1.bf16.msra.mxu0 0
        %1753 = vmatprep.subr.bf16.mxu0 0
        %1754 = vmatpush1.bf16.msra.mxu0 0
        %1755 = vmatprep.subr.bf16.mxu0 0
        %1756 = vmatpush1.bf16.msra.mxu0 0
        %1757 = vmatprep.subr.bf16.mxu0 0
        %1758 = vmatpush1.bf16.msra.mxu0 0
        %1759 = vmatprep.mubr.bf16.mxu0 0
        %1760 = vmatmul.mubr.bf16.gmra.mrb[0].mxu0 %v1725
        %v1761 = vpop.f32.mrb[0].mxu0
        %v1762 = vadd.f32 %v1711, %v1761
        %v1763 = vpop.f32.mrb[0].mxu0
        %v1764 = vpop.f32.mrb[0].mxu0
        %v1765 = vadd.f32 %v1711, %v1764
        %v1766 = vpop.f32.mrb[0].mxu0
        %1767 = vdwg.mxu0
        %1768 = vst.msk [vmem:[%s667] sm:$0xff] %vm729, %v1762
        %1769 = vst.msk [vmem:[%s667 + $0x8] sm:$0xff] %vm729, %v1765
        %s1770 = sand.u32 %s341, 1
        %s1771 = scalar_lea.sflag [#allocation4], %s1770
        %s1772 = sand.u32 %s341, 1
        %s1773 = smul.addr %s1772, 16
        %s1774 = scalar_lea.vmem [#allocation14], %s1773
        %s1775 = sand.u32 %s45, 1
        %s1776 = scalar_lea.sflag [#allocation16], %s1775
        %s1777 = sand.u32 %s367, 1
        %s1778 = smul.addr %s1777, 64
        %s1779 = scalar_lea.vmem [#allocation15], %s1778
        %s1780 = sand.u32 %s45, 1
        %s1781 = scalar_lea.sflag [#allocation16], %s1780
        %s1782 = sand.u32 %s393, 1
        %s1783 = smul.addr %s1782, 64
        %s1784 = scalar_lea.vmem [#allocation17], %s1783
        %s1785 = sand.u32 %s419, 1
        %s1786 = scalar_lea.sflag [#allocation19], %s1785
        %s1787 = sand.u32 %s419, 1
        %s1788 = smul.addr %s1787, 64
        %s1789 = scalar_lea.vmem [#allocation18], %s1788
        // Predicated region
        $region101: #{tpu_custom_call.1} parent=71 // pred_check
          %p1790 = pneg %p351
        $region102: #{tpu_custom_call.1} parent=71 // pred_check_branch
          %1792 = sbr.rel (%p1790) target = $region104
        $region103: #{tpu_custom_call.1} parent=71 // pred_region
          %s1794 = ssub.s32 256, 256
          %1795 = vsyncadd %s1771, %s1794
          %s1796 = smul.addr %s45, 2
          %s1797 = smul.addr %s1796, 128
          %s1798 = scalar_lea.hbm %s13, %s1797
          %s1799 = sshll.u32 %s1774, 4
          %s1800 = int_to_ptr.vmem [resolvable:$true] %s1799
          %1805 = dma.vmem_to_hbm [thread:$0]  %s1800, 256, %s1798, %s1771, 128, 128, 8
        $region104: #{tpu_custom_call.1} parent=71 // pred_fallthru
          _
        // Predicated region
        $region105: #{tpu_custom_call.1} parent=71 // pred_check
          %p1806 = pneg %p377
        $region106: #{tpu_custom_call.1} parent=71 // pred_check_branch
          %1808 = sbr.rel (%p1806) target = $region108
        $region107: #{tpu_custom_call.1} parent=71 // pred_region
          %s1810 = ssub.s32 1024, 1024
          %1811 = vsyncadd %s1776, %s1810
          %s1812 = smul.addr %s45, 8
          %s1813 = smul.addr %s1812, 128
          %s1814 = scalar_lea.hbm %s14, %s1813
          %s1815 = sshll.u32 %s1779, 4
          %s1816 = int_to_ptr.vmem [resolvable:$true] %s1815
          %1821 = dma.vmem_to_hbm [thread:$0]  %s1816, 1024, %s1814, %s1776, 128, 128, 8
        $region108: #{tpu_custom_call.1} parent=71 // pred_fallthru
          _
        // Predicated region
        $region109: #{tpu_custom_call.1} parent=71 // pred_check
          %p1822 = pneg %p403
        $region110: #{tpu_custom_call.1} parent=71 // pred_check_branch
          %1824 = sbr.rel (%p1822) target = $region112
        $region111: #{tpu_custom_call.1} parent=71 // pred_region
          %s1826 = ssub.s32 1024, 1024
          %1827 = vsyncadd %s1781, %s1826
          %s1828 = smul.addr %s45, 8
          %s1829 = smul.addr %s1828, 128
          %s1830 = scalar_lea.hbm %s15, %s1829
          %s1831 = sshll.u32 %s1784, 4
          %s1832 = int_to_ptr.vmem [resolvable:$true] %s1831
          %1837 = dma.vmem_to_hbm [thread:$0]  %s1832, 1024, %s1830, %s1781, 128, 128, 8
        $region112: #{tpu_custom_call.1} parent=71 // pred_fallthru
          _
        // Predicated region
        $region113: #{tpu_custom_call.1} parent=71 // pred_check
          %p1838 = pneg %p429
        $region114: #{tpu_custom_call.1} parent=71 // pred_check_branch
          %1840 = sbr.rel (%p1838) target = $region116
        $region115: #{tpu_custom_call.1} parent=71 // pred_region
          %s1842 = ssub.s32 1024, 1024
          %1843 = vsyncadd %s1786, %s1842
          %s1844 = smul.addr %s45, 8
          %s1845 = smul.addr %s1844, 128
          %s1846 = scalar_lea.hbm %s16, %s1845
          %s1847 = sshll.u32 %s1789, 4
          %s1848 = int_to_ptr.vmem [resolvable:$true] %s1847
          %1853 = dma.vmem_to_hbm [thread:$0]  %s1848, 1024, %s1846, %s1786, 128, 128, 8
        $region116: #{tpu_custom_call.1} parent=71 // pred_fallthru
          _
      $region72: #{tpu_custom_call.1} parent=5 // pred_fallthru
        _
      %p1854 = scmp.le.s32.totalorder 2, %s40
      // Predicated region
      $region117: #{tpu_custom_call.1} parent=5 // pred_check
        %p1855 = pneg %p1854
      $region118: #{tpu_custom_call.1} parent=5 // pred_check_branch
        %1857 = sbr.rel (%p1855) target = $region120
      $region119: #{tpu_custom_call.1} parent=5 // pred_region
        %s1858 = ssub.s32 %s40, 2
        // Predicated region
        $region121: #{tpu_custom_call.1} parent=119 // pred_check
          %p1859 = pneg %p357
        $region122: #{tpu_custom_call.1} parent=119 // pred_check_branch
          %1861 = sbr.rel (%p1859) target = $region124
        $region123: #{tpu_custom_call.1} parent=119 // pred_region
          %s1862 = sand.u32 %s342, 1
          %s1863 = scalar_lea.sflag [#allocation4], %s1862
          %s1864 = sand.u32 %s342, 1
          %s1865 = smul.addr %s1864, 16
          %s1866 = scalar_lea.vmem [#allocation14], %s1865
          %1867 = dma.done %s1863, 256
        $region124: #{tpu_custom_call.1} parent=119 // pred_fallthru
          _
        // Predicated region
        $region125: #{tpu_custom_call.1} parent=119 // pred_check
          %p1868 = pneg %p383
        $region126: #{tpu_custom_call.1} parent=119 // pred_check_branch
          %1870 = sbr.rel (%p1868) target = $region128
        $region127: #{tpu_custom_call.1} parent=119 // pred_region
          %s1871 = sand.u32 %s46, 1
          %s1872 = scalar_lea.sflag [#allocation16], %s1871
          %s1873 = sand.u32 %s368, 1
          %s1874 = smul.addr %s1873, 64
          %s1875 = scalar_lea.vmem [#allocation15], %s1874
          %1876 = dma.done %s1872, 1024
        $region128: #{tpu_custom_call.1} parent=119 // pred_fallthru
          _
        // Predicated region
        $region129: #{tpu_custom_call.1} parent=119 // pred_check
          %p1877 = pneg %p409
        $region130: #{tpu_custom_call.1} parent=119 // pred_check_branch
          %1879 = sbr.rel (%p1877) target = $region132
        $region131: #{tpu_custom_call.1} parent=119 // pred_region
          %s1880 = sand.u32 %s46, 1
          %s1881 = scalar_lea.sflag [#allocation16], %s1880
          %s1882 = sand.u32 %s394, 1
          %s1883 = smul.addr %s1882, 64
          %s1884 = scalar_lea.vmem [#allocation17], %s1883
          %1885 = dma.done %s1881, 1024
        $region132: #{tpu_custom_call.1} parent=119 // pred_fallthru
          _
        // Predicated region
        $region133: #{tpu_custom_call.1} parent=119 // pred_check
          %p1886 = pneg %p435
        $region134: #{tpu_custom_call.1} parent=119 // pred_check_branch
          %1888 = sbr.rel (%p1886) target = $region136
        $region135: #{tpu_custom_call.1} parent=119 // pred_region
          %s1889 = sand.u32 %s420, 1
          %s1890 = scalar_lea.sflag [#allocation19], %s1889
          %s1891 = sand.u32 %s420, 1
          %s1892 = smul.addr %s1891, 64
          %s1893 = scalar_lea.vmem [#allocation18], %s1892
          %1894 = dma.done %s1890, 1024
        $region136: #{tpu_custom_call.1} parent=119 // pred_fallthru
          _
      $region120: #{tpu_custom_call.1} parent=5 // pred_fallthru
        _
    $region6: #{tpu_custom_call.1} parent=1 // loop_footer
      %s44 = sadd.s32 1, %s40
    $region7: #{tpu_custom_call.1} parent=1 // loop_footer_branch
      %39 = sbr.rel target = $region3
    $region8: #{tpu_custom_call.1} parent=1 // loop_exit
      _
    %1895 = vsyncpa [#allocation3], 1
    %s1896 = scalar_lea.sflag [#allocation3], 1
    %1897 = vsyncpa %s1896, 1
    %1898 = vsyncpa [#allocation6], 1
    %s1899 = scalar_lea.sflag [#allocation6], 1
    %1900 = vsyncpa %s1899, 1
    %1901 = vsyncpa [#allocation9], 1
    %1902 = vsyncpa [#allocation12], 1
    %1903 = vsyncpa [#allocation4], 1
    %s1904 = scalar_lea.sflag [#allocation4], 1
    %1905 = vsyncpa %s1904, 1
    %1906 = vsyncpa [#allocation16], 1
    %s1907 = scalar_lea.sflag [#allocation16], 1
    %1908 = vsyncpa %s1907, 1
    %1909 = vsyncpa [#allocation19], 1
    %s1910 = scalar_lea.sflag [#allocation19], 1
    %1911 = vsyncpa %s1910, 1

// kernel: tpu_custom_call.1
$region0: #{tpu_custom_call.1}
  #allocation0 [shape = 'u32[]', space=smem, size = 0x4, offset = 0x4, fixed_abs, tag = 'smem constant byte address 0x4 - core index']
  #allocation1 [shape = 'u32[144,128]{1,0:T(1,128)}', space=vmem, size = 0x12000, scoped, tag = 'internal scratch']
  %s0 = inlined_call_operand.vmem [shape: bf16[2,16,32], index: 0, kind: input, shape index: {}]
  %s1 = inlined_call_operand.hbm [shape: bf16[2,16,32], index: 1, kind: input, shape index: {}]
  %s2 = inlined_call_operand.hbm [shape: bf16[2,16,32], index: 2, kind: input, shape index: {}]
  %s3 = inlined_call_operand.hbm [shape: bf16[32,32], index: 3, kind: input, shape index: {}]
  %s4 = inlined_call_operand.hbm [shape: f32[1,32], index: 4, kind: input, shape index: {}]
  %s5 = inlined_call_operand.vmem [shape: bf16[32,32], index: 5, kind: input, shape index: {}]
  %s6 = inlined_call_operand.hbm [shape: f32[1,32], index: 6, kind: input, shape index: {}]
  %s7 = inlined_call_operand.hbm [shape: bf16[32,32], index: 7, kind: input, shape index: {}]
  %s8 = inlined_call_operand.hbm [shape: f32[1,32], index: 8, kind: input, shape index: {}]
  %s9 = inlined_call_operand.vmem [shape: bf16[32,4], index: 9, kind: input, shape index: {}]
  %s10 = inlined_call_operand.vmem [shape: f32[1,4], index: 10, kind: input, shape index: {}]
  %s11 = inlined_call_operand.vmem [shape: bf16[32,32], index: 11, kind: input, shape index: {}]
  %s12 = inlined_call_operand.vmem [shape: f32[1,32], index: 12, kind: input, shape index: {}]
  %s13 = inlined_call_operand.hbm [shape: f32[2,16,32], index: 13, kind: output, shape index: {0}]
  %s14 = inlined_call_operand.hbm [shape: f32[2,4,16,16], index: 14, kind: output, shape index: {1}]
  %s15 = inlined_call_operand.hbm [shape: f32[2,4,16,16], index: 15, kind: output, shape index: {2}]
  %s16 = inlined_call_operand.hbm [shape: f32[2,4,16,16], index: 16, kind: output, shape index: {3}]
  %17 = xla_tuple %s13, %s14, %s15, %s16
  %s18 = sld [smem:[#allocation0]]
  $region137: #{tpu_custom_call.1} parent=0
    _
  %s20 = ssub.s32 1, %s18
  %s21 = scalar_select 0, %s20, %s18
  $region1: #{tpu_custom_call.1} parent=0
    #allocation2 [shape = 'u8[8192]{0}', space=vmem, size = 0x2000, scoped, tag = 'input window, operand 1']
    #allocation3 [shape = 's32[2]{0}', space=sflag, size = 0x8, scoped, tag = 'scoped memory for tpu_custom_call.1']
    #allocation4 [shape = 's32[2]{0}', space=sflag, size = 0x8, scoped, tag = 'scoped memory for tpu_custom_call.1']
    #allocation5 [shape = 'u8[8192]{0}', space=vmem, size = 0x2000, scoped, tag = 'input window, operand 2']
    #allocation6 [shape = 's32[2]{0}', space=sflag, size = 0x8, scoped, tag = 'scoped memory for tpu_custom_call.1']
    #allocation7 [shape = 'u8[8192]{0}', space=vmem, size = 0x2000, scoped, tag = 'input window, operand 3, single buffered']
    #allocation8 [shape = 'u8[512]{0}', space=vmem, size = 0x400, scoped, tag = 'input window, operand 4, single buffered']
    #allocation9 [shape = 's32[1]{0}', space=sflag, size = 0x4, scoped, tag = 'scoped memory for tpu_custom_call.1']
    #allocation10 [shape = 'u8[512]{0}', space=vmem, size = 0x400, scoped, tag = 'input window, operand 6, single buffered']
    #allocation11 [shape = 'u8[8192]{0}', space=vmem, size = 0x2000, scoped, tag = 'input window, operand 7, single buffered']
    #allocation12 [shape = 's32[1]{0}', space=sflag, size = 0x4, scoped, tag = 'scoped memory for tpu_custom_call.1']
    #allocation13 [shape = 'u8[512]{0}', space=vmem, size = 0x400, scoped, tag = 'input window, operand 8, single buffered']
    #allocation14 [shape = 'u8[16384]{0}', space=vmem, size = 0x4000, scoped, tag = 'output window, operand 0']
    #allocation15 [shape = 'u8[65536]{0}', space=vmem, size = 0x10000, scoped, tag = 'output window, operand 1']
    #allocation16 [shape = 's32[2]{0}', space=sflag, size = 0x8, scoped, tag = 'scoped memory for tpu_custom_call.1']
    #allocation17 [shape = 'u8[65536]{0}', space=vmem, size = 0x10000, scoped, tag = 'output window, operand 2']
    #allocation18 [shape = 'u8[65536]{0}', space=vmem, size = 0x10000, scoped, tag = 'output window, operand 3']
    #allocation19 [shape = 's32[2]{0}', space=sflag, size = 0x8, scoped, tag = 'scoped memory for tpu_custom_call.1']
    %22 = vsyncpa [#allocation3], 0
    %s23 = scalar_lea.sflag [#allocation3], 1
    %24 = vsyncpa %s23, 0
    %25 = vsyncpa [#allocation6], 0
    %s26 = scalar_lea.sflag [#allocation6], 1
    %27 = vsyncpa %s26, 0
    %28 = vsyncpa [#allocation9], 0
    %29 = vsyncpa [#allocation12], 0
    %30 = vsyncpa [#allocation4], 0
    %s31 = scalar_lea.sflag [#allocation4], 1
    %32 = vsyncpa %s31, 0
    %33 = vsyncpa [#allocation16], 0
    %s34 = scalar_lea.sflag [#allocation16], 1
    %35 = vsyncpa %s34, 0
    %36 = vsyncpa [#allocation19], 0
    %s37 = scalar_lea.sflag [#allocation19], 1
    %38 = vsyncpa %s37, 0
    loop: start=0, step=1, limit=4
    $region2: #{tpu_custom_call.1} parent=1 // loop_pre_header
      _
    $region3: #{tpu_custom_call.1} parent=1 // loop_header
      %s40 = sphi 0, %s44
      %p41 = scmp.ge.s32.totalorder %s40, 4
      %s50 = sphi 0, %s52
      %s53 = sphi 0, %s50
      %s54 = sphi 0, %s53
      %s70 = sphi 0, %s54
      %s76 = sphi 0, %s78
      %s79 = sphi 0, %s76
      %s80 = sphi 0, %s79
      %s96 = sphi 0, %s80
      %s102 = sphi 0, %s104
      %s105 = sphi 0, %s102
      %s106 = sphi 0, %s105
      %s122 = sphi 0, %s106
      %s126 = sphi 0, %s126
      %s128 = sphi 0, %s126
      %s129 = sphi 0, %s128
      %s143 = sphi 0, %s129
      %s147 = sphi 0, %s147
      %s149 = sphi 0, %s147
      %s150 = sphi 0, %s149
      %s164 = sphi 0, %s150
      %s168 = sphi 0, %s168
      %s170 = sphi 0, %s168
      %s171 = sphi 0, %s170
      %s185 = sphi 0, %s171
      %s189 = sphi 0, %s189
      %s191 = sphi 0, %s189
      %s192 = sphi 0, %s191
      %s206 = sphi 0, %s192
      %s210 = sphi 0, %s210
      %s212 = sphi 0, %s210
      %s213 = sphi 0, %s212
      %s227 = sphi 0, %s213
      %s231 = sphi 0, %s231
      %s233 = sphi 0, %s231
      %s234 = sphi 0, %s233
      %s248 = sphi 0, %s234
      %s252 = sphi 0, %s252
      %s254 = sphi 0, %s252
      %s255 = sphi 0, %s254
      %s269 = sphi 0, %s255
      %s273 = sphi 0, %s273
      %s275 = sphi 0, %s273
      %s276 = sphi 0, %s275
      %s290 = sphi 0, %s276
      %s294 = sphi 0, %s294
      %s296 = sphi 0, %s294
      %s297 = sphi 0, %s296
      %s311 = sphi 0, %s297
      %s315 = sphi 0, %s315
      %s317 = sphi 0, %s315
      %s318 = sphi 0, %s317
      %s332 = sphi 0, %s318
      %s338 = sphi 0, %s340
      %s341 = sphi 0, %s338
      %s342 = sphi 0, %s341
      %s358 = sphi 0, %s342
      %s364 = sphi 0, %s366
      %s367 = sphi 0, %s364
      %s368 = sphi 0, %s367
      %s384 = sphi 0, %s368
      %s390 = sphi 0, %s392
      %s393 = sphi 0, %s390
      %s394 = sphi 0, %s393
      %s410 = sphi 0, %s394
      %s416 = sphi 0, %s418
      %s419 = sphi 0, %s416
      %s420 = sphi 0, %s419
      %s436 = sphi 0, %s420
    $region4: #{tpu_custom_call.1} parent=1 // loop_header_branch
      %43 = sbr.rel (%p41) target = $region8
    $region5: #{tpu_custom_call.1} parent=1 // loop_body
      %s45 = ssub.s32 %s40, 1
      %s46 = ssub.s32 %s40, 2
      %s47 = sadd.s32 %s40, 1
      %s48 = ssub.s32 %s40, %s47
      %p49 = scmp.eq.s32.totalorder %s48, 0
      %s51 = sadd.s32 %s50, 1
      %s52 = scalar_select %p49, %s50, %s51
      %p55 = pneg %p49
      %p56 = scmp.eq.s32.totalorder %s40, 1
      %p57 = por %p55, %p56
      %p58 = scmp.ne.s32.totalorder %s50, %s53
      %p59 = scmp.eq.s32.totalorder %s40, 0
      %p60 = por %p58, %p59
      %p61 = scmp.ne.s32.totalorder %s50, %s53
      %p62 = scmp.eq.s32.totalorder %s45, 1
      %p63 = por %p61, %p62
      %p64 = scmp.ne.s32.totalorder %s53, %s54
      %p65 = scmp.eq.s32.totalorder %s45, 0
      %p66 = por %p64, %p65
      %p67 = scmp.ne.s32.totalorder %s53, %s54
      %p68 = scmp.eq.s32.totalorder %s46, 1
      %p69 = por %p67, %p68
      %p71 = scmp.ne.s32.totalorder %s54, %s70
      %p72 = scmp.eq.s32.totalorder %s46, 0
      %p73 = por %p71, %p72
      %s74 = ssub.s32 %s40, %s47
      %p75 = scmp.eq.s32.totalorder %s74, 0
      %s77 = sadd.s32 %s76, 1
      %s78 = scalar_select %p75, %s76, %s77
      %p81 = pneg %p75
      %p82 = scmp.eq.s32.totalorder %s40, 1
      %p83 = por %p81, %p82
      %p84 = scmp.ne.s32.totalorder %s76, %s79
      %p85 = scmp.eq.s32.totalorder %s40, 0
      %p86 = por %p84, %p85
      %p87 = scmp.ne.s32.totalorder %s76, %s79
      %p88 = scmp.eq.s32.totalorder %s45, 1
      %p89 = por %p87, %p88
      %p90 = scmp.ne.s32.totalorder %s79, %s80
      %p91 = scmp.eq.s32.totalorder %s45, 0
      %p92 = por %p90, %p91
      %p93 = scmp.ne.s32.totalorder %s79, %s80
      %p94 = scmp.eq.s32.totalorder %s46, 1
      %p95 = por %p93, %p94
      %p97 = scmp.ne.s32.totalorder %s80, %s96
      %p98 = scmp.eq.s32.totalorder %s46, 0
      %p99 = por %p97, %p98
      %s100 = ssub.s32 %s40, %s47
      %p101 = scmp.eq.s32.totalorder %s100, 0
      %s103 = sadd.s32 %s102, 1
      %s104 = scalar_select %p101, %s102, %s103
      %p107 = pneg %p101
      %p108 = scmp.eq.s32.totalorder %s40, 1
      %p109 = por %p107, %p108
      %p110 = scmp.ne.s32.totalorder %s102, %s105
      %p111 = scmp.eq.s32.totalorder %s40, 0
      %p112 = por %p110, %p111
      %p113 = scmp.ne.s32.totalorder %s102, %s105
      %p114 = scmp.eq.s32.totalorder %s45, 1
      %p115 = por %p113, %p114
      %p116 = scmp.ne.s32.totalorder %s105, %s106
      %p117 = scmp.eq.s32.totalorder %s45, 0
      %p118 = por %p116, %p117
      %p119 = scmp.ne.s32.totalorder %s105, %s106
      %p120 = scmp.eq.s32.totalorder %s46, 1
      %p121 = por %p119, %p120
      %p123 = scmp.ne.s32.totalorder %s106, %s122
      %p124 = scmp.eq.s32.totalorder %s46, 0
      %p125 = por %p123, %p124
      %s127 = sadd.s32 %s126, 1
      %p130 = scmp.eq.s32.totalorder %s40, 1
      %p131 = scmp.ne.s32.totalorder %s126, %s128
      %p132 = scmp.eq.s32.totalorder %s40, 0
      %p133 = por %p131, %p132
      %p134 = scmp.ne.s32.totalorder %s126, %s128
      %p135 = scmp.eq.s32.totalorder %s45, 1
      %p136 = por %p134, %p135
      %p137 = scmp.ne.s32.totalorder %s128, %s129
      %p138 = scmp.eq.s32.totalorder %s45, 0
      %p139 = por %p137, %p138
      %p140 = scmp.ne.s32.totalorder %s128, %s129
      %p141 = scmp.eq.s32.totalorder %s46, 1
      %p142 = por %p140, %p141
      %p144 = scmp.ne.s32.totalorder %s129, %s143
      %p145 = scmp.eq.s32.totalorder %s46, 0
      %p146 = por %p144, %p145
      %s148 = sadd.s32 %s147, 1
      %p151 = scmp.eq.s32.totalorder %s40, 1
      %p152 = scmp.ne.s32.totalorder %s147, %s149
      %p153 = scmp.eq.s32.totalorder %s40, 0
      %p154 = por %p152, %p153
      %p155 = scmp.ne.s32.totalorder %s147, %s149
      %p156 = scmp.eq.s32.totalorder %s45, 1
      %p157 = por %p155, %p156
      %p158 = scmp.ne.s32.totalorder %s149, %s150
      %p159 = scmp.eq.s32.totalorder %s45, 0
      %p160 = por %p158, %p159
      %p161 = scmp.ne.s32.totalorder %s149, %s150
      %p162 = scmp.eq.s32.totalorder %s46, 1
      %p163 = por %p161, %p162
      %p165 = scmp.ne.s32.totalorder %s150, %s164
      %p166 = scmp.eq.s32.totalorder %s46, 0
      %p167 = por %p165, %p166
      %s169 = sadd.s32 %s168, 1
      %p172 = scmp.eq.s32.totalorder %s40, 1
      %p173 = scmp.ne.s32.totalorder %s168, %s170
      %p174 = scmp.eq.s32.totalorder %s40, 0
      %p175 = por %p173, %p174
      %p176 = scmp.ne.s32.totalorder %s168, %s170
      %p177 = scmp.eq.s32.totalorder %s45, 1
      %p178 = por %p176, %p177
      %p179 = scmp.ne.s32.totalorder %s170, %s171
      %p180 = scmp.eq.s32.totalorder %s45, 0
      %p181 = por %p179, %p180
      %p182 = scmp.ne.s32.totalorder %s170, %s171
      %p183 = scmp.eq.s32.totalorder %s46, 1
      %p184 = por %p182, %p183
      %p186 = scmp.ne.s32.totalorder %s171, %s185
      %p187 = scmp.eq.s32.totalorder %s46, 0
      %p188 = por %p186, %p187
      %s190 = sadd.s32 %s189, 1
      %p193 = scmp.eq.s32.totalorder %s40, 1
      %p194 = scmp.ne.s32.totalorder %s189, %s191
      %p195 = scmp.eq.s32.totalorder %s40, 0
      %p196 = por %p194, %p195
      %p197 = scmp.ne.s32.totalorder %s189, %s191
      %p198 = scmp.eq.s32.totalorder %s45, 1
      %p199 = por %p197, %p198
      %p200 = scmp.ne.s32.totalorder %s191, %s192
      %p201 = scmp.eq.s32.totalorder %s45, 0
      %p202 = por %p200, %p201
      %p203 = scmp.ne.s32.totalorder %s191, %s192
      %p204 = scmp.eq.s32.totalorder %s46, 1
      %p205 = por %p203, %p204
      %p207 = scmp.ne.s32.totalorder %s192, %s206
      %p208 = scmp.eq.s32.totalorder %s46, 0
      %p209 = por %p207, %p208
      %s211 = sadd.s32 %s210, 1
      %p214 = scmp.eq.s32.totalorder %s40, 1
      %p215 = scmp.ne.s32.totalorder %s210, %s212
      %p216 = scmp.eq.s32.totalorder %s40, 0
      %p217 = por %p215, %p216
      %p218 = scmp.ne.s32.totalorder %s210, %s212
      %p219 = scmp.eq.s32.totalorder %s45, 1
      %p220 = por %p218, %p219
      %p221 = scmp.ne.s32.totalorder %s212, %s213
      %p222 = scmp.eq.s32.totalorder %s45, 0
      %p223 = por %p221, %p222
      %p224 = scmp.ne.s32.totalorder %s212, %s213
      %p225 = scmp.eq.s32.totalorder %s46, 1
      %p226 = por %p224, %p225
      %p228 = scmp.ne.s32.totalorder %s213, %s227
      %p229 = scmp.eq.s32.totalorder %s46, 0
      %p230 = por %p228, %p229
      %s232 = sadd.s32 %s231, 1
      %p235 = scmp.eq.s32.totalorder %s40, 1
      %p236 = scmp.ne.s32.totalorder %s231, %s233
      %p237 = scmp.eq.s32.totalorder %s40, 0
      %p238 = por %p236, %p237
      %p239 = scmp.ne.s32.totalorder %s231, %s233
      %p240 = scmp.eq.s32.totalorder %s45, 1
      %p241 = por %p239, %p240
      %p242 = scmp.ne.s32.totalorder %s233, %s234
      %p243 = scmp.eq.s32.totalorder %s45, 0
      %p244 = por %p242, %p243
      %p245 = scmp.ne.s32.totalorder %s233, %s234
      %p246 = scmp.eq.s32.totalorder %s46, 1
      %p247 = por %p245, %p246
      %p249 = scmp.ne.s32.totalorder %s234, %s248
      %p250 = scmp.eq.s32.totalorder %s46, 0
      %p251 = por %p249, %p250
      %s253 = sadd.s32 %s252, 1
      %p256 = scmp.eq.s32.totalorder %s40, 1
      %p257 = scmp.ne.s32.totalorder %s252, %s254
      %p258 = scmp.eq.s32.totalorder %s40, 0
      %p259 = por %p257, %p258
      %p260 = scmp.ne.s32.totalorder %s252, %s254
      %p261 = scmp.eq.s32.totalorder %s45, 1
      %p262 = por %p260, %p261
      %p263 = scmp.ne.s32.totalorder %s254, %s255
      %p264 = scmp.eq.s32.totalorder %s45, 0
      %p265 = por %p263, %p264
      %p266 = scmp.ne.s32.totalorder %s254, %s255
      %p267 = scmp.eq.s32.totalorder %s46, 1
      %p268 = por %p266, %p267
      %p270 = scmp.ne.s32.totalorder %s255, %s269
      %p271 = scmp.eq.s32.totalorder %s46, 0
      %p272 = por %p270, %p271
      %s274 = sadd.s32 %s273, 1
      %p277 = scmp.eq.s32.totalorder %s40, 1
      %p278 = scmp.ne.s32.totalorder %s273, %s275
      %p279 = scmp.eq.s32.totalorder %s40, 0
      %p280 = por %p278, %p279
      %p281 = scmp.ne.s32.totalorder %s273, %s275
      %p282 = scmp.eq.s32.totalorder %s45, 1
      %p283 = por %p281, %p282
      %p284 = scmp.ne.s32.totalorder %s275, %s276
      %p285 = scmp.eq.s32.totalorder %s45, 0
      %p286 = por %p284, %p285
      %p287 = scmp.ne.s32.totalorder %s275, %s276
      %p288 = scmp.eq.s32.totalorder %s46, 1
      %p289 = por %p287, %p288
      %p291 = scmp.ne.s32.totalorder %s276, %s290
      %p292 = scmp.eq.s32.totalorder %s46, 0
      %p293 = por %p291, %p292
      %s295 = sadd.s32 %s294, 1
      %p298 = scmp.eq.s32.totalorder %s40, 1
      %p299 = scmp.ne.s32.totalorder %s294, %s296
      %p300 = scmp.eq.s32.totalorder %s40, 0
      %p301 = por %p299, %p300
      %p302 = scmp.ne.s32.totalorder %s294, %s296
      %p303 = scmp.eq.s32.totalorder %s45, 1
      %p304 = por %p302, %p303
      %p305 = scmp.ne.s32.totalorder %s296, %s297
      %p306 = scmp.eq.s32.totalorder %s45, 0
      %p307 = por %p305, %p306
      %p308 = scmp.ne.s32.totalorder %s296, %s297
      %p309 = scmp.eq.s32.totalorder %s46, 1
      %p310 = por %p308, %p309
      %p312 = scmp.ne.s32.totalorder %s297, %s311
      %p313 = scmp.eq.s32.totalorder %s46, 0
      %p314 = por %p312, %p313
      %s316 = sadd.s32 %s315, 1
      %p319 = scmp.eq.s32.totalorder %s40, 1
      %p320 = scmp.ne.s32.totalorder %s315, %s317
      %p321 = scmp.eq.s32.totalorder %s40, 0
      %p322 = por %p320, %p321
      %p323 = scmp.ne.s32.totalorder %s315, %s317
      %p324 = scmp.eq.s32.totalorder %s45, 1
      %p325 = por %p323, %p324
      %p326 = scmp.ne.s32.totalorder %s317, %s318
      %p327 = scmp.eq.s32.totalorder %s45, 0
      %p328 = por %p326, %p327
      %p329 = scmp.ne.s32.totalorder %s317, %s318
      %p330 = scmp.eq.s32.totalorder %s46, 1
      %p331 = por %p329, %p330
      %p333 = scmp.ne.s32.totalorder %s318, %s332
      %p334 = scmp.eq.s32.totalorder %s46, 0
      %p335 = por %p333, %p334
      %s336 = ssub.s32 %s40, %s47
      %p337 = scmp.eq.s32.totalorder %s336, 0
      %s339 = sadd.s32 %s338, 1
      %s340 = scalar_select %p337, %s338, %s339
      %p343 = pneg %p337
      %p344 = scmp.eq.s32.totalorder %s40, 1
      %p345 = por %p343, %p344
      %p346 = scmp.ne.s32.totalorder %s338, %s341
      %p347 = scmp.eq.s32.totalorder %s40, 0
      %p348 = por %p346, %p347
      %p349 = scmp.ne.s32.totalorder %s338, %s341
      %p350 = scmp.eq.s32.totalorder %s45, 1
      %p351 = por %p349, %p350
      %p352 = scmp.ne.s32.totalorder %s341, %s342
      %p353 = scmp.eq.s32.totalorder %s45, 0
      %p354 = por %p352, %p353
      %p355 = scmp.ne.s32.totalorder %s341, %s342
      %p356 = scmp.eq.s32.totalorder %s46, 1
      %p357 = por %p355, %p356
      %p359 = scmp.ne.s32.totalorder %s342, %s358
      %p360 = scmp.eq.s32.totalorder %s46, 0
      %p361 = por %p359, %p360
      %s362 = ssub.s32 %s40, %s47
      %p363 = scmp.eq.s32.totalorder %s362, 0
      %s365 = sadd.s32 %s364, 1
      %s366 = scalar_select %p363, %s364, %s365
      %p369 = pneg %p363
      %p370 = scmp.eq.s32.totalorder %s40, 1
      %p371 = por %p369, %p370
      %p372 = scmp.ne.s32.totalorder %s364, %s367
      %p373 = scmp.eq.s32.totalorder %s40, 0
      %p374 = por %p372, %p373
      %p375 = scmp.ne.s32.totalorder %s364, %s367
      %p376 = scmp.eq.s32.totalorder %s45, 1
      %p377 = por %p375, %p376
      %p378 = scmp.ne.s32.totalorder %s367, %s368
      %p379 = scmp.eq.s32.totalorder %s45, 0
      %p380 = por %p378, %p379
      %p381 = scmp.ne.s32.totalorder %s367, %s368
      %p382 = scmp.eq.s32.totalorder %s46, 1
      %p383 = por %p381, %p382
      %p385 = scmp.ne.s32.totalorder %s368, %s384
      %p386 = scmp.eq.s32.totalorder %s46, 0
      %p387 = por %p385, %p386
      %s388 = ssub.s32 %s40, %s47
      %p389 = scmp.eq.s32.totalorder %s388, 0
      %s391 = sadd.s32 %s390, 1
      %s392 = scalar_select %p389, %s390, %s391
      %p395 = pneg %p389
      %p396 = scmp.eq.s32.totalorder %s40, 1
      %p397 = por %p395, %p396
      %p398 = scmp.ne.s32.totalorder %s390, %s393
      %p399 = scmp.eq.s32.totalorder %s40, 0
      %p400 = por %p398, %p399
      %p401 = scmp.ne.s32.totalorder %s390, %s393
      %p402 = scmp.eq.s32.totalorder %s45, 1
      %p403 = por %p401, %p402
      %p404 = scmp.ne.s32.totalorder %s393, %s394
      %p405 = scmp.eq.s32.totalorder %s45, 0
      %p406 = por %p404, %p405
      %p407 = scmp.ne.s32.totalorder %s393, %s394
      %p408 = scmp.eq.s32.totalorder %s46, 1
      %p409 = por %p407, %p408
      %p411 = scmp.ne.s32.totalorder %s394, %s410
      %p412 = scmp.eq.s32.totalorder %s46, 0
      %p413 = por %p411, %p412
      %s414 = ssub.s32 %s40, %s47
      %p415 = scmp.eq.s32.totalorder %s414, 0
      %s417 = sadd.s32 %s416, 1
      %s418 = scalar_select %p415, %s416, %s417
      %p421 = pneg %p415
      %p422 = scmp.eq.s32.totalorder %s40, 1
      %p423 = por %p421, %p422
      %p424 = scmp.ne.s32.totalorder %s416, %s419
      %p425 = scmp.eq.s32.totalorder %s40, 0
      %p426 = por %p424, %p425
      %p427 = scmp.ne.s32.totalorder %s416, %s419
      %p428 = scmp.eq.s32.totalorder %s45, 1
      %p429 = por %p427, %p428
      %p430 = scmp.ne.s32.totalorder %s419, %s420
      %p431 = scmp.eq.s32.totalorder %s45, 0
      %p432 = por %p430, %p431
      %p433 = scmp.ne.s32.totalorder %s419, %s420
      %p434 = scmp.eq.s32.totalorder %s46, 1
      %p435 = por %p433, %p434
      %p437 = scmp.ne.s32.totalorder %s420, %s436
      %p438 = scmp.eq.s32.totalorder %s46, 0
      %p439 = por %p437, %p438
      %p440 = scmp.le.s32.totalorder 1, %s40
      %p441 = scmp.lt.s32.totalorder %s40, 3
      %p442 = pnand %p440, %p441
      %p443 = pneg %p442
      // Predicated region
      $region9: #{tpu_custom_call.1} parent=5 // pred_check
        _
      $region10: #{tpu_custom_call.1} parent=5 // pred_check_branch
        %445 = sbr.rel (%p442) target = $region12
      $region11: #{tpu_custom_call.1} parent=5 // pred_region
        %s446 = ssub.s32 %s40, 1
        // Predicated region
        $region13: #{tpu_custom_call.1} parent=11 // pred_check
          %p447 = pneg %p139
        $region14: #{tpu_custom_call.1} parent=11 // pred_check_branch
          %449 = sbr.rel (%p447) target = $region16
        $region15: #{tpu_custom_call.1} parent=11 // pred_region
          %s451 = ssub.s32 256, 256
          %452 = vsyncadd [#allocation6], %s451
          %s453 = sshll.u32 [#allocation7], 4
          %s454 = int_to_ptr.vmem [resolvable:$true] %s453
          %459 = dma.hbm_to_vmem [thread:$0]  %s3, 256, %s454, [#allocation6], 64, 64, 4
        $region16: #{tpu_custom_call.1} parent=11 // pred_fallthru
          _
        // Predicated region
        $region17: #{tpu_custom_call.1} parent=11 // pred_check
          %p460 = pneg %p160
        $region18: #{tpu_custom_call.1} parent=11 // pred_check_branch
          %462 = sbr.rel (%p460) target = $region20
        $region19: #{tpu_custom_call.1} parent=11 // pred_region
          %s464 = ssub.s32 16, 16
          %465 = vsyncadd [#allocation9], %s464
          %s467 = sshll.u32 [#allocation8], 4
          %s468 = int_to_ptr.vmem [resolvable:$true] %s467
          %470 = dma.hbm_to_vmem [thread:$0]  %s4, 16, %s468, [#allocation9]
        $region20: #{tpu_custom_call.1} parent=11 // pred_fallthru
          _
        // Predicated region
        $region21: #{tpu_custom_call.1} parent=11 // pred_check
          %p471 = pneg %p181
        $region22: #{tpu_custom_call.1} parent=11 // pred_check_branch
          %473 = sbr.rel (%p471) target = $region24
        $region23: #{tpu_custom_call.1} parent=11 // pred_region
          _
        $region24: #{tpu_custom_call.1} parent=11 // pred_fallthru
          _
        // Predicated region
        $region25: #{tpu_custom_call.1} parent=11 // pred_check
          %p474 = pneg %p202
        $region26: #{tpu_custom_call.1} parent=11 // pred_check_branch
          %476 = sbr.rel (%p474) target = $region28
        $region27: #{tpu_custom_call.1} parent=11 // pred_region
          %s478 = ssub.s32 16, 16
          %479 = vsyncadd [#allocation9], %s478
          %s481 = sshll.u32 [#allocation10], 4
          %s482 = int_to_ptr.vmem [resolvable:$true] %s481
          %484 = dma.hbm_to_vmem [thread:$0]  %s6, 16, %s482, [#allocation9]
        $region28: #{tpu_custom_call.1} parent=11 // pred_fallthru
          _
        // Predicated region
        $region29: #{tpu_custom_call.1} parent=11 // pred_check
          %p485 = pneg %p223
        $region30: #{tpu_custom_call.1} parent=11 // pred_check_branch
          %487 = sbr.rel (%p485) target = $region32
        $region31: #{tpu_custom_call.1} parent=11 // pred_region
          %s489 = ssub.s32 256, 256
          %490 = vsyncadd [#allocation12], %s489
          %s491 = sshll.u32 [#allocation11], 4
          %s492 = int_to_ptr.vmem [resolvable:$true] %s491
          %497 = dma.hbm_to_vmem [thread:$0]  %s7, 256, %s492, [#allocation12], 64, 64, 4
        $region32: #{tpu_custom_call.1} parent=11 // pred_fallthru
          _
        // Predicated region
        $region33: #{tpu_custom_call.1} parent=11 // pred_check
          %p498 = pneg %p244
        $region34: #{tpu_custom_call.1} parent=11 // pred_check_branch
          %500 = sbr.rel (%p498) target = $region36
        $region35: #{tpu_custom_call.1} parent=11 // pred_region
          %s502 = ssub.s32 16, 16
          %503 = vsyncadd [#allocation12], %s502
          %s505 = sshll.u32 [#allocation13], 4
          %s506 = int_to_ptr.vmem [resolvable:$true] %s505
          %508 = dma.hbm_to_vmem [thread:$0]  %s8, 16, %s506, [#allocation12]
        $region36: #{tpu_custom_call.1} parent=11 // pred_fallthru
          _
        // Predicated region
        $region37: #{tpu_custom_call.1} parent=11 // pred_check
          %p509 = pneg %p265
        $region38: #{tpu_custom_call.1} parent=11 // pred_check_branch
          %511 = sbr.rel (%p509) target = $region40
        $region39: #{tpu_custom_call.1} parent=11 // pred_region
          _
        $region40: #{tpu_custom_call.1} parent=11 // pred_fallthru
          _
        // Predicated region
        $region41: #{tpu_custom_call.1} parent=11 // pred_check
          %p512 = pneg %p286
        $region42: #{tpu_custom_call.1} parent=11 // pred_check_branch
          %514 = sbr.rel (%p512) target = $region44
        $region43: #{tpu_custom_call.1} parent=11 // pred_region
          _
        $region44: #{tpu_custom_call.1} parent=11 // pred_fallthru
          _
        // Predicated region
        $region45: #{tpu_custom_call.1} parent=11 // pred_check
          %p515 = pneg %p307
        $region46: #{tpu_custom_call.1} parent=11 // pred_check_branch
          %517 = sbr.rel (%p515) target = $region48
        $region47: #{tpu_custom_call.1} parent=11 // pred_region
          _
        $region48: #{tpu_custom_call.1} parent=11 // pred_fallthru
          _
        // Predicated region
        $region49: #{tpu_custom_call.1} parent=11 // pred_check
          %p518 = pneg %p328
        $region50: #{tpu_custom_call.1} parent=11 // pred_check_branch
          %520 = sbr.rel (%p518) target = $region52
        $region51: #{tpu_custom_call.1} parent=11 // pred_region
          _
        $region52: #{tpu_custom_call.1} parent=11 // pred_fallthru
          _
      $region12: #{tpu_custom_call.1} parent=5 // pred_fallthru
        _
      %p521 = scmp.lt.s32.totalorder %s40, 2
      // Predicated region
      $region53: #{tpu_custom_call.1} parent=5 // pred_check
        %p522 = pneg %p521
      $region54: #{tpu_custom_call.1} parent=5 // pred_check_branch
        %524 = sbr.rel (%p522) target = $region56
      $region55: #{tpu_custom_call.1} parent=5 // pred_region
        // Predicated region
        $region57: #{tpu_custom_call.1} parent=55 // pred_check
          %p525 = pneg %p60
        $region58: #{tpu_custom_call.1} parent=55 // pred_check_branch
          %527 = sbr.rel (%p525) target = $region60
        $region59: #{tpu_custom_call.1} parent=55 // pred_region
          %p528 = scmp.lt.s32.totalorder %s40, 1
          %s529 = scalar_select %p528, %s40, 1
          %s530 = smul.addr %s529, 2
          %s531 = smul.addr %s530, 4
          %s532 = scalar_lea.vmem %s0, %s531
        $region60: #{tpu_custom_call.1} parent=55 // pred_fallthru
          _
        // Predicated region
        $region61: #{tpu_custom_call.1} parent=55 // pred_check
          %p533 = pneg %p86
        $region62: #{tpu_custom_call.1} parent=55 // pred_check_branch
          %535 = sbr.rel (%p533) target = $region64
        $region63: #{tpu_custom_call.1} parent=55 // pred_region
          %s536 = sand.u32 %s76, 1
          %s537 = scalar_lea.sflag [#allocation3], %s536
          %s538 = sand.u32 %s76, 1
          %s539 = smul.addr %s538, 8
          %s540 = scalar_lea.vmem [#allocation2], %s539
          %s542 = ssub.s32 128, 128
          %543 = vsyncadd %s537, %s542
          %s544 = smul.addr %s40, 2
          %s545 = smul.addr %s544, 64
          %s546 = scalar_lea.hbm %s1, %s545
          %s547 = sshll.u32 %s540, 4
          %s548 = int_to_ptr.vmem [resolvable:$true] %s547
          %553 = dma.hbm_to_vmem [thread:$0]  %s546, 128, %s548, %s537, 64, 64, 4
        $region64: #{tpu_custom_call.1} parent=55 // pred_fallthru
          _
        // Predicated region
        $region65: #{tpu_custom_call.1} parent=55 // pred_check
          %p554 = pneg %p112
        $region66: #{tpu_custom_call.1} parent=55 // pred_check_branch
          %556 = sbr.rel (%p554) target = $region68
        $region67: #{tpu_custom_call.1} parent=55 // pred_region
          %s557 = sand.u32 %s40, 1
          %s558 = scalar_lea.sflag [#allocation6], %s557
          %s559 = sand.u32 %s102, 1
          %s560 = smul.addr %s559, 8
          %s561 = scalar_lea.vmem [#allocation5], %s560
          %s563 = ssub.s32 128, 128
          %564 = vsyncadd %s558, %s563
          %s565 = smul.addr %s40, 2
          %s566 = smul.addr %s565, 64
          %s567 = scalar_lea.hbm %s2, %s566
          %s568 = sshll.u32 %s561, 4
          %s569 = int_to_ptr.vmem [resolvable:$true] %s568
          %574 = dma.hbm_to_vmem [thread:$0]  %s567, 128, %s569, %s558, 64, 64, 4
        $region68: #{tpu_custom_call.1} parent=55 // pred_fallthru
          _
      $region56: #{tpu_custom_call.1} parent=5 // pred_fallthru
        _
      %p575 = scmp.le.s32.totalorder 1, %s40
      %p576 = scmp.lt.s32.totalorder %s40, 3
      %p577 = pnand %p575, %p576
      %p578 = pneg %p577
      // Predicated region
      $region69: #{tpu_custom_call.1} parent=5 // pred_check
        _
      $region70: #{tpu_custom_call.1} parent=5 // pred_check_branch
        %580 = sbr.rel (%p577) target = $region72
      $region71: #{tpu_custom_call.1} parent=5 // pred_region
        %s581 = ssub.s32 %s40, 1
        %s582 = sand.u32 %s79, 1
        %s583 = scalar_lea.sflag [#allocation3], %s582
        %s584 = sand.u32 %s79, 1
        %s585 = smul.addr %s584, 8
        %s586 = scalar_lea.vmem [#allocation2], %s585
        // Predicated region
        $region73: #{tpu_custom_call.1} parent=71 // pred_check
          %p587 = pneg %p92
        $region74: #{tpu_custom_call.1} parent=71 // pred_check_branch
          %589 = sbr.rel (%p587) target = $region76
        $region75: #{tpu_custom_call.1} parent=71 // pred_region
          %590 = dma.done %s583, 128
        $region76: #{tpu_custom_call.1} parent=71 // pred_fallthru
          _
        %s591 = sand.u32 %s45, 1
        %s592 = scalar_lea.sflag [#allocation6], %s591
        %s593 = sand.u32 %s105, 1
        %s594 = smul.addr %s593, 8
        %s595 = scalar_lea.vmem [#allocation5], %s594
        // Predicated region
        $region77: #{tpu_custom_call.1} parent=71 // pred_check
          %p596 = pneg %p118
        $region78: #{tpu_custom_call.1} parent=71 // pred_check_branch
          %598 = sbr.rel (%p596) target = $region80
        $region79: #{tpu_custom_call.1} parent=71 // pred_region
          %599 = dma.done %s592, 128
        $region80: #{tpu_custom_call.1} parent=71 // pred_fallthru
          _
        // Predicated region
        $region81: #{tpu_custom_call.1} parent=71 // pred_check
          %p600 = pneg %p139
        $region82: #{tpu_custom_call.1} parent=71 // pred_check_branch
          %602 = sbr.rel (%p600) target = $region84
        $region83: #{tpu_custom_call.1} parent=71 // pred_region
          %603 = dma.done [#allocation6], 256
        $region84: #{tpu_custom_call.1} parent=71 // pred_fallthru
          _
        // Predicated region
        $region85: #{tpu_custom_call.1} parent=71 // pred_check
          %p604 = pneg %p160
        $region86: #{tpu_custom_call.1} parent=71 // pred_check_branch
          %606 = sbr.rel (%p604) target = $region88
        $region87: #{tpu_custom_call.1} parent=71 // pred_region
          %607 = dma.done [#allocation9], 16
        $region88: #{tpu_custom_call.1} parent=71 // pred_fallthru
          _
        // Predicated region
        $region89: #{tpu_custom_call.1} parent=71 // pred_check
          %p608 = pneg %p202
        $region90: #{tpu_custom_call.1} parent=71 // pred_check_branch
          %610 = sbr.rel (%p608) target = $region92
        $region91: #{tpu_custom_call.1} parent=71 // pred_region
          %611 = dma.done [#allocation9], 16
        $region92: #{tpu_custom_call.1} parent=71 // pred_fallthru
          _
        // Predicated region
        $region93: #{tpu_custom_call.1} parent=71 // pred_check
          %p612 = pneg %p223
        $region94: #{tpu_custom_call.1} parent=71 // pred_check_branch
          %614 = sbr.rel (%p612) target = $region96
        $region95: #{tpu_custom_call.1} parent=71 // pred_region
          %615 = dma.done [#allocation12], 256
        $region96: #{tpu_custom_call.1} parent=71 // pred_fallthru
          _
        // Predicated region
        $region97: #{tpu_custom_call.1} parent=71 // pred_check
          %p616 = pneg %p244
        $region98: #{tpu_custom_call.1} parent=71 // pred_check_branch
          %618 = sbr.rel (%p616) target = $region100
        $region99: #{tpu_custom_call.1} parent=71 // pred_region
          %619 = dma.done [#allocation12], 16
        $region100: #{tpu_custom_call.1} parent=71 // pred_fallthru
          _
        %p620 = scmp.lt.s32.totalorder %s45, 1
        %s621 = scalar_select %p620, %s45, 1
        %s622 = smul.addr %s621, 2
        %s623 = smul.addr %s622, 4
        %s624 = scalar_lea.vmem %s0, %s623
        %p625 = pneg %p66
        %p626 = pneg %p63
        %s627 = sand.u32 %s79, 1
        %s628 = scalar_lea.sflag [#allocation3], %s627
        %s629 = sand.u32 %s79, 1
        %s630 = smul.addr %s629, 8
        %s631 = scalar_lea.vmem [#allocation2], %s630
        %p632 = pneg %p92
        %p633 = pneg %p89
        %s634 = sand.u32 %s45, 1
        %s635 = scalar_lea.sflag [#allocation6], %s634
        %s636 = sand.u32 %s105, 1
        %s637 = smul.addr %s636, 8
        %s638 = scalar_lea.vmem [#allocation5], %s637
        %p639 = pneg %p118
        %p640 = pneg %p115
        %p641 = pneg %p139
        %p642 = pneg %p136
        %p643 = pneg %p160
        %p644 = pneg %p157
        %p645 = pneg %p181
        %p646 = pneg %p178
        %p647 = pneg %p202
        %p648 = pneg %p199
        %p649 = pneg %p223
        %p650 = pneg %p220
        %p651 = pneg %p244
        %p652 = pneg %p241
        %p653 = pneg %p265
        %p654 = pneg %p262
        %p655 = pneg %p286
        %p656 = pneg %p283
        %p657 = pneg %p307
        %p658 = pneg %p304
        %p659 = pneg %p328
        %p660 = pneg %p325
        %p661 = pneg %p354
        %p662 = pneg %p351
        %s663 = sand.u32 %s341, 1
        %s664 = scalar_lea.sflag [#allocation4], %s663
        %s665 = sand.u32 %s341, 1
        %s666 = smul.addr %s665, 16
        %s667 = scalar_lea.vmem [#allocation14], %s666
        %p668 = pneg %p380
        %p669 = pneg %p377
        %s670 = sand.u32 %s45, 1
        %s671 = scalar_lea.sflag [#allocation16], %s670
        %s672 = sand.u32 %s367, 1
        %s673 = smul.addr %s672, 64
        %s674 = scalar_lea.vmem [#allocation15], %s673
        %p675 = pneg %p406
        %p676 = pneg %p403
        %s677 = sand.u32 %s45, 1
        %s678 = scalar_lea.sflag [#allocation16], %s677
        %s679 = sand.u32 %s393, 1
        %s680 = smul.addr %s679, 64
        %s681 = scalar_lea.vmem [#allocation17], %s680
        %p682 = pneg %p432
        %p683 = pneg %p429
        %s684 = sand.u32 %s419, 1
        %s685 = scalar_lea.sflag [#allocation19], %s684
        %s686 = sand.u32 %s419, 1
        %s687 = smul.addr %s686, 64
        %s688 = scalar_lea.vmem [#allocation18], %s687
        %p689 = scmp.lt.s32.totalorder %s45, 1
        %s690 = scalar_select %p689, %s45, 1
        %s691 = smul.addr %s690, 2
        %s692 = smul.addr %s691, 4
        %s693 = scalar_lea.vmem %s0, %s692
        %v695 = vld [vmem:[%s693] sm:$0xf]
        %v696 = vld [vmem:[%s693 + $0x4] sm:$0xf]
        %v697 = vld [vmem:[%s586] sm:$0xf]
        %v698 = vld [vmem:[%s586 + $0x4] sm:$0xf]
        %v699 = vld [vmem:[%s595] sm:$0xf]
        %v700 = vld [vmem:[%s595 + $0x4] sm:$0xf]
        %v701 = vld [vmem:[#allocation7] sm:$0xf]
        %v702 = vld [vmem:[#allocation7 + $0x4] sm:$0xf]
        %v703 = vld [vmem:[#allocation7 + $0x8] sm:$0xf]
        %v704 = vld [vmem:[#allocation7 + $0xc] sm:$0xf]
        %v705 = vld [vmem:[#allocation8] sm:$0x1]
        %v707 = vlaneseq
        %v708 = vshrl.u32 %v707, 7
        %v709 = vsub.s32 0, %v708
        %v710 = vrot.slane %v705, %v709
        %v714 = vunpack.c.l.b16 %v695
        %v715 = vunpack.c.l.b16 %v696
        %v716 = vpack.c.b16 %v715, %v714
        %v721 = vunpack.c.l.b16 %v701
        %v722 = vunpack.c.l.b16 %v702
        %v723 = vunpack.c.l.b16 %v703
        %v724 = vunpack.c.l.b16 %v704
        %v725 = vpack.c.b16 %v722, %v721
        %v726 = vpack.c.b16 %v724, %v723
        %vm729 = vcmask 261120
        %v731 = vsel %vm729, %v716, 0
        %733 = vmatprep.subr.bf16.mxu0 0
        %734 = vmatpush1.bf16.msra.mxu0 %v725
        %735 = vmatprep.subr.bf16.mxu0 0
        %736 = vmatpush1.bf16.msra.mxu0 %v726
        %737 = vmatprep.subr.bf16.mxu0 0
        %738 = vmatpush1.bf16.msra.mxu0 0
        %739 = vmatprep.subr.bf16.mxu0 0
        %740 = vmatpush1.bf16.msra.mxu0 0
        %741 = vmatprep.subr.bf16.mxu0 0
        %742 = vmatpush1.bf16.msra.mxu0 0
        %743 = vmatprep.subr.bf16.mxu0 0
        %744 = vmatpush1.bf16.msra.mxu0 0
        %745 = vmatprep.subr.bf16.mxu0 0
        %746 = vmatpush1.bf16.msra.mxu0 0
        %747 = vmatprep.subr.bf16.mxu0 0
        %748 = vmatpush1.bf16.msra.mxu0 0
        %749 = vmatprep.subr.bf16.mxu0 0
        %750 = vmatpush1.bf16.msra.mxu0 0
        %751 = vmatprep.subr.bf16.mxu0 0
        %752 = vmatpush1.bf16.msra.mxu0 0
        %753 = vmatprep.subr.bf16.mxu0 0
        %754 = vmatpush1.bf16.msra.mxu0 0
        %755 = vmatprep.subr.bf16.mxu0 0
        %756 = vmatpush1.bf16.msra.mxu0 0
        %757 = vmatprep.subr.bf16.mxu0 0
        %758 = vmatpush1.bf16.msra.mxu0 0
        %759 = vmatprep.subr.bf16.mxu0 0
        %760 = vmatpush1.bf16.msra.mxu0 0
        %761 = vmatprep.subr.bf16.mxu0 0
        %762 = vmatpush1.bf16.msra.mxu0 0
        %763 = vmatprep.subr.bf16.mxu0 0
        %764 = vmatpush1.bf16.msra.mxu0 0
        %765 = vmatprep.mubr.bf16.mxu0 0
        %766 = vmatmul.mubr.bf16.gmra.mrb[0].mxu0 %v731
        %v767 = vpop.f32.mrb[0].mxu0
        %v768 = vadd.f32 %v710, %v767
        %v769 = vpop.f32.mrb[0].mxu0
        %v770 = vpop.f32.mrb[0].mxu0
        %v771 = vadd.f32 %v710, %v770
        %v772 = vpop.f32.mrb[0].mxu0
        %773 = vdwg.mxu0
        %v774 = vld [vmem:[%s5] sm:$0xf]
        %v775 = vld [vmem:[%s5 + $0x4] sm:$0xf]
        %v776 = vld [vmem:[%s5 + $0x8] sm:$0xf]
        %v777 = vld [vmem:[%s5 + $0xc] sm:$0xf]
        %v778 = vld [vmem:[#allocation10] sm:$0x1]
        %v780 = vlaneseq
        %v781 = vshrl.u32 %v780, 7
        %v782 = vsub.s32 0, %v781
        %v783 = vrot.slane %v778, %v782
        %v787 = vunpack.c.l.b16 %v697
        %v788 = vunpack.c.l.b16 %v698
        %v789 = vpack.c.b16 %v788, %v787
        %v794 = vunpack.c.l.b16 %v774
        %v795 = vunpack.c.l.b16 %v775
        %v796 = vunpack.c.l.b16 %v776
        %v797 = vunpack.c.l.b16 %v777
        %v798 = vpack.c.b16 %v795, %v794
        %v799 = vpack.c.b16 %v797, %v796
        %v803 = vsel %vm729, %v789, 0
        %805 = vmatprep.subr.bf16.mxu0 0
        %806 = vmatpush1.bf16.msra.mxu0 %v798
        %807 = vmatprep.subr.bf16.mxu0 0
        %808 = vmatpush1.bf16.msra.mxu0 %v799
        %809 = vmatprep.subr.bf16.mxu0 0
        %810 = vmatpush1.bf16.msra.mxu0 0
        %811 = vmatprep.subr.bf16.mxu0 0
        %812 = vmatpush1.bf16.msra.mxu0 0
        %813 = vmatprep.subr.bf16.mxu0 0
        %814 = vmatpush1.bf16.msra.mxu0 0
        %815 = vmatprep.subr.bf16.mxu0 0
        %816 = vmatpush1.bf16.msra.mxu0 0
        %817 = vmatprep.subr.bf16.mxu0 0
        %818 = vmatpush1.bf16.msra.mxu0 0
        %819 = vmatprep.subr.bf16.mxu0 0
        %820 = vmatpush1.bf16.msra.mxu0 0
        %821 = vmatprep.subr.bf16.mxu0 0
        %822 = vmatpush1.bf16.msra.mxu0 0
        %823 = vmatprep.subr.bf16.mxu0 0
        %824 = vmatpush1.bf16.msra.mxu0 0
        %825 = vmatprep.subr.bf16.mxu0 0
        %826 = vmatpush1.bf16.msra.mxu0 0
        %827 = vmatprep.subr.bf16.mxu0 0
        %828 = vmatpush1.bf16.msra.mxu0 0
        %829 = vmatprep.subr.bf16.mxu0 0
        %830 = vmatpush1.bf16.msra.mxu0 0
        %831 = vmatprep.subr.bf16.mxu0 0
        %832 = vmatpush1.bf16.msra.mxu0 0
        %833 = vmatprep.subr.bf16.mxu0 0
        %834 = vmatpush1.bf16.msra.mxu0 0
        %835 = vmatprep.subr.bf16.mxu0 0
        %836 = vmatpush1.bf16.msra.mxu0 0
        %837 = vmatprep.mubr.bf16.mxu0 0
        %838 = vmatmul.mubr.bf16.gmra.mrb[0].mxu0 %v803
        %v839 = vpop.f32.mrb[0].mxu0
        %v840 = vadd.f32 %v783, %v839
        %v841 = vpop.f32.mrb[0].mxu0
        %v842 = vpop.f32.mrb[0].mxu0
        %v843 = vadd.f32 %v783, %v842
        %v844 = vpop.f32.mrb[0].mxu0
        %845 = vdwg.mxu0
        %v846 = vld [vmem:[#allocation11] sm:$0xf]
        %v847 = vld [vmem:[#allocation11 + $0x4] sm:$0xf]
        %v848 = vld [vmem:[#allocation11 + $0x8] sm:$0xf]
        %v849 = vld [vmem:[#allocation11 + $0xc] sm:$0xf]
        %v850 = vld [vmem:[#allocation13] sm:$0x1]
        %v852 = vlaneseq
        %v853 = vshrl.u32 %v852, 7
        %v854 = vsub.s32 0, %v853
        %v855 = vrot.slane %v850, %v854
        %v859 = vunpack.c.l.b16 %v699
        %v860 = vunpack.c.l.b16 %v700
        %v861 = vpack.c.b16 %v860, %v859
        %v866 = vunpack.c.l.b16 %v846
        %v867 = vunpack.c.l.b16 %v847
        %v868 = vunpack.c.l.b16 %v848
        %v869 = vunpack.c.l.b16 %v849
        %v870 = vpack.c.b16 %v867, %v866
        %v871 = vpack.c.b16 %v869, %v868
        %v875 = vsel %vm729, %v861, 0
        %877 = vmatprep.subr.bf16.mxu0 0
        %878 = vmatpush1.bf16.msra.mxu0 %v870
        %879 = vmatprep.subr.bf16.mxu0 0
        %880 = vmatpush1.bf16.msra.mxu0 %v871
        %881 = vmatprep.subr.bf16.mxu0 0
        %882 = vmatpush1.bf16.msra.mxu0 0
        %883 = vmatprep.subr.bf16.mxu0 0
        %884 = vmatpush1.bf16.msra.mxu0 0
        %885 = vmatprep.subr.bf16.mxu0 0
        %886 = vmatpush1.bf16.msra.mxu0 0
        %887 = vmatprep.subr.bf16.mxu0 0
        %888 = vmatpush1.bf16.msra.mxu0 0
        %889 = vmatprep.subr.bf16.mxu0 0
        %890 = vmatpush1.bf16.msra.mxu0 0
        %891 = vmatprep.subr.bf16.mxu0 0
        %892 = vmatpush1.bf16.msra.mxu0 0
        %893 = vmatprep.subr.bf16.mxu0 0
        %894 = vmatpush1.bf16.msra.mxu0 0
        %895 = vmatprep.subr.bf16.mxu0 0
        %896 = vmatpush1.bf16.msra.mxu0 0
        %897 = vmatprep.subr.bf16.mxu0 0
        %898 = vmatpush1.bf16.msra.mxu0 0
        %899 = vmatprep.subr.bf16.mxu0 0
        %900 = vmatpush1.bf16.msra.mxu0 0
        %901 = vmatprep.subr.bf16.mxu0 0
        %902 = vmatpush1.bf16.msra.mxu0 0
        %903 = vmatprep.subr.bf16.mxu0 0
        %904 = vmatpush1.bf16.msra.mxu0 0
        %905 = vmatprep.subr.bf16.mxu0 0
        %906 = vmatpush1.bf16.msra.mxu0 0
        %907 = vmatprep.subr.bf16.mxu0 0
        %908 = vmatpush1.bf16.msra.mxu0 0
        %909 = vmatprep.mubr.bf16.mxu0 0
        %910 = vmatmul.mubr.bf16.gmra.mrb[0].mxu0 %v875
        %v911 = vpop.f32.mrb[0].mxu0
        %v912 = vadd.f32 %v855, %v911
        %v913 = vpop.f32.mrb[0].mxu0
        %v914 = vpop.f32.mrb[0].mxu0
        %v915 = vadd.f32 %v855, %v914
        %v916 = vpop.f32.mrb[0].mxu0
        %917 = vdwg.mxu0
        %v918 = vld [vmem:[%s9] sm:$0xf]
        %v919 = vld [vmem:[%s9 + $0x4] sm:$0xf]
        %v920 = vld [vmem:[%s9 + $0x8] sm:$0xf]
        %v921 = vld [vmem:[%s9 + $0xc] sm:$0xf]
        %v922 = vld [vmem:[%s10] sm:$0x1]
        %v924 = vlaneseq
        %v925 = vshrl.u32 %v924, 7
        %v926 = vsub.s32 0, %v925
        %v927 = vrot.slane %v922, %v926
        %v933 = vunpack.c.l.b16 %v918
        %v934 = vunpack.c.l.b16 %v919
        %v935 = vunpack.c.l.b16 %v920
        %v936 = vunpack.c.l.b16 %v921
        %v937 = vpack.c.b16 %v934, %v933
        %v938 = vpack.c.b16 %v936, %v935
        %941 = vmatprep.subr.bf16.mxu0 0
        %942 = vmatpush1.bf16.msra.mxu0 %v937
        %943 = vmatprep.subr.bf16.mxu0 0
        %944 = vmatpush1.bf16.msra.mxu0 %v938
        %945 = vmatprep.subr.bf16.mxu0 0
        %946 = vmatpush1.bf16.msra.mxu0 0
        %947 = vmatprep.subr.bf16.mxu0 0
        %948 = vmatpush1.bf16.msra.mxu0 0
        %949 = vmatprep.subr.bf16.mxu0 0
        %950 = vmatpush1.bf16.msra.mxu0 0
        %951 = vmatprep.subr.bf16.mxu0 0
        %952 = vmatpush1.bf16.msra.mxu0 0
        %953 = vmatprep.subr.bf16.mxu0 0
        %954 = vmatpush1.bf16.msra.mxu0 0
        %955 = vmatprep.subr.bf16.mxu0 0
        %956 = vmatpush1.bf16.msra.mxu0 0
        %957 = vmatprep.subr.bf16.mxu0 0
        %958 = vmatpush1.bf16.msra.mxu0 0
        %959 = vmatprep.subr.bf16.mxu0 0
        %960 = vmatpush1.bf16.msra.mxu0 0
        %961 = vmatprep.subr.bf16.mxu0 0
        %962 = vmatpush1.bf16.msra.mxu0 0
        %963 = vmatprep.subr.bf16.mxu0 0
        %964 = vmatpush1.bf16.msra.mxu0 0
        %965 = vmatprep.subr.bf16.mxu0 0
        %966 = vmatpush1.bf16.msra.mxu0 0
        %967 = vmatprep.subr.bf16.mxu0 0
        %968 = vmatpush1.bf16.msra.mxu0 0
        %969 = vmatprep.subr.bf16.mxu0 0
        %970 = vmatpush1.bf16.msra.mxu0 0
        %971 = vmatprep.subr.bf16.mxu0 0
        %972 = vmatpush1.bf16.msra.mxu0 0
        %973 = vmatprep.mubr.bf16.mxu0 0
        %974 = vmatmul.mubr.bf16.gmra.mrb[0].mxu0 %v731
        %v975 = vpop.f32.mrb[0].mxu0
        %v976 = vadd.f32 %v927, %v975
        %v977 = vpop.f32.mrb[0].mxu0
        %v978 = vpop.f32.mrb[0].mxu0
        %v979 = vadd.f32 %v927, %v978
        %v980 = vpop.f32.mrb[0].mxu0
        %981 = vdwg.mxu0
        %v982 = vmul.f32 %v768, 0.35355338
        %v983 = vmul.f32 %v771, 0.35355338
        %v984 = vmul.f32 %v976, 5.0
        %v985 = vmul.f32 %v979, 5.0
        %v986 = vxor.u32 %v984, 2147483648
        %v987 = vxor.u32 %v985, 2147483648
        %v988 = vmul.f32 %v986, 1.442695
        %v989 = vpow.pop %v988
        %v990 = vmul.f32 %v987, 1.442695
        %v991 = vpow.pop %v990
        %v992 = vadd.f32 %v989, 1.0
        %v993 = vadd.f32 %v991, 1.0
        %v994 = vrcp.pop %v992
        %v995 = vmul.f32 1.0, %v994
        %v996 = vrcp.pop %v993
        %v997 = vmul.f32 1.0, %v996
        %v998 = vadd.f32 %v995, 1e-05
        %v999 = vadd.f32 %v997, 1e-05
        %v1000 = vmul.f32 %v998, 1.0986123
        %v1001 = vmul.f32 %v999, 1.0986123
        %v1002 = vmul.f32 %v1000, 1.442695
        %v1003 = vpow.pop %v1002
        %v1004 = vmul.f32 %v1001, 1.442695
        %v1005 = vpow.pop %v1004
        %v1006 = vsub.f32 %v1003, 1.0
        %v1007 = vsub.f32 %v1005, 1.0
        %v1008 = vlaneseq
        %v1009 = vshrl.u32 %v1008, 7
        %v1010 = vadd.s32 %v1009, 8
        %v1011 = vlaneseq
        %v1012 = vand.u32 %v1011, 127
        %v1013 = vsub.s32 %v1009, %v1012
        %v1014 = vsub.s32 %v1010, %v1012
        %v1015 = vmul.u32 %v1013, %v1013
        %v1016 = vmul.u32 %v1014, %v1014
        %v1017 = vcvt.s32.f32 %v1015
        %v1018 = vcvt.s32.f32 %v1016
        %v1019 = vpack.c.bf16 %v983, %v982
        %v1020 = vpack.c.bf16 %v843, %v840
        %v1021 = vpack.c.bf16 %v915, %v912
        %vm1022 = vcmask 64512
        %v1024 = vsel %vm1022, %v1019, 0
        %v1027 = vsel %vm1022, %v1020, 0
        %1029 = vmatprep.subr.bf16.mxu0 0
        %1030 = vmatpush1.bf16.xpose.msra.mxu0 %v1027
        %1031 = vmatprep.subr.bf16.mxu0 0
        %1032 = vmatpush1.bf16.xpose.msra.mxu0 0
        %1033 = vmatprep.subr.bf16.mxu0 0
        %1034 = vmatpush1.bf16.xpose.msra.mxu0 0
        %1035 = vmatprep.subr.bf16.mxu0 0
        %1036 = vmatpush1.bf16.xpose.msra.mxu0 0
        %1037 = vmatprep.subr.bf16.mxu0 0
        %1038 = vmatpush1.bf16.xpose.msra.mxu0 0
        %1039 = vmatprep.subr.bf16.mxu0 0
        %1040 = vmatpush1.bf16.xpose.msra.mxu0 0
        %1041 = vmatprep.subr.bf16.mxu0 0
        %1042 = vmatpush1.bf16.xpose.msra.mxu0 0
        %1043 = vmatprep.subr.bf16.mxu0 0
        %1044 = vmatpush1.bf16.xpose.msra.mxu0 0
        %1045 = vmatprep.subr.bf16.mxu0 0
        %1046 = vmatpush1.bf16.xpose.msra.mxu0 0
        %1047 = vmatprep.subr.bf16.mxu0 0
        %1048 = vmatpush1.bf16.xpose.msra.mxu0 0
        %1049 = vmatprep.subr.bf16.mxu0 0
        %1050 = vmatpush1.bf16.xpose.msra.mxu0 0
        %1051 = vmatprep.subr.bf16.mxu0 0
        %1052 = vmatpush1.bf16.xpose.msra.mxu0 0
        %1053 = vmatprep.subr.bf16.mxu0 0
        %1054 = vmatpush1.bf16.xpose.msra.mxu0 0
        %1055 = vmatprep.subr.bf16.mxu0 0
        %1056 = vmatpush1.bf16.xpose.msra.mxu0 0
        %1057 = vmatprep.subr.bf16.mxu0 0
        %1058 = vmatpush1.bf16.xpose.msra.mxu0 0
        %1059 = vmatprep.subr.bf16.mxu0 0
        %1060 = vmatpush1.bf16.xpose.msra.mxu0 0
        %1061 = vmatprep.mubr.bf16.mxu0 0
        %1062 = vmatmul.mubr.bf16.gmra.mrb[0].mxu0 %v1024
        %v1063 = vpop.f32.mrb[0].mxu0
        %v1064 = vadd.f32 0.0, %v1063
        %v1065 = vpop.f32.mrb[0].mxu0
        %v1066 = vpop.f32.mrb[0].mxu0
        %v1067 = vadd.f32 0.0, %v1066
        %v1068 = vpop.f32.mrb[0].mxu0
        %1069 = vdwg.mxu0
        %vm1070 = vcmask 130048
        %v1071 = vsel %vm1070, %v1064, -inf
        %1072 = vmax.xlane.f32.xlu0 %v1071
        %v1073 = vpop.xlane.xlu0 %1072
        %v1074 = vsel %vm1070, %v1067, -inf
        %1075 = vmax.xlane.f32.xlu0 %v1074
        %v1076 = vpop.xlane.xlu0 %1075
        %v1077 = vsub.f32 %v1064, %v1073
        %v1078 = vsub.f32 %v1067, %v1076
        %v1079 = vmul.f32 %v1077, 1.442695
        %v1080 = vpow.pop %v1079
        %v1081 = vmul.f32 %v1078, 1.442695
        %v1082 = vpow.pop %v1081
        %v1083 = vsel %vm1070, %v1080, 0.0
        %1084 = vadd.xlane.f32.xlu0 %v1083
        %v1085 = vpop.xlane.xlu0 %1084
        %v1086 = vsel %vm1070, %v1082, 0.0
        %1087 = vadd.xlane.f32.xlu0 %v1086
        %v1088 = vpop.xlane.xlu0 %1087
        %v1089 = vrcp.pop %v1085
        %v1090 = vrcp.pop %v1088
        %v1091 = vmul.f32 %v1080, %v1089
        %v1092 = vmul.f32 %v1082, %v1090
        %1093 = vst.msk [vmem:[%s674] sm:$0xff] %vm1070, %v1091
        %1094 = vst.msk [vmem:[%s674 + $0x8] sm:$0xff] %vm1070, %v1092
        %v1095 = vpack.c.bf16 %v1092, %v1091
        %v1097 = vsel %vm1070, %v1095, 0
        %1099 = vmatprep.subr.bf16.mxu0 0
        %1100 = vmatpush1.bf16.msra.mxu0 %v1021
        %1101 = vmatprep.subr.bf16.mxu0 0
        %1102 = vmatpush1.bf16.msra.mxu0 0
        %1103 = vmatprep.subr.bf16.mxu0 0
        %1104 = vmatpush1.bf16.msra.mxu0 0
        %1105 = vmatprep.subr.bf16.mxu0 0
        %1106 = vmatpush1.bf16.msra.mxu0 0
        %1107 = vmatprep.subr.bf16.mxu0 0
        %1108 = vmatpush1.bf16.msra.mxu0 0
        %1109 = vmatprep.subr.bf16.mxu0 0
        %1110 = vmatpush1.bf16.msra.mxu0 0
        %1111 = vmatprep.subr.bf16.mxu0 0
        %1112 = vmatpush1.bf16.msra.mxu0 0
        %1113 = vmatprep.subr.bf16.mxu0 0
        %1114 = vmatpush1.bf16.msra.mxu0 0
        %1115 = vmatprep.subr.bf16.mxu0 0
        %1116 = vmatpush1.bf16.msra.mxu0 0
        %1117 = vmatprep.subr.bf16.mxu0 0
        %1118 = vmatpush1.bf16.msra.mxu0 0
        %1119 = vmatprep.subr.bf16.mxu0 0
        %1120 = vmatpush1.bf16.msra.mxu0 0
        %1121 = vmatprep.subr.bf16.mxu0 0
        %1122 = vmatpush1.bf16.msra.mxu0 0
        %1123 = vmatprep.subr.bf16.mxu0 0
        %1124 = vmatpush1.bf16.msra.mxu0 0
        %1125 = vmatprep.subr.bf16.mxu0 0
        %1126 = vmatpush1.bf16.msra.mxu0 0
        %1127 = vmatprep.subr.bf16.mxu0 0
        %1128 = vmatpush1.bf16.msra.mxu0 0
        %1129 = vmatprep.subr.bf16.mxu0 0
        %1130 = vmatpush1.bf16.msra.mxu0 0
        %1131 = vmatprep.mubr.bf16.mxu0 0
        %1132 = vmatmul.mubr.bf16.gmra.mrb[0].mxu0 %v1097
        %v1133 = vpop.f32.mrb[0].mxu0
        %v1134 = vadd.f32 0.0, %v1133
        %v1135 = vpop.f32.mrb[0].mxu0
        %v1136 = vpop.f32.mrb[0].mxu0
        %v1137 = vadd.f32 0.0, %v1136
        %v1138 = vpop.f32.mrb[0].mxu0
        %1139 = vdwg.mxu0
        %v1140 = vpack.c.bf16 %v1137, %v1134
        %v1141 = vrcp.pop %v1006
        %v1142 = vmul.f32 1.0, %v1141
        %v1143 = vrcp.pop %v1007
        %v1144 = vmul.f32 1.0, %v1143
        %v1145 = vmul.f32 %v1142, 0.3989423
        %v1146 = vmul.f32 %v1144, 0.3989423
        %v1147 = vmul.f32 %v1017, -0.5
        %v1148 = vmul.f32 %v1018, -0.5
        %v1149 = vmul.f32 %v1142, %v1142
        %v1150 = vmul.f32 %v1144, %v1144
        %1152 = vset.pattern.permute.xlu0 0
        %1153 = vperm.xlu0 %1152, %v1149
        %v1154 = vpop.permute.xlu0 %1153
        %1157 = vset.pattern.permute.xlu0 0
        %1158 = vperm.xlu0 %1157, %v1150
        %v1159 = vpop.permute.xlu0 %1158
        %v1161 = vmul.f32 %v1147, %v1154
        %v1162 = vmul.f32 %v1148, %v1159
        %v1163 = vmul.f32 %v1161, 1.442695
        %v1164 = vpow.pop %v1163
        %v1165 = vmul.f32 %v1162, 1.442695
        %v1166 = vpow.pop %v1165
        %1168 = vset.pattern.permute.xlu0 0
        %1169 = vperm.xlu0 %1168, %v1145
        %v1170 = vpop.permute.xlu0 %1169
        %1173 = vset.pattern.permute.xlu0 0
        %1174 = vperm.xlu0 %1173, %v1146
        %v1175 = vpop.permute.xlu0 %1174
        %v1177 = vmul.f32 %v1170, %v1164
        %v1178 = vmul.f32 %v1175, %v1166
        %1179 = vst.msk [vmem:[%s681] sm:$0xff] %vm1070, %v1177
        %1180 = vst.msk [vmem:[%s681 + $0x8] sm:$0xff] %vm1070, %v1178
        %1182 = vset.pattern.permute.xlu0 0
        %1183 = vperm.xlu0 %1182, %v1006
        %v1184 = vpop.permute.xlu0 %1183
        %1187 = vset.pattern.permute.xlu0 0
        %1188 = vperm.xlu0 %1187, %v1007
        %v1189 = vpop.permute.xlu0 %1188
        %1191 = vst.msk [vmem:[%s688] sm:$0xff] %vm1070, %v1184
        %1192 = vst.msk [vmem:[%s688 + $0x8] sm:$0xff] %vm1070, %v1189
        %1194 = vrot.lane.b32.xlu0 %v1019, 120
        %v1195 = vpop.permute.xlu0 %1194
        %1197 = vrot.lane.b32.xlu0 %v1020, 120
        %v1198 = vpop.permute.xlu0 %1197
        %v1200 = vsel %vm1022, %v1195, 0
        %v1203 = vsel %vm1022, %v1198, 0
        %1205 = vmatprep.subr.bf16.mxu0 0
        %1206 = vmatpush1.bf16.xpose.msra.mxu0 %v1203
        %1207 = vmatprep.subr.bf16.mxu0 0
        %1208 = vmatpush1.bf16.xpose.msra.mxu0 0
        %1209 = vmatprep.subr.bf16.mxu0 0
        %1210 = vmatpush1.bf16.xpose.msra.mxu0 0
        %1211 = vmatprep.subr.bf16.mxu0 0
        %1212 = vmatpush1.bf16.xpose.msra.mxu0 0
        %1213 = vmatprep.subr.bf16.mxu0 0
        %1214 = vmatpush1.bf16.xpose.msra.mxu0 0
        %1215 = vmatprep.subr.bf16.mxu0 0
        %1216 = vmatpush1.bf16.xpose.msra.mxu0 0
        %1217 = vmatprep.subr.bf16.mxu0 0
        %1218 = vmatpush1.bf16.xpose.msra.mxu0 0
        %1219 = vmatprep.subr.bf16.mxu0 0
        %1220 = vmatpush1.bf16.xpose.msra.mxu0 0
        %1221 = vmatprep.subr.bf16.mxu0 0
        %1222 = vmatpush1.bf16.xpose.msra.mxu0 0
        %1223 = vmatprep.subr.bf16.mxu0 0
        %1224 = vmatpush1.bf16.xpose.msra.mxu0 0
        %1225 = vmatprep.subr.bf16.mxu0 0
        %1226 = vmatpush1.bf16.xpose.msra.mxu0 0
        %1227 = vmatprep.subr.bf16.mxu0 0
        %1228 = vmatpush1.bf16.xpose.msra.mxu0 0
        %1229 = vmatprep.subr.bf16.mxu0 0
        %1230 = vmatpush1.bf16.xpose.msra.mxu0 0
        %1231 = vmatprep.subr.bf16.mxu0 0
        %1232 = vmatpush1.bf16.xpose.msra.mxu0 0
        %1233 = vmatprep.subr.bf16.mxu0 0
        %1234 = vmatpush1.bf16.xpose.msra.mxu0 0
        %1235 = vmatprep.subr.bf16.mxu0 0
        %1236 = vmatpush1.bf16.xpose.msra.mxu0 0
        %1237 = vmatprep.mubr.bf16.mxu0 0
        %1238 = vmatmul.mubr.bf16.gmra.mrb[0].mxu0 %v1200
        %v1239 = vpop.f32.mrb[0].mxu0
        %v1240 = vadd.f32 0.0, %v1239
        %v1241 = vpop.f32.mrb[0].mxu0
        %v1242 = vpop.f32.mrb[0].mxu0
        %v1243 = vadd.f32 0.0, %v1242
        %v1244 = vpop.f32.mrb[0].mxu0
        %1245 = vdwg.mxu0
        %v1246 = vsel %vm1070, %v1240, -inf
        %1247 = vmax.xlane.f32.xlu0 %v1246
        %v1248 = vpop.xlane.xlu0 %1247
        %v1249 = vsel %vm1070, %v1243, -inf
        %1250 = vmax.xlane.f32.xlu0 %v1249
        %v1251 = vpop.xlane.xlu0 %1250
        %v1252 = vsub.f32 %v1240, %v1248
        %v1253 = vsub.f32 %v1243, %v1251
        %v1254 = vmul.f32 %v1252, 1.442695
        %v1255 = vpow.pop %v1254
        %v1256 = vmul.f32 %v1253, 1.442695
        %v1257 = vpow.pop %v1256
        %v1258 = vsel %vm1070, %v1255, 0.0
        %1259 = vadd.xlane.f32.xlu0 %v1258
        %v1260 = vpop.xlane.xlu0 %1259
        %v1261 = vsel %vm1070, %v1257, 0.0
        %1262 = vadd.xlane.f32.xlu0 %v1261
        %v1263 = vpop.xlane.xlu0 %1262
        %v1264 = vrcp.pop %v1260
        %v1265 = vrcp.pop %v1263
        %v1266 = vmul.f32 %v1255, %v1264
        %v1267 = vmul.f32 %v1257, %v1265
        %s1268 = scalar_lea.vmem %s674, 16 [#allocation15]
        %1269 = vst.msk [vmem:[%s1268] sm:$0xff] %vm1070, %v1266
        %1270 = vst.msk [vmem:[%s1268 + $0x8] sm:$0xff] %vm1070, %v1267
        %v1271 = vpack.c.bf16 %v1267, %v1266
        %1273 = vrot.lane.b32.xlu0 %v1021, 120
        %v1274 = vpop.permute.xlu0 %1273
        %v1277 = vsel %vm1070, %v1271, 0
        %1279 = vmatprep.subr.bf16.mxu0 0
        %1280 = vmatpush1.bf16.msra.mxu0 %v1274
        %1281 = vmatprep.subr.bf16.mxu0 0
        %1282 = vmatpush1.bf16.msra.mxu0 0
        %1283 = vmatprep.subr.bf16.mxu0 0
        %1284 = vmatpush1.bf16.msra.mxu0 0
        %1285 = vmatprep.subr.bf16.mxu0 0
        %1286 = vmatpush1.bf16.msra.mxu0 0
        %1287 = vmatprep.subr.bf16.mxu0 0
        %1288 = vmatpush1.bf16.msra.mxu0 0
        %1289 = vmatprep.subr.bf16.mxu0 0
        %1290 = vmatpush1.bf16.msra.mxu0 0
        %1291 = vmatprep.subr.bf16.mxu0 0
        %1292 = vmatpush1.bf16.msra.mxu0 0
        %1293 = vmatprep.subr.bf16.mxu0 0
        %1294 = vmatpush1.bf16.msra.mxu0 0
        %1295 = vmatprep.subr.bf16.mxu0 0
        %1296 = vmatpush1.bf16.msra.mxu0 0
        %1297 = vmatprep.subr.bf16.mxu0 0
        %1298 = vmatpush1.bf16.msra.mxu0 0
        %1299 = vmatprep.subr.bf16.mxu0 0
        %1300 = vmatpush1.bf16.msra.mxu0 0
        %1301 = vmatprep.subr.bf16.mxu0 0
        %1302 = vmatpush1.bf16.msra.mxu0 0
        %1303 = vmatprep.subr.bf16.mxu0 0
        %1304 = vmatpush1.bf16.msra.mxu0 0
        %1305 = vmatprep.subr.bf16.mxu0 0
        %1306 = vmatpush1.bf16.msra.mxu0 0
        %1307 = vmatprep.subr.bf16.mxu0 0
        %1308 = vmatpush1.bf16.msra.mxu0 0
        %1309 = vmatprep.subr.bf16.mxu0 0
        %1310 = vmatpush1.bf16.msra.mxu0 0
        %1311 = vmatprep.mubr.bf16.mxu0 0
        %1312 = vmatmul.mubr.bf16.gmra.mrb[0].mxu0 %v1277
        %v1313 = vpop.f32.mrb[0].mxu0
        %v1314 = vadd.f32 0.0, %v1313
        %v1315 = vpop.f32.mrb[0].mxu0
        %v1316 = vpop.f32.mrb[0].mxu0
        %v1317 = vadd.f32 0.0, %v1316
        %v1318 = vpop.f32.mrb[0].mxu0
        %1319 = vdwg.mxu0
        %v1320 = vpack.c.bf16 %v1317, %v1314
        %1321 = vset.pattern.permute.xlu0 1
        %1322 = vperm.xlu0 %1321, %v1149
        %v1323 = vpop.permute.xlu0 %1322
        %1325 = vset.pattern.permute.xlu0 1
        %1326 = vperm.xlu0 %1325, %v1150
        %v1327 = vpop.permute.xlu0 %1326
        %v1329 = vmul.f32 %v1147, %v1323
        %v1330 = vmul.f32 %v1148, %v1327
        %v1331 = vmul.f32 %v1329, 1.442695
        %v1332 = vpow.pop %v1331
        %v1333 = vmul.f32 %v1330, 1.442695
        %v1334 = vpow.pop %v1333
        %1335 = vset.pattern.permute.xlu0 1
        %1336 = vperm.xlu0 %1335, %v1145
        %v1337 = vpop.permute.xlu0 %1336
        %1339 = vset.pattern.permute.xlu0 1
        %1340 = vperm.xlu0 %1339, %v1146
        %v1341 = vpop.permute.xlu0 %1340
        %v1343 = vmul.f32 %v1337, %v1332
        %v1344 = vmul.f32 %v1341, %v1334
        %s1345 = scalar_lea.vmem %s681, 16 [#allocation17]
        %1346 = vst.msk [vmem:[%s1345] sm:$0xff] %vm1070, %v1343
        %1347 = vst.msk [vmem:[%s1345 + $0x8] sm:$0xff] %vm1070, %v1344
        %1348 = vset.pattern.permute.xlu0 1
        %1349 = vperm.xlu0 %1348, %v1006
        %v1350 = vpop.permute.xlu0 %1349
        %1352 = vset.pattern.permute.xlu0 1
        %1353 = vperm.xlu0 %1352, %v1007
        %v1354 = vpop.permute.xlu0 %1353
        %s1356 = scalar_lea.vmem %s688, 16 [#allocation18]
        %1357 = vst.msk [vmem:[%s1356] sm:$0xff] %vm1070, %v1350
        %1358 = vst.msk [vmem:[%s1356 + $0x8] sm:$0xff] %vm1070, %v1354
        %1359 = vrot.lane.b32.xlu0 %v1019, 112
        %v1360 = vpop.permute.xlu0 %1359
        %1361 = vrot.lane.b32.xlu0 %v1020, 112
        %v1362 = vpop.permute.xlu0 %1361
        %v1364 = vsel %vm1022, %v1360, 0
        %v1367 = vsel %vm1022, %v1362, 0
        %1369 = vmatprep.subr.bf16.mxu0 0
        %1370 = vmatpush1.bf16.xpose.msra.mxu0 %v1367
        %1371 = vmatprep.subr.bf16.mxu0 0
        %1372 = vmatpush1.bf16.xpose.msra.mxu0 0
        %1373 = vmatprep.subr.bf16.mxu0 0
        %1374 = vmatpush1.bf16.xpose.msra.mxu0 0
        %1375 = vmatprep.subr.bf16.mxu0 0
        %1376 = vmatpush1.bf16.xpose.msra.mxu0 0
        %1377 = vmatprep.subr.bf16.mxu0 0
        %1378 = vmatpush1.bf16.xpose.msra.mxu0 0
        %1379 = vmatprep.subr.bf16.mxu0 0
        %1380 = vmatpush1.bf16.xpose.msra.mxu0 0
        %1381 = vmatprep.subr.bf16.mxu0 0
        %1382 = vmatpush1.bf16.xpose.msra.mxu0 0
        %1383 = vmatprep.subr.bf16.mxu0 0
        %1384 = vmatpush1.bf16.xpose.msra.mxu0 0
        %1385 = vmatprep.subr.bf16.mxu0 0
        %1386 = vmatpush1.bf16.xpose.msra.mxu0 0
        %1387 = vmatprep.subr.bf16.mxu0 0
        %1388 = vmatpush1.bf16.xpose.msra.mxu0 0
        %1389 = vmatprep.subr.bf16.mxu0 0
        %1390 = vmatpush1.bf16.xpose.msra.mxu0 0
        %1391 = vmatprep.subr.bf16.mxu0 0
        %1392 = vmatpush1.bf16.xpose.msra.mxu0 0
        %1393 = vmatprep.subr.bf16.mxu0 0
        %1394 = vmatpush1.bf16.xpose.msra.mxu0 0
        %1395 = vmatprep.subr.bf16.mxu0 0
        %1396 = vmatpush1.bf16.xpose.msra.mxu0 0
        %1397 = vmatprep.subr.bf16.mxu0 0
        %1398 = vmatpush1.bf16.xpose.msra.mxu0 0
        %1399 = vmatprep.subr.bf16.mxu0 0
        %1400 = vmatpush1.bf16.xpose.msra.mxu0 0
        %1401 = vmatprep.mubr.bf16.mxu0 0
        %1402 = vmatmul.mubr.bf16.gmra.mrb[0].mxu0 %v1364
        %v1403 = vpop.f32.mrb[0].mxu0
        %v1404 = vadd.f32 0.0, %v1403
        %v1405 = vpop.f32.mrb[0].mxu0
        %v1406 = vpop.f32.mrb[0].mxu0
        %v1407 = vadd.f32 0.0, %v1406
        %v1408 = vpop.f32.mrb[0].mxu0
        %1409 = vdwg.mxu0
        %v1410 = vsel %vm1070, %v1404, -inf
        %1411 = vmax.xlane.f32.xlu0 %v1410
        %v1412 = vpop.xlane.xlu0 %1411
        %v1413 = vsel %vm1070, %v1407, -inf
        %1414 = vmax.xlane.f32.xlu0 %v1413
        %v1415 = vpop.xlane.xlu0 %1414
        %v1416 = vsub.f32 %v1404, %v1412
        %v1417 = vsub.f32 %v1407, %v1415
        %v1418 = vmul.f32 %v1416, 1.442695
        %v1419 = vpow.pop %v1418
        %v1420 = vmul.f32 %v1417, 1.442695
        %v1421 = vpow.pop %v1420
        %v1422 = vsel %vm1070, %v1419, 0.0
        %1423 = vadd.xlane.f32.xlu0 %v1422
        %v1424 = vpop.xlane.xlu0 %1423
        %v1425 = vsel %vm1070, %v1421, 0.0
        %1426 = vadd.xlane.f32.xlu0 %v1425
        %v1427 = vpop.xlane.xlu0 %1426
        %v1428 = vrcp.pop %v1424
        %v1429 = vrcp.pop %v1427
        %v1430 = vmul.f32 %v1419, %v1428
        %v1431 = vmul.f32 %v1421, %v1429
        %s1432 = scalar_lea.vmem %s674, 32 [#allocation15]
        %1433 = vst.msk [vmem:[%s1432] sm:$0xff] %vm1070, %v1430
        %1434 = vst.msk [vmem:[%s1432 + $0x8] sm:$0xff] %vm1070, %v1431
        %v1435 = vpack.c.bf16 %v1431, %v1430
        %1436 = vrot.lane.b32.xlu0 %v1021, 112
        %v1437 = vpop.permute.xlu0 %1436
        %v1440 = vsel %vm1070, %v1435, 0
        %1442 = vmatprep.subr.bf16.mxu0 0
        %1443 = vmatpush1.bf16.msra.mxu0 %v1437
        %1444 = vmatprep.subr.bf16.mxu0 0
        %1445 = vmatpush1.bf16.msra.mxu0 0
        %1446 = vmatprep.subr.bf16.mxu0 0
        %1447 = vmatpush1.bf16.msra.mxu0 0
        %1448 = vmatprep.subr.bf16.mxu0 0
        %1449 = vmatpush1.bf16.msra.mxu0 0
        %1450 = vmatprep.subr.bf16.mxu0 0
        %1451 = vmatpush1.bf16.msra.mxu0 0
        %1452 = vmatprep.subr.bf16.mxu0 0
        %1453 = vmatpush1.bf16.msra.mxu0 0
        %1454 = vmatprep.subr.bf16.mxu0 0
        %1455 = vmatpush1.bf16.msra.mxu0 0
        %1456 = vmatprep.subr.bf16.mxu0 0
        %1457 = vmatpush1.bf16.msra.mxu0 0
        %1458 = vmatprep.subr.bf16.mxu0 0
        %1459 = vmatpush1.bf16.msra.mxu0 0
        %1460 = vmatprep.subr.bf16.mxu0 0
        %1461 = vmatpush1.bf16.msra.mxu0 0
        %1462 = vmatprep.subr.bf16.mxu0 0
        %1463 = vmatpush1.bf16.msra.mxu0 0
        %1464 = vmatprep.subr.bf16.mxu0 0
        %1465 = vmatpush1.bf16.msra.mxu0 0
        %1466 = vmatprep.subr.bf16.mxu0 0
        %1467 = vmatpush1.bf16.msra.mxu0 0
        %1468 = vmatprep.subr.bf16.mxu0 0
        %1469 = vmatpush1.bf16.msra.mxu0 0
        %1470 = vmatprep.subr.bf16.mxu0 0
        %1471 = vmatpush1.bf16.msra.mxu0 0
        %1472 = vmatprep.subr.bf16.mxu0 0
        %1473 = vmatpush1.bf16.msra.mxu0 0
        %1474 = vmatprep.mubr.bf16.mxu0 0
        %1475 = vmatmul.mubr.bf16.gmra.mrb[0].mxu0 %v1440
        %v1476 = vpop.f32.mrb[0].mxu0
        %v1477 = vadd.f32 0.0, %v1476
        %v1478 = vpop.f32.mrb[0].mxu0
        %v1479 = vpop.f32.mrb[0].mxu0
        %v1480 = vadd.f32 0.0, %v1479
        %v1481 = vpop.f32.mrb[0].mxu0
        %1482 = vdwg.mxu0
        %v1483 = vpack.c.bf16 %v1480, %v1477
        %1484 = vset.pattern.permute.xlu0 2
        %1485 = vperm.xlu0 %1484, %v1149
        %v1486 = vpop.permute.xlu0 %1485
        %1488 = vset.pattern.permute.xlu0 2
        %1489 = vperm.xlu0 %1488, %v1150
        %v1490 = vpop.permute.xlu0 %1489
        %v1492 = vmul.f32 %v1147, %v1486
        %v1493 = vmul.f32 %v1148, %v1490
        %v1494 = vmul.f32 %v1492, 1.442695
        %v1495 = vpow.pop %v1494
        %v1496 = vmul.f32 %v1493, 1.442695
        %v1497 = vpow.pop %v1496
        %1498 = vset.pattern.permute.xlu0 2
        %1499 = vperm.xlu0 %1498, %v1145
        %v1500 = vpop.permute.xlu0 %1499
        %1502 = vset.pattern.permute.xlu0 2
        %1503 = vperm.xlu0 %1502, %v1146
        %v1504 = vpop.permute.xlu0 %1503
        %v1506 = vmul.f32 %v1500, %v1495
        %v1507 = vmul.f32 %v1504, %v1497
        %s1508 = scalar_lea.vmem %s681, 32 [#allocation17]
        %1509 = vst.msk [vmem:[%s1508] sm:$0xff] %vm1070, %v1506
        %1510 = vst.msk [vmem:[%s1508 + $0x8] sm:$0xff] %vm1070, %v1507
        %1511 = vset.pattern.permute.xlu0 2
        %1512 = vperm.xlu0 %1511, %v1006
        %v1513 = vpop.permute.xlu0 %1512
        %1515 = vset.pattern.permute.xlu0 2
        %1516 = vperm.xlu0 %1515, %v1007
        %v1517 = vpop.permute.xlu0 %1516
        %s1519 = scalar_lea.vmem %s688, 32 [#allocation18]
        %1520 = vst.msk [vmem:[%s1519] sm:$0xff] %vm1070, %v1513
        %1521 = vst.msk [vmem:[%s1519 + $0x8] sm:$0xff] %vm1070, %v1517
        %1522 = vrot.lane.b32.xlu0 %v1019, 104
        %v1523 = vpop.permute.xlu0 %1522
        %1524 = vrot.lane.b32.xlu0 %v1020, 104
        %v1525 = vpop.permute.xlu0 %1524
        %v1527 = vsel %vm1022, %v1523, 0
        %v1530 = vsel %vm1022, %v1525, 0
        %1532 = vmatprep.subr.bf16.mxu0 0
        %1533 = vmatpush1.bf16.xpose.msra.mxu0 %v1530
        %1534 = vmatprep.subr.bf16.mxu0 0
        %1535 = vmatpush1.bf16.xpose.msra.mxu0 0
        %1536 = vmatprep.subr.bf16.mxu0 0
        %1537 = vmatpush1.bf16.xpose.msra.mxu0 0
        %1538 = vmatprep.subr.bf16.mxu0 0
        %1539 = vmatpush1.bf16.xpose.msra.mxu0 0
        %1540 = vmatprep.subr.bf16.mxu0 0
        %1541 = vmatpush1.bf16.xpose.msra.mxu0 0
        %1542 = vmatprep.subr.bf16.mxu0 0
        %1543 = vmatpush1.bf16.xpose.msra.mxu0 0
        %1544 = vmatprep.subr.bf16.mxu0 0
        %1545 = vmatpush1.bf16.xpose.msra.mxu0 0
        %1546 = vmatprep.subr.bf16.mxu0 0
        %1547 = vmatpush1.bf16.xpose.msra.mxu0 0
        %1548 = vmatprep.subr.bf16.mxu0 0
        %1549 = vmatpush1.bf16.xpose.msra.mxu0 0
        %1550 = vmatprep.subr.bf16.mxu0 0
        %1551 = vmatpush1.bf16.xpose.msra.mxu0 0
        %1552 = vmatprep.subr.bf16.mxu0 0
        %1553 = vmatpush1.bf16.xpose.msra.mxu0 0
        %1554 = vmatprep.subr.bf16.mxu0 0
        %1555 = vmatpush1.bf16.xpose.msra.mxu0 0
        %1556 = vmatprep.subr.bf16.mxu0 0
        %1557 = vmatpush1.bf16.xpose.msra.mxu0 0
        %1558 = vmatprep.subr.bf16.mxu0 0
        %1559 = vmatpush1.bf16.xpose.msra.mxu0 0
        %1560 = vmatprep.subr.bf16.mxu0 0
        %1561 = vmatpush1.bf16.xpose.msra.mxu0 0
        %1562 = vmatprep.subr.bf16.mxu0 0
        %1563 = vmatpush1.bf16.xpose.msra.mxu0 0
        %1564 = vmatprep.mubr.bf16.mxu0 0
        %1565 = vmatmul.mubr.bf16.gmra.mrb[0].mxu0 %v1527
        %v1566 = vpop.f32.mrb[0].mxu0
        %v1567 = vadd.f32 0.0, %v1566
        %v1568 = vpop.f32.mrb[0].mxu0
        %v1569 = vpop.f32.mrb[0].mxu0
        %v1570 = vadd.f32 0.0, %v1569
        %v1571 = vpop.f32.mrb[0].mxu0
        %1572 = vdwg.mxu0
        %v1573 = vsel %vm1070, %v1567, -inf
        %1574 = vmax.xlane.f32.xlu0 %v1573
        %v1575 = vpop.xlane.xlu0 %1574
        %v1576 = vsel %vm1070, %v1570, -inf
        %1577 = vmax.xlane.f32.xlu0 %v1576
        %v1578 = vpop.xlane.xlu0 %1577
        %v1579 = vsub.f32 %v1567, %v1575
        %v1580 = vsub.f32 %v1570, %v1578
        %v1581 = vmul.f32 %v1579, 1.442695
        %v1582 = vpow.pop %v1581
        %v1583 = vmul.f32 %v1580, 1.442695
        %v1584 = vpow.pop %v1583
        %v1585 = vsel %vm1070, %v1582, 0.0
        %1586 = vadd.xlane.f32.xlu0 %v1585
        %v1587 = vpop.xlane.xlu0 %1586
        %v1588 = vsel %vm1070, %v1584, 0.0
        %1589 = vadd.xlane.f32.xlu0 %v1588
        %v1590 = vpop.xlane.xlu0 %1589
        %v1591 = vrcp.pop %v1587
        %v1592 = vrcp.pop %v1590
        %v1593 = vmul.f32 %v1582, %v1591
        %v1594 = vmul.f32 %v1584, %v1592
        %s1595 = scalar_lea.vmem %s674, 48 [#allocation15]
        %1596 = vst.msk [vmem:[%s1595] sm:$0xff] %vm1070, %v1593
        %1597 = vst.msk [vmem:[%s1595 + $0x8] sm:$0xff] %vm1070, %v1594
        %v1598 = vpack.c.bf16 %v1594, %v1593
        %1599 = vrot.lane.b32.xlu0 %v1021, 104
        %v1600 = vpop.permute.xlu0 %1599
        %v1603 = vsel %vm1070, %v1598, 0
        %1605 = vmatprep.subr.bf16.mxu0 0
        %1606 = vmatpush1.bf16.msra.mxu0 %v1600
        %1607 = vmatprep.subr.bf16.mxu0 0
        %1608 = vmatpush1.bf16.msra.mxu0 0
        %1609 = vmatprep.subr.bf16.mxu0 0
        %1610 = vmatpush1.bf16.msra.mxu0 0
        %1611 = vmatprep.subr.bf16.mxu0 0
        %1612 = vmatpush1.bf16.msra.mxu0 0
        %1613 = vmatprep.subr.bf16.mxu0 0
        %1614 = vmatpush1.bf16.msra.mxu0 0
        %1615 = vmatprep.subr.bf16.mxu0 0
        %1616 = vmatpush1.bf16.msra.mxu0 0
        %1617 = vmatprep.subr.bf16.mxu0 0
        %1618 = vmatpush1.bf16.msra.mxu0 0
        %1619 = vmatprep.subr.bf16.mxu0 0
        %1620 = vmatpush1.bf16.msra.mxu0 0
        %1621 = vmatprep.subr.bf16.mxu0 0
        %1622 = vmatpush1.bf16.msra.mxu0 0
        %1623 = vmatprep.subr.bf16.mxu0 0
        %1624 = vmatpush1.bf16.msra.mxu0 0
        %1625 = vmatprep.subr.bf16.mxu0 0
        %1626 = vmatpush1.bf16.msra.mxu0 0
        %1627 = vmatprep.subr.bf16.mxu0 0
        %1628 = vmatpush1.bf16.msra.mxu0 0
        %1629 = vmatprep.subr.bf16.mxu0 0
        %1630 = vmatpush1.bf16.msra.mxu0 0
        %1631 = vmatprep.subr.bf16.mxu0 0
        %1632 = vmatpush1.bf16.msra.mxu0 0
        %1633 = vmatprep.subr.bf16.mxu0 0
        %1634 = vmatpush1.bf16.msra.mxu0 0
        %1635 = vmatprep.subr.bf16.mxu0 0
        %1636 = vmatpush1.bf16.msra.mxu0 0
        %1637 = vmatprep.mubr.bf16.mxu0 0
        %1638 = vmatmul.mubr.bf16.gmra.mrb[0].mxu0 %v1603
        %v1639 = vpop.f32.mrb[0].mxu0
        %v1640 = vadd.f32 0.0, %v1639
        %v1641 = vpop.f32.mrb[0].mxu0
        %v1642 = vpop.f32.mrb[0].mxu0
        %v1643 = vadd.f32 0.0, %v1642
        %v1644 = vpop.f32.mrb[0].mxu0
        %1645 = vdwg.mxu0
        %v1646 = vpack.c.bf16 %v1643, %v1640
        %1647 = vset.pattern.permute.xlu0 3
        %1648 = vperm.xlu0 %1647, %v1149
        %v1649 = vpop.permute.xlu0 %1648
        %1651 = vset.pattern.permute.xlu0 3
        %1652 = vperm.xlu0 %1651, %v1150
        %v1653 = vpop.permute.xlu0 %1652
        %v1655 = vmul.f32 %v1147, %v1649
        %v1656 = vmul.f32 %v1148, %v1653
        %v1657 = vmul.f32 %v1655, 1.442695
        %v1658 = vpow.pop %v1657
        %v1659 = vmul.f32 %v1656, 1.442695
        %v1660 = vpow.pop %v1659
        %1661 = vset.pattern.permute.xlu0 3
        %1662 = vperm.xlu0 %1661, %v1145
        %v1663 = vpop.permute.xlu0 %1662
        %1665 = vset.pattern.permute.xlu0 3
        %1666 = vperm.xlu0 %1665, %v1146
        %v1667 = vpop.permute.xlu0 %1666
        %v1669 = vmul.f32 %v1663, %v1658
        %v1670 = vmul.f32 %v1667, %v1660
        %s1671 = scalar_lea.vmem %s681, 48 [#allocation17]
        %1672 = vst.msk [vmem:[%s1671] sm:$0xff] %vm1070, %v1669
        %1673 = vst.msk [vmem:[%s1671 + $0x8] sm:$0xff] %vm1070, %v1670
        %1674 = vset.pattern.permute.xlu0 3
        %1675 = vperm.xlu0 %1674, %v1006
        %v1676 = vpop.permute.xlu0 %1675
        %1678 = vset.pattern.permute.xlu0 3
        %1679 = vperm.xlu0 %1678, %v1007
        %v1680 = vpop.permute.xlu0 %1679
        %s1682 = scalar_lea.vmem %s688, 48 [#allocation18]
        %1683 = vst.msk [vmem:[%s1682] sm:$0xff] %vm1070, %v1676
        %1684 = vst.msk [vmem:[%s1682 + $0x8] sm:$0xff] %vm1070, %v1680
        %1686 = vrot.lane.b32.xlu0 %v1320, 8
        %v1687 = vpop.permute.xlu0 %1686
        %1689 = vrot.lane.b32.xlu0 %v1483, 16
        %v1690 = vpop.permute.xlu0 %1689
        %1692 = vrot.lane.b32.xlu0 %v1646, 24
        %v1693 = vpop.permute.xlu0 %1692
        %v1696 = vsel %vm1022, %v1140, %v1687
        %v1698 = vsel %vm1070, %v1696, %v1690
        %vm1699 = vcmask 195584
        %v1701 = vsel %vm1699, %v1698, %v1693
        %v1702 = vld [vmem:[%s11] sm:$0xf]
        %v1703 = vld [vmem:[%s11 + $0x4] sm:$0xf]
        %v1704 = vld [vmem:[%s11 + $0x8] sm:$0xf]
        %v1705 = vld [vmem:[%s11 + $0xc] sm:$0xf]
        %v1706 = vld [vmem:[%s12] sm:$0x1]
        %v1708 = vlaneseq
        %v1709 = vshrl.u32 %v1708, 7
        %v1710 = vsub.s32 0, %v1709
        %v1711 = vrot.slane %v1706, %v1710
        %v1717 = vunpack.c.l.b16 %v1702
        %v1718 = vunpack.c.l.b16 %v1703
        %v1719 = vunpack.c.l.b16 %v1704
        %v1720 = vunpack.c.l.b16 %v1705
        %v1721 = vpack.c.b16 %v1718, %v1717
        %v1722 = vpack.c.b16 %v1720, %v1719
        %v1725 = vsel %vm729, %v1701, 0
        %1727 = vmatprep.subr.bf16.mxu0 0
        %1728 = vmatpush1.bf16.msra.mxu0 %v1721
        %1729 = vmatprep.subr.bf16.mxu0 0
        %1730 = vmatpush1.bf16.msra.mxu0 %v1722
        %1731 = vmatprep.subr.bf16.mxu0 0
        %1732 = vmatpush1.bf16.msra.mxu0 0
        %1733 = vmatprep.subr.bf16.mxu0 0
        %1734 = vmatpush1.bf16.msra.mxu0 0
        %1735 = vmatprep.subr.bf16.mxu0 0
        %1736 = vmatpush1.bf16.msra.mxu0 0
        %1737 = vmatprep.subr.bf16.mxu0 0
        %1738 = vmatpush1.bf16.msra.mxu0 0
        %1739 = vmatprep.subr.bf16.mxu0 0
        %1740 = vmatpush1.bf16.msra.mxu0 0
        %1741 = vmatprep.subr.bf16.mxu0 0
        %1742 = vmatpush1.bf16.msra.mxu0 0
        %1743 = vmatprep.subr.bf16.mxu0 0
        %1744 = vmatpush1.bf16.msra.mxu0 0
        %1745 = vmatprep.subr.bf16.mxu0 0
        %1746 = vmatpush1.bf16.msra.mxu0 0
        %1747 = vmatprep.subr.bf16.mxu0 0
        %1748 = vmatpush1.bf16.msra.mxu0 0
        %1749 = vmatprep.subr.bf16.mxu0 0
        %1750 = vmatpush1.bf16.msra.mxu0 0
        %1751 = vmatprep.subr.bf16.mxu0 0
        %1752 = vmatpush1.bf16.msra.mxu0 0
        %1753 = vmatprep.subr.bf16.mxu0 0
        %1754 = vmatpush1.bf16.msra.mxu0 0
        %1755 = vmatprep.subr.bf16.mxu0 0
        %1756 = vmatpush1.bf16.msra.mxu0 0
        %1757 = vmatprep.subr.bf16.mxu0 0
        %1758 = vmatpush1.bf16.msra.mxu0 0
        %1759 = vmatprep.mubr.bf16.mxu0 0
        %1760 = vmatmul.mubr.bf16.gmra.mrb[0].mxu0 %v1725
        %v1761 = vpop.f32.mrb[0].mxu0
        %v1762 = vadd.f32 %v1711, %v1761
        %v1763 = vpop.f32.mrb[0].mxu0
        %v1764 = vpop.f32.mrb[0].mxu0
        %v1765 = vadd.f32 %v1711, %v1764
        %v1766 = vpop.f32.mrb[0].mxu0
        %1767 = vdwg.mxu0
        %1768 = vst.msk [vmem:[%s667] sm:$0xff] %vm729, %v1762
        %1769 = vst.msk [vmem:[%s667 + $0x8] sm:$0xff] %vm729, %v1765
        %s1770 = sand.u32 %s341, 1
        %s1771 = scalar_lea.sflag [#allocation4], %s1770
        %s1772 = sand.u32 %s341, 1
        %s1773 = smul.addr %s1772, 16
        %s1774 = scalar_lea.vmem [#allocation14], %s1773
        %s1775 = sand.u32 %s45, 1
        %s1776 = scalar_lea.sflag [#allocation16], %s1775
        %s1777 = sand.u32 %s367, 1
        %s1778 = smul.addr %s1777, 64
        %s1779 = scalar_lea.vmem [#allocation15], %s1778
        %s1780 = sand.u32 %s45, 1
        %s1781 = scalar_lea.sflag [#allocation16], %s1780
        %s1782 = sand.u32 %s393, 1
        %s1783 = smul.addr %s1782, 64
        %s1784 = scalar_lea.vmem [#allocation17], %s1783
        %s1785 = sand.u32 %s419, 1
        %s1786 = scalar_lea.sflag [#allocation19], %s1785
        %s1787 = sand.u32 %s419, 1
        %s1788 = smul.addr %s1787, 64
        %s1789 = scalar_lea.vmem [#allocation18], %s1788
        // Predicated region
        $region101: #{tpu_custom_call.1} parent=71 // pred_check
          %p1790 = pneg %p351
        $region102: #{tpu_custom_call.1} parent=71 // pred_check_branch
          %1792 = sbr.rel (%p1790) target = $region104
        $region103: #{tpu_custom_call.1} parent=71 // pred_region
          %s1794 = ssub.s32 256, 256
          %1795 = vsyncadd %s1771, %s1794
          %s1796 = smul.addr %s45, 2
          %s1797 = smul.addr %s1796, 128
          %s1798 = scalar_lea.hbm %s13, %s1797
          %s1799 = sshll.u32 %s1774, 4
          %s1800 = int_to_ptr.vmem [resolvable:$true] %s1799
          %1805 = dma.vmem_to_hbm [thread:$0]  %s1800, 256, %s1798, %s1771, 128, 128, 8
        $region104: #{tpu_custom_call.1} parent=71 // pred_fallthru
          _
        // Predicated region
        $region105: #{tpu_custom_call.1} parent=71 // pred_check
          %p1806 = pneg %p377
        $region106: #{tpu_custom_call.1} parent=71 // pred_check_branch
          %1808 = sbr.rel (%p1806) target = $region108
        $region107: #{tpu_custom_call.1} parent=71 // pred_region
          %s1810 = ssub.s32 1024, 1024
          %1811 = vsyncadd %s1776, %s1810
          %s1812 = smul.addr %s45, 8
          %s1813 = smul.addr %s1812, 128
          %s1814 = scalar_lea.hbm %s14, %s1813
          %s1815 = sshll.u32 %s1779, 4
          %s1816 = int_to_ptr.vmem [resolvable:$true] %s1815
          %1821 = dma.vmem_to_hbm [thread:$0]  %s1816, 1024, %s1814, %s1776, 128, 128, 8
        $region108: #{tpu_custom_call.1} parent=71 // pred_fallthru
          _
        // Predicated region
        $region109: #{tpu_custom_call.1} parent=71 // pred_check
          %p1822 = pneg %p403
        $region110: #{tpu_custom_call.1} parent=71 // pred_check_branch
          %1824 = sbr.rel (%p1822) target = $region112
        $region111: #{tpu_custom_call.1} parent=71 // pred_region
          %s1826 = ssub.s32 1024, 1024
          %1827 = vsyncadd %s1781, %s1826
          %s1828 = smul.addr %s45, 8
          %s1829 = smul.addr %s1828, 128
          %s1830 = scalar_lea.hbm %s15, %s1829
          %s1831 = sshll.u32 %s1784, 4
          %s1832 = int_to_ptr.vmem [resolvable:$true] %s1831
          %1837 = dma.vmem_to_hbm [thread:$0]  %s1832, 1024, %s1830, %s1781, 128, 128, 8
        $region112: #{tpu_custom_call.1} parent=71 // pred_fallthru
          _
        // Predicated region
        $region113: #{tpu_custom_call.1} parent=71 // pred_check
          %p1838 = pneg %p429
        $region114: #{tpu_custom_call.1} parent=71 // pred_check_branch
          %1840 = sbr.rel (%p1838) target = $region116
        $region115: #{tpu_custom_call.1} parent=71 // pred_region
          %s1842 = ssub.s32 1024, 1024
          %1843 = vsyncadd %s1786, %s1842
          %s1844 = smul.addr %s45, 8
          %s1845 = smul.addr %s1844, 128
          %s1846 = scalar_lea.hbm %s16, %s1845
          %s1847 = sshll.u32 %s1789, 4
          %s1848 = int_to_ptr.vmem [resolvable:$true] %s1847
          %1853 = dma.vmem_to_hbm [thread:$0]  %s1848, 1024, %s1846, %s1786, 128, 128, 8
        $region116: #{tpu_custom_call.1} parent=71 // pred_fallthru
          _
      $region72: #{tpu_custom_call.1} parent=5 // pred_fallthru
        _
      %p1854 = scmp.le.s32.totalorder 2, %s40
      // Predicated region
      $region117: #{tpu_custom_call.1} parent=5 // pred_check
        %p1855 = pneg %p1854
      $region118: #{tpu_custom_call.1} parent=5 // pred_check_branch
        %1857 = sbr.rel (%p1855) target = $region120
      $region119: #{tpu_custom_call.1} parent=5 // pred_region
        %s1858 = ssub.s32 %s40, 2
        // Predicated region
        $region121: #{tpu_custom_call.1} parent=119 // pred_check
          %p1859 = pneg %p357
        $region122: #{tpu_custom_call.1} parent=119 // pred_check_branch
          %1861 = sbr.rel (%p1859) target = $region124
        $region123: #{tpu_custom_call.1} parent=119 // pred_region
          %s1862 = sand.u32 %s342, 1
          %s1863 = scalar_lea.sflag [#allocation4], %s1862
          %s1864 = sand.u32 %s342, 1
          %s1865 = smul.addr %s1864, 16
          %s1866 = scalar_lea.vmem [#allocation14], %s1865
          %1867 = dma.done %s1863, 256
        $region124: #{tpu_custom_call.1} parent=119 // pred_fallthru
          _
        // Predicated region
        $region125: #{tpu_custom_call.1} parent=119 // pred_check
          %p1868 = pneg %p383
        $region126: #{tpu_custom_call.1} parent=119 // pred_check_branch
          %1870 = sbr.rel (%p1868) target = $region128
        $region127: #{tpu_custom_call.1} parent=119 // pred_region
          %s1871 = sand.u32 %s46, 1
          %s1872 = scalar_lea.sflag [#allocation16], %s1871
          %s1873 = sand.u32 %s368, 1
          %s1874 = smul.addr %s1873, 64
          %s1875 = scalar_lea.vmem [#allocation15], %s1874
          %1876 = dma.done %s1872, 1024
        $region128: #{tpu_custom_call.1} parent=119 // pred_fallthru
          _
        // Predicated region
        $region129: #{tpu_custom_call.1} parent=119 // pred_check
          %p1877 = pneg %p409
        $region130: #{tpu_custom_call.1} parent=119 // pred_check_branch
          %1879 = sbr.rel (%p1877) target = $region132
        $region131: #{tpu_custom_call.1} parent=119 // pred_region
          %s1880 = sand.u32 %s46, 1
          %s1881 = scalar_lea.sflag [#allocation16], %s1880
          %s1882 = sand.u32 %s394, 1
          %s1883 = smul.addr %s1882, 64
          %s1884 = scalar_lea.vmem [#allocation17], %s1883
          %1885 = dma.done %s1881, 1024
        $region132: #{tpu_custom_call.1} parent=119 // pred_fallthru
          _
        // Predicated region
        $region133: #{tpu_custom_call.1} parent=119 // pred_check
          %p1886 = pneg %p435
        $region134: #{tpu_custom_call.1} parent=119 // pred_check_branch
          %1888 = sbr.rel (%p1886) target = $region136
        $region135: #{tpu_custom_call.1} parent=119 // pred_region
          %s1889 = sand.u32 %s420, 1
          %s1890 = scalar_lea.sflag [#allocation19], %s1889
          %s1891 = sand.u32 %s420, 1
          %s1892 = smul.addr %s1891, 64
          %s1893 = scalar_lea.vmem [#allocation18], %s1892
          %1894 = dma.done %s1890, 1024
        $region136: #{tpu_custom_call.1} parent=119 // pred_fallthru
          _
      $region120: #{tpu_custom_call.1} parent=5 // pred_fallthru
        _
    $region6: #{tpu_custom_call.1} parent=1 // loop_footer
      %s44 = sadd.s32 1, %s40
    $region7: #{tpu_custom_call.1} parent=1 // loop_footer_branch
      %39 = sbr.rel target = $region3
    $region8: #{tpu_custom_call.1} parent=1 // loop_exit
      _
    %1895 = vsyncpa [#allocation3], 1
    %s1896 = scalar_lea.sflag [#allocation3], 1
    %1897 = vsyncpa %s1896, 1
    %1898 = vsyncpa [#allocation6], 1
    %s1899 = scalar_lea.sflag [#allocation6], 1
    %1900 = vsyncpa %s1899, 1
    %1901 = vsyncpa [#allocation9], 1
    %1902 = vsyncpa [#allocation12], 1
    %1903 = vsyncpa [#allocation4], 1
    %s1904 = scalar_lea.sflag [#allocation4], 1
    %1905 = vsyncpa %s1904, 1
    %1906 = vsyncpa [#allocation16], 1
    %s1907 = scalar_lea.sflag [#allocation16], 1
    %1908 = vsyncpa %s1907, 1
    %1909 = vsyncpa [#allocation19], 1
    %s1910 = scalar_lea.sflag [#allocation19], 1
    %1911 = vsyncpa %s1910, 1

</llo_original>
